<compile_context>
chip_gen: v6e
topology: v6e:2x2x1
jax: 0.10.0
libtpu: 0.0.40
codegen_flags: <defaults>
</compile_context>

<pallas_src>
import jax
import jax.numpy as jnp
import numpy as np
from jax.experimental import pallas as pl
from jax.experimental.pallas import tpu as pltpu

_HI = jax.lax.Precision.HIGHEST


def _cross_view_att_kernel(qx_ref, rx_ref,
                           wq_ref, bq_ref,
                           wkv_ref, bkv_ref,
                           wo_ref, bo_ref,
                           out_ref):
    tb = qx_ref.shape[0]          # batches handled by this grid step (static)
    p = wq_ref.shape[0]           # proj_dim (static)
    f32 = jnp.float32

    # Grid-invariant weights are tiny (~20 vregs total); keep them resident.
    wq = wq_ref[...]
    bq = bq_ref[...].astype(f32)
    wkv = wkv_ref[...]
    bkv = bkv_ref[...].astype(f32)
    wo = wo_ref[...]
    bo = bo_ref[...].astype(f32)

    def body(b, carry):
        qx_b = qx_ref[b]                                   # (Cq, N)
        rx_b = rx_ref[b]                                   # (Ck, N)

        # Fused 1x1-conv projections (MXU, f32 accumulation).
        q = jnp.dot(wq, qx_b, preferred_element_type=f32, precision=_HI) + bq
        kv = jnp.dot(wkv, rx_b, preferred_element_type=f32, precision=_HI) + bkv
        k = kv[:p, :]                                      # (P, N)
        v = kv[p:, :]                                      # (P, N)

        # W = Q @ K^T without materializing a transpose.
        w = jax.lax.dot_general(q, k, (((1,), (1,)), ((), ())),
                                preferred_element_type=f32, precision=_HI)
        # Numerically stable softmax, exact divide (tiny (P, P) tile).
        w = w - jnp.max(w, axis=-1, keepdims=True)
        e = jnp.exp(w)
        a = e / jnp.sum(e, axis=-1, keepdims=True)

        # Z = A^T @ V without materializing a transpose.
        z = jax.lax.dot_general(a, v, (((0,), (0,)), ((), ())),
                                preferred_element_type=f32, precision=_HI)

        # Residual + output conv; re-read qx_ref[b] instead of keeping it live.
        out = (qx_ref[b].astype(f32)
               + jnp.dot(wo, z.astype(wo.dtype),
                         preferred_element_type=f32, precision=_HI)
               + bo)
        out_ref[b] = out.astype(out_ref.dtype)
        return carry

    jax.lax.fori_loop(0, tb, body, None)


def _pick_tb(batch, max_tb=16):
    """Batches per grid step: largest divisor of `batch` <= max_tb, while
    keeping the grid length >= 2 whenever batch >= 2 (v7x dual-core sharding)."""
    cap = max(1, min(max_tb, batch // 2 if batch >= 2 else batch))
    for d in range(cap, 0, -1):
        if batch % d == 0:
            return d
    return 1


def cross_view_trans_att(query_x, ref_x, params, tb=None):
    """query_x: (B, Cq, N), ref_x: (B, Ck, N).  Returns (B, Cq, N)."""
    B, Cq, N = query_x.shape
    Br, Ck, Nr = ref_x.shape
    assert B == Br and N == Nr
    wq, bq, wk, bk, wv, bv, wo, bo = params
    P = wq.shape[0]
    dtype = query_x.dtype

    if tb is None:
        tb = _pick_tb(B)
    assert B % tb == 0
    grid = (B // tb,)

    # Fuse K/V projections; cast matmul weights to the activation dtype so a
    # bf16 activation path runs bf16 on the MXU with half the HBM bytes.
    wq_c = wq.astype(dtype)
    wkv = jnp.concatenate([wk, wv], axis=0).astype(dtype)   # (2P, Ck)
    bkv = jnp.concatenate([bk, bv], axis=0)                 # (2P, 1)
    wo_c = wo.astype(dtype)

    const = lambda shape: pl.BlockSpec(shape, lambda i: (0, 0))

    return pl.pallas_call(
        _cross_view_att_kernel,
        out_shape=jax.ShapeDtypeStruct((B, Cq, N), dtype),
        grid_spec=pltpu.PrefetchScalarGridSpec(
            num_scalar_prefetch=0,
            grid=grid,
            in_specs=[
                pl.BlockSpec((tb, Cq, N), lambda i: (i, 0, 0)),  # query_x
                pl.BlockSpec((tb, Ck, N), lambda i: (i, 0, 0)),  # ref_x
                const((P, Cq)), const((P, 1)),                   # query conv
                const((2 * P, Ck)), const((2 * P, 1)),           # fused K/V conv
                const((Cq, P)), const((Cq, 1)),                  # out conv
            ],
            out_specs=pl.BlockSpec((tb, Cq, N), lambda i: (i, 0, 0)),
        ),
        compiler_params=pltpu.CompilerParams(
            dimension_semantics=("parallel",)),
    )(query_x, ref_x, wq_c, bq, wkv, bkv, wo_c, bo)


def init_params(key, query_dim=64, key_dim=64, proj_dim=8, dtype=jnp.float32):
    """Deterministic synthetic weights; shapes follow nn.Conv1d(kernel_size=1)."""
    ks = jax.random.split(key, 8)
    def w(k, o, i):
        return (jax.random.normal(k, (o, i), jnp.float32) / np.sqrt(i)).astype(dtype)
    def b(k, o):
        return (jax.random.normal(k, (o, 1), jnp.float32) * 0.01).astype(dtype)
    wq = w(ks[0], proj_dim, query_dim); bq = b(ks[1], proj_dim)
    wk = w(ks[2], proj_dim, key_dim);   bk = b(ks[3], proj_dim)
    wv = w(ks[4], proj_dim, key_dim);   bv = b(ks[5], proj_dim)
    wo = w(ks[6], query_dim, proj_dim); bo = b(ks[7], query_dim)
    return (wq, bq, wk, bk, wv, bv, wo, bo)


def reference(query_x, ref_x, params):
    """Pure-JAX reference mirroring the PyTorch forward."""
    wq, bq, wk, bk, wv, bv, wo, bo = params
    q = jnp.einsum('pc,bcn->bpn', wq, query_x, precision=_HI) + bq[None]
    k = jnp.einsum('pc,bcn->bpn', wk, ref_x, precision=_HI) + bk[None]
    v = jnp.einsum('pc,bcn->bpn', wv, ref_x, precision=_HI) + bv[None]
    w = jnp.einsum('bpn,bqn->bpq', q, k, precision=_HI)
    a = jax.nn.softmax(w, axis=-1)
    z = jnp.einsum('bqp,bqn->bpn', a, v, precision=_HI)    # att_map^T @ V
    return query_x + jnp.einsum('cp,bpn->bcn', wo, z, precision=_HI) + bo[None]


if __name__ == "__main__":
    QUERY_DIM, KEY_DIM, PROJ_DIM, N = 64, 64, 8, 128

    key = jax.random.PRNGKey(0)
    k_par, k_data = jax.random.split(key)
    params = init_params(k_par, QUERY_DIM, KEY_DIM, PROJ_DIM)

    for B in (2, 8):   # B=2 -> tb=1, grid=(2,);  B=8 -> tb=4, grid=(2,)
        k_qx, k_rx, k_data = jax.random.split(k_data, 3)
        query_x = jax.random.normal(k_qx, (B, QUERY_DIM, N), jnp.float32)
        ref_x = jax.random.normal(k_rx, (B, KEY_DIM, N), jnp.float32)

        out = jax.block_until_ready(cross_view_trans_att(query_x, ref_x, params))
        expect = jax.block_until_ready(reference(query_x, ref_x, params))
        np.testing.assert_allclose(np.asarray(out), np.asarray(expect),
                                   rtol=2e-3, atol=2e-3)

    print("KERNEL_OK")
</pallas_src>

<mosaic_0001>
module attributes {stable_mosaic.version = 11 : i64} {
  func.func @_cross_view_att_kernel(%arg0: i32, %arg1: memref<1x64x128xf32, #tpu.memory_space<vmem>>, %arg2: memref<1x64x128xf32, #tpu.memory_space<vmem>>, %arg3: memref<8x64xf32, #tpu.memory_space<vmem>>, %arg4: memref<8x1xf32, #tpu.memory_space<vmem>>, %arg5: memref<16x64xf32, #tpu.memory_space<vmem>>, %arg6: memref<16x1xf32, #tpu.memory_space<vmem>>, %arg7: memref<64x8xf32, #tpu.memory_space<vmem>>, %arg8: memref<64x1xf32, #tpu.memory_space<vmem>>, %arg9: memref<1x64x128xf32, #tpu.memory_space<vmem>>) attributes {dimension_semantics = [#tpu.dimension_semantics<parallel>], iteration_bounds = array<i64: 2>, scalar_prefetch = 0 : i64, scratch_operands = 0 : i64, tpu.core_type = #tpu.core_type<tc>, window_params = [{transform_indices = @transform_0, window_bounds = array<i64: 1, 64, 128>}, {transform_indices = @transform_1, window_bounds = array<i64: 1, 64, 128>}, {pipeline_mode = #tpu.pipeline_mode<synchronous>, transform_indices = @transform_2, window_bounds = array<i64: 8, 64>}, {pipeline_mode = #tpu.pipeline_mode<synchronous>, transform_indices = @transform_3, window_bounds = array<i64: 8, 1>}, {pipeline_mode = #tpu.pipeline_mode<synchronous>, transform_indices = @transform_4, window_bounds = array<i64: 16, 64>}, {pipeline_mode = #tpu.pipeline_mode<synchronous>, transform_indices = @transform_5, window_bounds = array<i64: 16, 1>}, {pipeline_mode = #tpu.pipeline_mode<synchronous>, transform_indices = @transform_6, window_bounds = array<i64: 64, 8>}, {pipeline_mode = #tpu.pipeline_mode<synchronous>, transform_indices = @transform_7, window_bounds = array<i64: 64, 1>}, {transform_indices = @transform_8, window_bounds = array<i64: 1, 64, 128>}]} {
    %c0 = arith.constant 0 : index
    %c0_0 = arith.constant 0 : index
    %0 = vector.load %arg3[%c0, %c0_0] : memref<8x64xf32, #tpu.memory_space<vmem>>, vector<8x64xf32>
    %c0_1 = arith.constant 0 : index
    %c0_2 = arith.constant 0 : index
    %1 = vector.load %arg4[%c0_1, %c0_2] : memref<8x1xf32, #tpu.memory_space<vmem>>, vector<8x1xf32>
    %c0_3 = arith.constant 0 : index
    %c0_4 = arith.constant 0 : index
    %2 = vector.load %arg5[%c0_3, %c0_4] : memref<16x64xf32, #tpu.memory_space<vmem>>, vector<16x64xf32>
    %c0_5 = arith.constant 0 : index
    %c0_6 = arith.constant 0 : index
    %3 = vector.load %arg6[%c0_5, %c0_6] : memref<16x1xf32, #tpu.memory_space<vmem>>, vector<16x1xf32>
    %c0_7 = arith.constant 0 : index
    %c0_8 = arith.constant 0 : index
    %4 = vector.load %arg7[%c0_7, %c0_8] : memref<64x8xf32, #tpu.memory_space<vmem>>, vector<64x8xf32>
    %c0_9 = arith.constant 0 : index
    %c0_10 = arith.constant 0 : index
    %5 = vector.load %arg8[%c0_9, %c0_10] : memref<64x1xf32, #tpu.memory_space<vmem>>, vector<64x1xf32>
    %c0_i32 = arith.constant 0 : i32
    %6 = arith.index_cast %c0_i32 : i32 to index
    %c0_11 = arith.constant 0 : index
    %c0_12 = arith.constant 0 : index
    %7 = vector.load %arg1[%6, %c0_11, %c0_12] : memref<1x64x128xf32, #tpu.memory_space<vmem>>, vector<1x64x128xf32>
    %8 = vector.shape_cast %7 : vector<1x64x128xf32> to vector<64x128xf32>
    %9 = arith.index_cast %c0_i32 : i32 to index
    %c0_13 = arith.constant 0 : index
    %c0_14 = arith.constant 0 : index
    %10 = vector.load %arg2[%9, %c0_13, %c0_14] : memref<1x64x128xf32, #tpu.memory_space<vmem>>, vector<1x64x128xf32>
    %11 = vector.shape_cast %10 : vector<1x64x128xf32> to vector<64x128xf32>
    %cst = arith.constant dense<0.000000e+00> : vector<8x128xf32>
    %12 = tpu.matmul %0, %8, %cst {dimension_numbers = #tpu.dot_dimension_numbers<[1], [0], [0], [1], [0, 0, 1, 1], [], []>, precision = #tpu.contract_precision<fp32>} : vector<8x64xf32>, vector<64x128xf32>, vector<8x128xf32> -> vector<8x128xf32>
    %13 = vector.broadcast %1 : vector<8x1xf32> to vector<8x128xf32>
    %14 = arith.addf %12, %13 : vector<8x128xf32>
    %cst_15 = arith.constant dense<0.000000e+00> : vector<16x128xf32>
    %15 = tpu.matmul %2, %11, %cst_15 {dimension_numbers = #tpu.dot_dimension_numbers<[1], [0], [0], [1], [0, 0, 1, 1], [], []>, precision = #tpu.contract_precision<fp32>} : vector<16x64xf32>, vector<64x128xf32>, vector<16x128xf32> -> vector<16x128xf32>
    %16 = vector.broadcast %3 : vector<16x1xf32> to vector<16x128xf32>
    %17 = arith.addf %15, %16 : vector<16x128xf32>
    %18 = vector.extract_strided_slice %17 {offsets = [0, 0], sizes = [8, 128], strides = [1, 1]} : vector<16x128xf32> to vector<8x128xf32>
    %19 = vector.extract_strided_slice %17 {offsets = [8, 0], sizes = [8, 128], strides = [1, 1]} : vector<16x128xf32> to vector<8x128xf32>
    %cst_16 = arith.constant dense<0.000000e+00> : vector<8x8xf32>
    %20 = tpu.matmul %14, %18, %cst_16 {dimension_numbers = #tpu.dot_dimension_numbers<[1], [1], [0], [0], [0, 0, 1, 0], [], []>, precision = #tpu.contract_precision<fp32>} : vector<8x128xf32>, vector<8x128xf32>, vector<8x8xf32> -> vector<8x8xf32>
    %cst_17 = arith.constant dense<0xFF800000> : vector<8xf32>
    %21 = vector.multi_reduction <maximumf>, %20, %cst_17 [1] : vector<8x8xf32> to vector<8xf32>
    %22 = vector.shape_cast %21 : vector<8xf32> to vector<8x1xf32>
    %23 = vector.broadcast %22 : vector<8x1xf32> to vector<8x8xf32>
    %24 = arith.subf %20, %23 : vector<8x8xf32>
    %25 = math.exp %24 : vector<8x8xf32>
    %cst_18 = arith.constant dense<0.000000e+00> : vector<8xf32>
    %26 = vector.multi_reduction <add>, %25, %cst_18 [1] : vector<8x8xf32> to vector<8xf32>
    %27 = vector.shape_cast %26 : vector<8xf32> to vector<8x1xf32>
    %28 = vector.broadcast %27 : vector<8x1xf32> to vector<8x8xf32>
    %29 = arith.divf %25, %28 : vector<8x8xf32>
    %cst_19 = arith.constant dense<0.000000e+00> : vector<8x128xf32>
    %30 = tpu.matmul %29, %19, %cst_19 {dimension_numbers = #tpu.dot_dimension_numbers<[0], [0], [1], [1], [0, 1, 1, 1], [], []>, precision = #tpu.contract_precision<fp32>} : vector<8x8xf32>, vector<8x128xf32>, vector<8x128xf32> -> vector<8x128xf32>
    %31 = arith.index_cast %c0_i32 : i32 to index
    %c0_20 = arith.constant 0 : index
    %c0_21 = arith.constant 0 : index
    %32 = vector.load %arg1[%31, %c0_20, %c0_21] : memref<1x64x128xf32, #tpu.memory_space<vmem>>, vector<1x64x128xf32>
    %33 = vector.shape_cast %32 : vector<1x64x128xf32> to vector<64x128xf32>
    %cst_22 = arith.constant dense<0.000000e+00> : vector<64x128xf32>
    %34 = tpu.matmul %4, %30, %cst_22 {dimension_numbers = #tpu.dot_dimension_numbers<[1], [0], [0], [1], [0, 0, 1, 1], [], []>, precision = #tpu.contract_precision<fp32>} : vector<64x8xf32>, vector<8x128xf32>, vector<64x128xf32> -> vector<64x128xf32>
    %35 = arith.addf %33, %34 : vector<64x128xf32>
    %36 = vector.broadcast %5 : vector<64x1xf32> to vector<64x128xf32>
    %37 = arith.addf %35, %36 : vector<64x128xf32>
    %38 = arith.index_cast %c0_i32 : i32 to index
    %c0_23 = arith.constant 0 : index
    %c0_24 = arith.constant 0 : index
    %39 = vector.load %arg9[%38, %c0_23, %c0_24] : memref<1x64x128xf32, #tpu.memory_space<vmem>>, vector<1x64x128xf32>
    %40 = vector.shape_cast %39 : vector<1x64x128xf32> to vector<64x128xf32>
    %41 = vector.shape_cast %37 : vector<64x128xf32> to vector<1x64x128xf32>
    tpu.vector_store %arg9[%38, %c0_23, %c0_24], %41 {strides = array<i32>} : memref<1x64x128xf32, #tpu.memory_space<vmem>>, vector<1x64x128xf32>,
    %c1_i32 = arith.constant 1 : i32
    return
  }
  func.func @transform_0(%arg0: i32) -> (i32, i32, i32) {
    %c0_i32 = arith.constant 0 : i32
    %c0_i32_0 = arith.constant 0 : i32
    %c0_i32_1 = arith.constant 0 : i32
    return %arg0, %c0_i32, %c0_i32_0 : i32, i32, i32
  }
  func.func @transform_1(%arg0: i32) -> (i32, i32, i32) {
    %c0_i32 = arith.constant 0 : i32
    %c0_i32_0 = arith.constant 0 : i32
    %c0_i32_1 = arith.constant 0 : i32
    return %arg0, %c0_i32, %c0_i32_0 : i32, i32, i32
  }
  func.func @transform_2(%arg0: i32) -> (i32, i32) {
    %c0_i32 = arith.constant 0 : i32
    %c0_i32_0 = arith.constant 0 : i32
    %c0_i32_1 = arith.constant 0 : i32
    return %c0_i32, %c0_i32_0 : i32, i32
  }
  func.func @transform_3(%arg0: i32) -> (i32, i32) {
    %c0_i32 = arith.constant 0 : i32
    %c0_i32_0 = arith.constant 0 : i32
    %c0_i32_1 = arith.constant 0 : i32
    return %c0_i32, %c0_i32_0 : i32, i32
  }
  func.func @transform_4(%arg0: i32) -> (i32, i32) {
    %c0_i32 = arith.constant 0 : i32
    %c0_i32_0 = arith.constant 0 : i32
    %c0_i32_1 = arith.constant 0 : i32
    return %c0_i32, %c0_i32_0 : i32, i32
  }
  func.func @transform_5(%arg0: i32) -> (i32, i32) {
    %c0_i32 = arith.constant 0 : i32
    %c0_i32_0 = arith.constant 0 : i32
    %c0_i32_1 = arith.constant 0 : i32
    return %c0_i32, %c0_i32_0 : i32, i32
  }
  func.func @transform_6(%arg0: i32) -> (i32, i32) {
    %c0_i32 = arith.constant 0 : i32
    %c0_i32_0 = arith.constant 0 : i32
    %c0_i32_1 = arith.constant 0 : i32
    return %c0_i32, %c0_i32_0 : i32, i32
  }
  func.func @transform_7(%arg0: i32) -> (i32, i32) {
    %c0_i32 = arith.constant 0 : i32
    %c0_i32_0 = arith.constant 0 : i32
    %c0_i32_1 = arith.constant 0 : i32
    return %c0_i32, %c0_i32_0 : i32, i32
  }
  func.func @transform_8(%arg0: i32) -> (i32, i32, i32) {
    %c0_i32 = arith.constant 0 : i32
    %c0_i32_0 = arith.constant 0 : i32
    %c0_i32_1 = arith.constant 0 : i32
    return %arg0, %c0_i32, %c0_i32_0 : i32, i32, i32
  }
}

</mosaic_0001>

<llo_original>
// kernel: tpu_custom_call.1
$region0: #{tpu_custom_call.1}
  #allocation0 [shape = 'u32[]', space=smem, size = 0x4, offset = 0x4, fixed_abs, tag = 'smem constant byte address 0x4 - core index']
  #allocation1 [shape = 'u32[144,128]{1,0:T(1,128)}', space=vmem, size = 0x12000, scoped, tag = 'internal scratch']
  %s0 = inlined_call_operand.vmem [shape: f32[2,64,128], index: 0, kind: input, shape index: {}]
  %s1 = inlined_call_operand.hbm [shape: f32[2,64,128], index: 1, kind: input, shape index: {}]
  %s2 = inlined_call_operand.vmem [shape: f32[8,64], index: 2, kind: input, shape index: {}]
  %s3 = inlined_call_operand.vmem [shape: f32[8,1], index: 3, kind: input, shape index: {}]
  %s4 = inlined_call_operand.vmem [shape: f32[16,64], index: 4, kind: input, shape index: {}]
  %s5 = inlined_call_operand.vmem [shape: f32[16,1], index: 5, kind: input, shape index: {}]
  %s6 = inlined_call_operand.vmem [shape: f32[64,8], index: 6, kind: input, shape index: {}]
  %s7 = inlined_call_operand.vmem [shape: f32[64,1], index: 7, kind: input, shape index: {}]
  %s8 = inlined_call_operand.hbm [shape: f32[2,64,128], index: 8, kind: output, shape index: {}]
  %s9 = sld [smem:[#allocation0]]
  $region69: #{tpu_custom_call.1} parent=0
    _
  %s11 = ssub.s32 1, %s9
  %s12 = scalar_select 0, %s11, %s9
  $region1: #{tpu_custom_call.1} parent=0
    #allocation2 [shape = 'u8[65536]{0}', space=vmem, size = 0x10000, scoped, tag = 'input window, operand 1']
    #allocation3 [shape = 's32[2]{0}', space=sflag, size = 0x8, scoped, tag = 'scoped memory for tpu_custom_call.1']
    #allocation4 [shape = 's32[2]{0}', space=sflag, size = 0x8, scoped, tag = 'scoped memory for tpu_custom_call.1']
    #allocation5 [shape = 'u8[65536]{0}', space=vmem, size = 0x10000, scoped, tag = 'output window, operand 0']
    %13 = vsyncpa [#allocation3], 0
    %s14 = scalar_lea.sflag [#allocation3], 1
    %15 = vsyncpa %s14, 0
    %16 = vsyncpa [#allocation4], 0
    %s17 = scalar_lea.sflag [#allocation4], 1
    %18 = vsyncpa %s17, 0
    loop: start=0, step=1, limit=4
    $region2: #{tpu_custom_call.1} parent=1 // loop_pre_header
      _
    $region3: #{tpu_custom_call.1} parent=1 // loop_header
      %s20 = sphi 0, %s24
      %p21 = scmp.ge.s32.totalorder %s20, 4
      %s30 = sphi 0, %s32
      %s33 = sphi 0, %s30
      %s34 = sphi 0, %s33
      %s50 = sphi 0, %s34
      %s56 = sphi 0, %s58
      %s59 = sphi 0, %s56
      %s60 = sphi 0, %s59
      %s76 = sphi 0, %s60
      %s80 = sphi 0, %s80
      %s82 = sphi 0, %s80
      %s83 = sphi 0, %s82
      %s97 = sphi 0, %s83
      %s101 = sphi 0, %s101
      %s103 = sphi 0, %s101
      %s104 = sphi 0, %s103
      %s118 = sphi 0, %s104
      %s122 = sphi 0, %s122
      %s124 = sphi 0, %s122
      %s125 = sphi 0, %s124
      %s139 = sphi 0, %s125
      %s143 = sphi 0, %s143
      %s145 = sphi 0, %s143
      %s146 = sphi 0, %s145
      %s160 = sphi 0, %s146
      %s164 = sphi 0, %s164
      %s166 = sphi 0, %s164
      %s167 = sphi 0, %s166
      %s181 = sphi 0, %s167
      %s185 = sphi 0, %s185
      %s187 = sphi 0, %s185
      %s188 = sphi 0, %s187
      %s202 = sphi 0, %s188
      %s208 = sphi 0, %s210
      %s211 = sphi 0, %s208
      %s212 = sphi 0, %s211
      %s228 = sphi 0, %s212
    $region4: #{tpu_custom_call.1} parent=1 // loop_header_branch
      %23 = sbr.rel (%p21) target = $region8
    $region5: #{tpu_custom_call.1} parent=1 // loop_body
      %s25 = ssub.s32 %s20, 1
      %s26 = ssub.s32 %s20, 2
      %s27 = sadd.s32 %s20, 1
      %s28 = ssub.s32 %s20, %s27
      %p29 = scmp.eq.s32.totalorder %s28, 0
      %s31 = sadd.s32 %s30, 1
      %s32 = scalar_select %p29, %s30, %s31
      %p35 = pneg %p29
      %p36 = scmp.eq.s32.totalorder %s20, 1
      %p37 = por %p35, %p36
      %p38 = scmp.ne.s32.totalorder %s30, %s33
      %p39 = scmp.eq.s32.totalorder %s20, 0
      %p40 = por %p38, %p39
      %p41 = scmp.ne.s32.totalorder %s30, %s33
      %p42 = scmp.eq.s32.totalorder %s25, 1
      %p43 = por %p41, %p42
      %p44 = scmp.ne.s32.totalorder %s33, %s34
      %p45 = scmp.eq.s32.totalorder %s25, 0
      %p46 = por %p44, %p45
      %p47 = scmp.ne.s32.totalorder %s33, %s34
      %p48 = scmp.eq.s32.totalorder %s26, 1
      %p49 = por %p47, %p48
      %p51 = scmp.ne.s32.totalorder %s34, %s50
      %p52 = scmp.eq.s32.totalorder %s26, 0
      %p53 = por %p51, %p52
      %s54 = ssub.s32 %s20, %s27
      %p55 = scmp.eq.s32.totalorder %s54, 0
      %s57 = sadd.s32 %s56, 1
      %s58 = scalar_select %p55, %s56, %s57
      %p61 = pneg %p55
      %p62 = scmp.eq.s32.totalorder %s20, 1
      %p63 = por %p61, %p62
      %p64 = scmp.ne.s32.totalorder %s56, %s59
      %p65 = scmp.eq.s32.totalorder %s20, 0
      %p66 = por %p64, %p65
      %p67 = scmp.ne.s32.totalorder %s56, %s59
      %p68 = scmp.eq.s32.totalorder %s25, 1
      %p69 = por %p67, %p68
      %p70 = scmp.ne.s32.totalorder %s59, %s60
      %p71 = scmp.eq.s32.totalorder %s25, 0
      %p72 = por %p70, %p71
      %p73 = scmp.ne.s32.totalorder %s59, %s60
      %p74 = scmp.eq.s32.totalorder %s26, 1
      %p75 = por %p73, %p74
      %p77 = scmp.ne.s32.totalorder %s60, %s76
      %p78 = scmp.eq.s32.totalorder %s26, 0
      %p79 = por %p77, %p78
      %s81 = sadd.s32 %s80, 1
      %p84 = scmp.eq.s32.totalorder %s20, 1
      %p85 = scmp.ne.s32.totalorder %s80, %s82
      %p86 = scmp.eq.s32.totalorder %s20, 0
      %p87 = por %p85, %p86
      %p88 = scmp.ne.s32.totalorder %s80, %s82
      %p89 = scmp.eq.s32.totalorder %s25, 1
      %p90 = por %p88, %p89
      %p91 = scmp.ne.s32.totalorder %s82, %s83
      %p92 = scmp.eq.s32.totalorder %s25, 0
      %p93 = por %p91, %p92
      %p94 = scmp.ne.s32.totalorder %s82, %s83
      %p95 = scmp.eq.s32.totalorder %s26, 1
      %p96 = por %p94, %p95
      %p98 = scmp.ne.s32.totalorder %s83, %s97
      %p99 = scmp.eq.s32.totalorder %s26, 0
      %p100 = por %p98, %p99
      %s102 = sadd.s32 %s101, 1
      %p105 = scmp.eq.s32.totalorder %s20, 1
      %p106 = scmp.ne.s32.totalorder %s101, %s103
      %p107 = scmp.eq.s32.totalorder %s20, 0
      %p108 = por %p106, %p107
      %p109 = scmp.ne.s32.totalorder %s101, %s103
      %p110 = scmp.eq.s32.totalorder %s25, 1
      %p111 = por %p109, %p110
      %p112 = scmp.ne.s32.totalorder %s103, %s104
      %p113 = scmp.eq.s32.totalorder %s25, 0
      %p114 = por %p112, %p113
      %p115 = scmp.ne.s32.totalorder %s103, %s104
      %p116 = scmp.eq.s32.totalorder %s26, 1
      %p117 = por %p115, %p116
      %p119 = scmp.ne.s32.totalorder %s104, %s118
      %p120 = scmp.eq.s32.totalorder %s26, 0
      %p121 = por %p119, %p120
      %s123 = sadd.s32 %s122, 1
      %p126 = scmp.eq.s32.totalorder %s20, 1
      %p127 = scmp.ne.s32.totalorder %s122, %s124
      %p128 = scmp.eq.s32.totalorder %s20, 0
      %p129 = por %p127, %p128
      %p130 = scmp.ne.s32.totalorder %s122, %s124
      %p131 = scmp.eq.s32.totalorder %s25, 1
      %p132 = por %p130, %p131
      %p133 = scmp.ne.s32.totalorder %s124, %s125
      %p134 = scmp.eq.s32.totalorder %s25, 0
      %p135 = por %p133, %p134
      %p136 = scmp.ne.s32.totalorder %s124, %s125
      %p137 = scmp.eq.s32.totalorder %s26, 1
      %p138 = por %p136, %p137
      %p140 = scmp.ne.s32.totalorder %s125, %s139
      %p141 = scmp.eq.s32.totalorder %s26, 0
      %p142 = por %p140, %p141
      %s144 = sadd.s32 %s143, 1
      %p147 = scmp.eq.s32.totalorder %s20, 1
      %p148 = scmp.ne.s32.totalorder %s143, %s145
      %p149 = scmp.eq.s32.totalorder %s20, 0
      %p150 = por %p148, %p149
      %p151 = scmp.ne.s32.totalorder %s143, %s145
      %p152 = scmp.eq.s32.totalorder %s25, 1
      %p153 = por %p151, %p152
      %p154 = scmp.ne.s32.totalorder %s145, %s146
      %p155 = scmp.eq.s32.totalorder %s25, 0
      %p156 = por %p154, %p155
      %p157 = scmp.ne.s32.totalorder %s145, %s146
      %p158 = scmp.eq.s32.totalorder %s26, 1
      %p159 = por %p157, %p158
      %p161 = scmp.ne.s32.totalorder %s146, %s160
      %p162 = scmp.eq.s32.totalorder %s26, 0
      %p163 = por %p161, %p162
      %s165 = sadd.s32 %s164, 1
      %p168 = scmp.eq.s32.totalorder %s20, 1
      %p169 = scmp.ne.s32.totalorder %s164, %s166
      %p170 = scmp.eq.s32.totalorder %s20, 0
      %p171 = por %p169, %p170
      %p172 = scmp.ne.s32.totalorder %s164, %s166
      %p173 = scmp.eq.s32.totalorder %s25, 1
      %p174 = por %p172, %p173
      %p175 = scmp.ne.s32.totalorder %s166, %s167
      %p176 = scmp.eq.s32.totalorder %s25, 0
      %p177 = por %p175, %p176
      %p178 = scmp.ne.s32.totalorder %s166, %s167
      %p179 = scmp.eq.s32.totalorder %s26, 1
      %p180 = por %p178, %p179
      %p182 = scmp.ne.s32.totalorder %s167, %s181
      %p183 = scmp.eq.s32.totalorder %s26, 0
      %p184 = por %p182, %p183
      %s186 = sadd.s32 %s185, 1
      %p189 = scmp.eq.s32.totalorder %s20, 1
      %p190 = scmp.ne.s32.totalorder %s185, %s187
      %p191 = scmp.eq.s32.totalorder %s20, 0
      %p192 = por %p190, %p191
      %p193 = scmp.ne.s32.totalorder %s185, %s187
      %p194 = scmp.eq.s32.totalorder %s25, 1
      %p195 = por %p193, %p194
      %p196 = scmp.ne.s32.totalorder %s187, %s188
      %p197 = scmp.eq.s32.totalorder %s25, 0
      %p198 = por %p196, %p197
      %p199 = scmp.ne.s32.totalorder %s187, %s188
      %p200 = scmp.eq.s32.totalorder %s26, 1
      %p201 = por %p199, %p200
      %p203 = scmp.ne.s32.totalorder %s188, %s202
      %p204 = scmp.eq.s32.totalorder %s26, 0
      %p205 = por %p203, %p204
      %s206 = ssub.s32 %s20, %s27
      %p207 = scmp.eq.s32.totalorder %s206, 0
      %s209 = sadd.s32 %s208, 1
      %s210 = scalar_select %p207, %s208, %s209
      %p213 = pneg %p207
      %p214 = scmp.eq.s32.totalorder %s20, 1
      %p215 = por %p213, %p214
      %p216 = scmp.ne.s32.totalorder %s208, %s211
      %p217 = scmp.eq.s32.totalorder %s20, 0
      %p218 = por %p216, %p217
      %p219 = scmp.ne.s32.totalorder %s208, %s211
      %p220 = scmp.eq.s32.totalorder %s25, 1
      %p221 = por %p219, %p220
      %p222 = scmp.ne.s32.totalorder %s211, %s212
      %p223 = scmp.eq.s32.totalorder %s25, 0
      %p224 = por %p222, %p223
      %p225 = scmp.ne.s32.totalorder %s211, %s212
      %p226 = scmp.eq.s32.totalorder %s26, 1
      %p227 = por %p225, %p226
      %p229 = scmp.ne.s32.totalorder %s212, %s228
      %p230 = scmp.eq.s32.totalorder %s26, 0
      %p231 = por %p229, %p230
      %p232 = scmp.le.s32.totalorder 1, %s20
      %p233 = scmp.lt.s32.totalorder %s20, 3
      %p234 = pnand %p232, %p233
      %p235 = pneg %p234
      // Predicated region
      $region9: #{tpu_custom_call.1} parent=5 // pred_check
        _
      $region10: #{tpu_custom_call.1} parent=5 // pred_check_branch
        %237 = sbr.rel (%p234) target = $region12
      $region11: #{tpu_custom_call.1} parent=5 // pred_region
        %s238 = ssub.s32 %s20, 1
        // Predicated region
        $region13: #{tpu_custom_call.1} parent=11 // pred_check
          %p239 = pneg %p93
        $region14: #{tpu_custom_call.1} parent=11 // pred_check_branch
          %241 = sbr.rel (%p239) target = $region16
        $region15: #{tpu_custom_call.1} parent=11 // pred_region
          _
        $region16: #{tpu_custom_call.1} parent=11 // pred_fallthru
          _
        // Predicated region
        $region17: #{tpu_custom_call.1} parent=11 // pred_check
          %p242 = pneg %p114
        $region18: #{tpu_custom_call.1} parent=11 // pred_check_branch
          %244 = sbr.rel (%p242) target = $region20
        $region19: #{tpu_custom_call.1} parent=11 // pred_region
          _
        $region20: #{tpu_custom_call.1} parent=11 // pred_fallthru
          _
        // Predicated region
        $region21: #{tpu_custom_call.1} parent=11 // pred_check
          %p245 = pneg %p135
        $region22: #{tpu_custom_call.1} parent=11 // pred_check_branch
          %247 = sbr.rel (%p245) target = $region24
        $region23: #{tpu_custom_call.1} parent=11 // pred_region
          _
        $region24: #{tpu_custom_call.1} parent=11 // pred_fallthru
          _
        // Predicated region
        $region25: #{tpu_custom_call.1} parent=11 // pred_check
          %p248 = pneg %p156
        $region26: #{tpu_custom_call.1} parent=11 // pred_check_branch
          %250 = sbr.rel (%p248) target = $region28
        $region27: #{tpu_custom_call.1} parent=11 // pred_region
          _
        $region28: #{tpu_custom_call.1} parent=11 // pred_fallthru
          _
        // Predicated region
        $region29: #{tpu_custom_call.1} parent=11 // pred_check
          %p251 = pneg %p177
        $region30: #{tpu_custom_call.1} parent=11 // pred_check_branch
          %253 = sbr.rel (%p251) target = $region32
        $region31: #{tpu_custom_call.1} parent=11 // pred_region
          _
        $region32: #{tpu_custom_call.1} parent=11 // pred_fallthru
          _
        // Predicated region
        $region33: #{tpu_custom_call.1} parent=11 // pred_check
          %p254 = pneg %p198
        $region34: #{tpu_custom_call.1} parent=11 // pred_check_branch
          %256 = sbr.rel (%p254) target = $region36
        $region35: #{tpu_custom_call.1} parent=11 // pred_region
          _
        $region36: #{tpu_custom_call.1} parent=11 // pred_fallthru
          _
      $region12: #{tpu_custom_call.1} parent=5 // pred_fallthru
        _
      %p257 = scmp.lt.s32.totalorder %s20, 2
      // Predicated region
      $region37: #{tpu_custom_call.1} parent=5 // pred_check
        %p258 = pneg %p257
      $region38: #{tpu_custom_call.1} parent=5 // pred_check_branch
        %260 = sbr.rel (%p258) target = $region40
      $region39: #{tpu_custom_call.1} parent=5 // pred_region
        // Predicated region
        $region41: #{tpu_custom_call.1} parent=39 // pred_check
          %p261 = pneg %p40
        $region42: #{tpu_custom_call.1} parent=39 // pred_check_branch
          %263 = sbr.rel (%p261) target = $region44
        $region43: #{tpu_custom_call.1} parent=39 // pred_region
          %p264 = scmp.lt.s32.totalorder %s20, 1
          %s265 = scalar_select %p264, %s20, 1
          %s266 = smul.addr %s265, 8
          %s267 = smul.addr %s266, 8
          %s268 = scalar_lea.vmem %s0, %s267
        $region44: #{tpu_custom_call.1} parent=39 // pred_fallthru
          _
        // Predicated region
        $region45: #{tpu_custom_call.1} parent=39 // pred_check
          %p269 = pneg %p66
        $region46: #{tpu_custom_call.1} parent=39 // pred_check_branch
          %271 = sbr.rel (%p269) target = $region48
        $region47: #{tpu_custom_call.1} parent=39 // pred_region
          %s272 = sand.u32 %s56, 1
          %s273 = scalar_lea.sflag [#allocation3], %s272
          %s274 = sand.u32 %s56, 1
          %s275 = smul.addr %s274, 64
          %s276 = scalar_lea.vmem [#allocation2], %s275
          %s278 = ssub.s32 1024, 1024
          %279 = vsyncadd %s273, %s278
          %s280 = smul.addr %s20, 8
          %s281 = smul.addr %s280, 128
          %s282 = scalar_lea.hbm %s1, %s281
          %s283 = sshll.u32 %s276, 4
          %s284 = int_to_ptr.vmem [resolvable:$true] %s283
          %289 = dma.hbm_to_vmem [thread:$0]  %s282, 1024, %s284, %s273, 128, 128, 8
        $region48: #{tpu_custom_call.1} parent=39 // pred_fallthru
          _
      $region40: #{tpu_custom_call.1} parent=5 // pred_fallthru
        _
      %p290 = scmp.le.s32.totalorder 1, %s20
      %p291 = scmp.lt.s32.totalorder %s20, 3
      %p292 = pnand %p290, %p291
      %p293 = pneg %p292
      // Predicated region
      $region49: #{tpu_custom_call.1} parent=5 // pred_check
        _
      $region50: #{tpu_custom_call.1} parent=5 // pred_check_branch
        %295 = sbr.rel (%p292) target = $region52
      $region51: #{tpu_custom_call.1} parent=5 // pred_region
        %s296 = ssub.s32 %s20, 1
        %s297 = sand.u32 %s59, 1
        %s298 = scalar_lea.sflag [#allocation3], %s297
        %s299 = sand.u32 %s59, 1
        %s300 = smul.addr %s299, 64
        %s301 = scalar_lea.vmem [#allocation2], %s300
        // Predicated region
        $region53: #{tpu_custom_call.1} parent=51 // pred_check
          %p302 = pneg %p72
        $region54: #{tpu_custom_call.1} parent=51 // pred_check_branch
          %304 = sbr.rel (%p302) target = $region56
        $region55: #{tpu_custom_call.1} parent=51 // pred_region
          %305 = dma.done %s298, 1024
        $region56: #{tpu_custom_call.1} parent=51 // pred_fallthru
          _
        %p306 = scmp.lt.s32.totalorder %s25, 1
        %s307 = scalar_select %p306, %s25, 1
        %s308 = smul.addr %s307, 8
        %s309 = smul.addr %s308, 8
        %s310 = scalar_lea.vmem %s0, %s309
        %p311 = pneg %p46
        %p312 = pneg %p43
        %s313 = sand.u32 %s59, 1
        %s314 = scalar_lea.sflag [#allocation3], %s313
        %s315 = sand.u32 %s59, 1
        %s316 = smul.addr %s315, 64
        %s317 = scalar_lea.vmem [#allocation2], %s316
        %p318 = pneg %p72
        %p319 = pneg %p69
        %p320 = pneg %p93
        %p321 = pneg %p90
        %p322 = pneg %p114
        %p323 = pneg %p111
        %p324 = pneg %p135
        %p325 = pneg %p132
        %p326 = pneg %p156
        %p327 = pneg %p153
        %p328 = pneg %p177
        %p329 = pneg %p174
        %p330 = pneg %p198
        %p331 = pneg %p195
        %p332 = pneg %p224
        %p333 = pneg %p221
        %s334 = sand.u32 %s211, 1
        %s335 = scalar_lea.sflag [#allocation4], %s334
        %s336 = sand.u32 %s211, 1
        %s337 = smul.addr %s336, 64
        %s338 = scalar_lea.vmem [#allocation5], %s337
        %p339 = scmp.lt.s32.totalorder %s25, 1
        %s340 = scalar_select %p339, %s25, 1
        %s341 = smul.addr %s340, 8
        %s342 = smul.addr %s341, 8
        %s343 = scalar_lea.vmem %s0, %s342
        %v344 = vld [vmem:[%s2] sm:$0xff]
        %v345 = vld [vmem:[%s3] sm:$0xff]
        %v346 = vld [vmem:[%s4] sm:$0xff]
        %v347 = vld [vmem:[%s4 + $0x8] sm:$0xff]
        %v348 = vld [vmem:[%s5] sm:$0xff]
        %v349 = vld [vmem:[%s5 + $0x8] sm:$0xff]
        %v350 = vld [vmem:[%s6] sm:$0xff]
        %v351 = vld [vmem:[%s6 + $0x8] sm:$0xff]
        %v352 = vld [vmem:[%s6 + $0x10] sm:$0xff]
        %v353 = vld [vmem:[%s6 + $0x18] sm:$0xff]
        %v354 = vld [vmem:[%s6 + $0x20] sm:$0xff]
        %v355 = vld [vmem:[%s6 + $0x28] sm:$0xff]
        %v356 = vld [vmem:[%s6 + $0x30] sm:$0xff]
        %v357 = vld [vmem:[%s6 + $0x38] sm:$0xff]
        %v358 = vld [vmem:[%s7] sm:$0xff]
        %v359 = vld [vmem:[%s7 + $0x8] sm:$0xff]
        %v360 = vld [vmem:[%s7 + $0x10] sm:$0xff]
        %v361 = vld [vmem:[%s7 + $0x18] sm:$0xff]
        %v362 = vld [vmem:[%s7 + $0x20] sm:$0xff]
        %v363 = vld [vmem:[%s7 + $0x28] sm:$0xff]
        %v364 = vld [vmem:[%s7 + $0x30] sm:$0xff]
        %v365 = vld [vmem:[%s7 + $0x38] sm:$0xff]
        %v366 = vld [vmem:[%s343] sm:$0xff]
        %v367 = vld [vmem:[%s343 + $0x8] sm:$0xff]
        %v368 = vld [vmem:[%s343 + $0x10] sm:$0xff]
        %v369 = vld [vmem:[%s343 + $0x18] sm:$0xff]
        %v370 = vld [vmem:[%s343 + $0x20] sm:$0xff]
        %v371 = vld [vmem:[%s343 + $0x28] sm:$0xff]
        %v372 = vld [vmem:[%s343 + $0x30] sm:$0xff]
        %v373 = vld [vmem:[%s343 + $0x38] sm:$0xff]
        %v374 = vld [vmem:[%s301] sm:$0xff]
        %v375 = vld [vmem:[%s301 + $0x8] sm:$0xff]
        %v376 = vld [vmem:[%s301 + $0x10] sm:$0xff]
        %v377 = vld [vmem:[%s301 + $0x18] sm:$0xff]
        %v378 = vld [vmem:[%s301 + $0x20] sm:$0xff]
        %v379 = vld [vmem:[%s301 + $0x28] sm:$0xff]
        %v380 = vld [vmem:[%s301 + $0x30] sm:$0xff]
        %v381 = vld [vmem:[%s301 + $0x38] sm:$0xff]
        %383 = vset.pattern.permute.xlu0 0
        %384 = vperm.xlu0 %383, %v345
        %v385 = vpop.permute.xlu0 %384
        %vm387 = vcmask 523264
        %v389 = vsel %vm387, %v344, 0
        %391 = vmatprep.subr.mxu0 0.0
        %392 = vmatpush1.msra.mxu0 0.0
        %393 = vmatprep.subr.mxu0 0.0
        %394 = vmatpush1.msra.mxu0 0.0
        %395 = vmatprep.subr.mxu0 0.0
        %396 = vmatpush1.msra.mxu0 0.0
        %397 = vmatprep.subr.mxu0 0.0
        %398 = vmatpush1.msra.mxu0 0.0
        %399 = vmatprep.subr.mxu0 0.0
        %400 = vmatpush1.msra.mxu0 0.0
        %401 = vmatprep.subr.mxu0 0.0
        %402 = vmatpush1.msra.mxu0 0.0
        %403 = vmatprep.subr.mxu0 0.0
        %404 = vmatpush1.msra.mxu0 0.0
        %405 = vmatprep.subr.mxu0 0.0
        %406 = vmatpush1.msra.mxu0 0.0
        %407 = vmatprep.subr.mxu0 0.0
        %v408 = vand.u32 %v373, 4294901760
        %409 = vmatpush1.msra.mxu0 %v408
        %410 = vmatprep.subr.mxu0 0.0
        %v411 = vand.u32 %v372, 4294901760
        %412 = vmatpush1.msra.mxu0 %v411
        %413 = vmatprep.subr.mxu0 0.0
        %v414 = vand.u32 %v371, 4294901760
        %415 = vmatpush1.msra.mxu0 %v414
        %416 = vmatprep.subr.mxu0 0.0
        %v417 = vand.u32 %v370, 4294901760
        %418 = vmatpush1.msra.mxu0 %v417
        %419 = vmatprep.subr.mxu0 0.0
        %v420 = vand.u32 %v369, 4294901760
        %421 = vmatpush1.msra.mxu0 %v420
        %422 = vmatprep.subr.mxu0 0.0
        %v423 = vand.u32 %v368, 4294901760
        %424 = vmatpush1.msra.mxu0 %v423
        %425 = vmatprep.subr.mxu0 0.0
        %v426 = vand.u32 %v367, 4294901760
        %427 = vmatpush1.msra.mxu0 %v426
        %428 = vmatprep.subr.mxu0 0.0
        %v429 = vand.u32 %v366, 4294901760
        %430 = vmatpush1.msra.mxu0 %v429
        %431 = vmatprep.subr.mxu0 0.0
        %432 = vmatpush2.msra.mxu0 0.0
        %433 = vmatprep.subr.mxu0 0.0
        %434 = vmatpush2.msra.mxu0 0.0
        %435 = vmatprep.subr.mxu0 0.0
        %436 = vmatpush2.msra.mxu0 0.0
        %437 = vmatprep.subr.mxu0 0.0
        %438 = vmatpush2.msra.mxu0 0.0
        %439 = vmatprep.subr.mxu0 0.0
        %440 = vmatpush2.msra.mxu0 0.0
        %441 = vmatprep.subr.mxu0 0.0
        %442 = vmatpush2.msra.mxu0 0.0
        %443 = vmatprep.subr.mxu0 0.0
        %444 = vmatpush2.msra.mxu0 0.0
        %445 = vmatprep.subr.mxu0 0.0
        %446 = vmatpush2.msra.mxu0 0.0
        %447 = vmatprep.subr.mxu0 0.0
        %448 = vmatpush2.msra.mxu0 0.0
        %449 = vmatprep.subr.mxu0 0.0
        %450 = vmatpush2.msra.mxu0 0.0
        %451 = vmatprep.subr.mxu0 0.0
        %452 = vmatpush2.msra.mxu0 0.0
        %453 = vmatprep.subr.mxu0 0.0
        %454 = vmatpush2.msra.mxu0 0.0
        %455 = vmatprep.subr.mxu0 0.0
        %456 = vmatpush2.msra.mxu0 0.0
        %457 = vmatprep.subr.mxu0 0.0
        %458 = vmatpush2.msra.mxu0 0.0
        %459 = vmatprep.subr.mxu0 0.0
        %460 = vmatpush2.msra.mxu0 0.0
        %461 = vmatprep.subr.mxu0 0.0
        %462 = vmatpush2.msra.mxu0 0.0
        %463 = vmatprep.mubr.f32.mxu0 0.0
        %v464 = vand.u32 %v389, 4294901760
        %v465 = vsub.f32 %v389, %v464
        %v466 = vand.u32 %v465, 4294901760
        %v467 = vsub.f32 %v465, %v466
        %v468 = vand.u32 %v467, 4294901760
        %469 = vmatmul.mubr.f32.gmra.mxu0 %v468
        %v470 = vpop.f32.mrf.mxu0
        %v471 = vadd.f32 %v385, %v470
        %v472 = vpop.f32.mrf.mxu0
        %473 = vdwg.mxu0
        %474 = vmatprep.subr.mxu0 0.0
        %475 = vmatpush1.msra.mxu0 0.0
        %476 = vmatprep.subr.mxu0 0.0
        %477 = vmatpush1.msra.mxu0 0.0
        %478 = vmatprep.subr.mxu0 0.0
        %479 = vmatpush1.msra.mxu0 0.0
        %480 = vmatprep.subr.mxu0 0.0
        %481 = vmatpush1.msra.mxu0 0.0
        %482 = vmatprep.subr.mxu0 0.0
        %483 = vmatpush1.msra.mxu0 0.0
        %484 = vmatprep.subr.mxu0 0.0
        %485 = vmatpush1.msra.mxu0 0.0
        %486 = vmatprep.subr.mxu0 0.0
        %487 = vmatpush1.msra.mxu0 0.0
        %488 = vmatprep.subr.mxu0 0.0
        %489 = vmatpush1.msra.mxu0 0.0
        %490 = vmatprep.subr.mxu0 0.0
        %v491 = vand.u32 %v373, 4294901760
        %v492 = vsub.f32 %v373, %v491
        %v493 = vand.u32 %v492, 4294901760
        %v494 = vsub.f32 %v492, %v493
        %v495 = vand.u32 %v494, 4294901760
        %496 = vmatpush1.msra.mxu0 %v495
        %497 = vmatprep.subr.mxu0 0.0
        %v498 = vand.u32 %v372, 4294901760
        %v499 = vsub.f32 %v372, %v498
        %v500 = vand.u32 %v499, 4294901760
        %v501 = vsub.f32 %v499, %v500
        %v502 = vand.u32 %v501, 4294901760
        %503 = vmatpush1.msra.mxu0 %v502
        %504 = vmatprep.subr.mxu0 0.0
        %v505 = vand.u32 %v371, 4294901760
        %v506 = vsub.f32 %v371, %v505
        %v507 = vand.u32 %v506, 4294901760
        %v508 = vsub.f32 %v506, %v507
        %v509 = vand.u32 %v508, 4294901760
        %510 = vmatpush1.msra.mxu0 %v509
        %511 = vmatprep.subr.mxu0 0.0
        %v512 = vand.u32 %v370, 4294901760
        %v513 = vsub.f32 %v370, %v512
        %v514 = vand.u32 %v513, 4294901760
        %v515 = vsub.f32 %v513, %v514
        %v516 = vand.u32 %v515, 4294901760
        %517 = vmatpush1.msra.mxu0 %v516
        %518 = vmatprep.subr.mxu0 0.0
        %v519 = vand.u32 %v369, 4294901760
        %v520 = vsub.f32 %v369, %v519
        %v521 = vand.u32 %v520, 4294901760
        %v522 = vsub.f32 %v520, %v521
        %v523 = vand.u32 %v522, 4294901760
        %524 = vmatpush1.msra.mxu0 %v523
        %525 = vmatprep.subr.mxu0 0.0
        %v526 = vand.u32 %v368, 4294901760
        %v527 = vsub.f32 %v368, %v526
        %v528 = vand.u32 %v527, 4294901760
        %v529 = vsub.f32 %v527, %v528
        %v530 = vand.u32 %v529, 4294901760
        %531 = vmatpush1.msra.mxu0 %v530
        %532 = vmatprep.subr.mxu0 0.0
        %v533 = vand.u32 %v367, 4294901760
        %v534 = vsub.f32 %v367, %v533
        %v535 = vand.u32 %v534, 4294901760
        %v536 = vsub.f32 %v534, %v535
        %v537 = vand.u32 %v536, 4294901760
        %538 = vmatpush1.msra.mxu0 %v537
        %539 = vmatprep.subr.mxu0 0.0
        %v540 = vand.u32 %v366, 4294901760
        %v541 = vsub.f32 %v366, %v540
        %v542 = vand.u32 %v541, 4294901760
        %v543 = vsub.f32 %v541, %v542
        %v544 = vand.u32 %v543, 4294901760
        %545 = vmatpush1.msra.mxu0 %v544
        %546 = vmatprep.subr.mxu0 0.0
        %547 = vmatpush2.msra.mxu0 0.0
        %548 = vmatprep.subr.mxu0 0.0
        %549 = vmatpush2.msra.mxu0 0.0
        %550 = vmatprep.subr.mxu0 0.0
        %551 = vmatpush2.msra.mxu0 0.0
        %552 = vmatprep.subr.mxu0 0.0
        %553 = vmatpush2.msra.mxu0 0.0
        %554 = vmatprep.subr.mxu0 0.0
        %555 = vmatpush2.msra.mxu0 0.0
        %556 = vmatprep.subr.mxu0 0.0
        %557 = vmatpush2.msra.mxu0 0.0
        %558 = vmatprep.subr.mxu0 0.0
        %559 = vmatpush2.msra.mxu0 0.0
        %560 = vmatprep.subr.mxu0 0.0
        %561 = vmatpush2.msra.mxu0 0.0
        %562 = vmatprep.subr.mxu0 0.0
        %563 = vmatpush2.msra.mxu0 0.0
        %564 = vmatprep.subr.mxu0 0.0
        %565 = vmatpush2.msra.mxu0 0.0
        %566 = vmatprep.subr.mxu0 0.0
        %567 = vmatpush2.msra.mxu0 0.0
        %568 = vmatprep.subr.mxu0 0.0
        %569 = vmatpush2.msra.mxu0 0.0
        %570 = vmatprep.subr.mxu0 0.0
        %571 = vmatpush2.msra.mxu0 0.0
        %572 = vmatprep.subr.mxu0 0.0
        %573 = vmatpush2.msra.mxu0 0.0
        %574 = vmatprep.subr.mxu0 0.0
        %575 = vmatpush2.msra.mxu0 0.0
        %576 = vmatprep.subr.mxu0 0.0
        %577 = vmatpush2.msra.mxu0 0.0
        %578 = vmatprep.mubr.f32.mxu0 0.0
        %v579 = vand.u32 %v389, 4294901760
        %580 = vmatmul.mubr.f32.gmra.mxu0 %v579
        %v581 = vpop.f32.mrf.mxu0
        %v582 = vadd.f32 %v471, %v581
        %v583 = vpop.f32.mrf.mxu0
        %584 = vdwg.mxu0
        %585 = vmatprep.subr.mxu0 0.0
        %586 = vmatpush1.msra.mxu0 0.0
        %587 = vmatprep.subr.mxu0 0.0
        %588 = vmatpush1.msra.mxu0 0.0
        %589 = vmatprep.subr.mxu0 0.0
        %590 = vmatpush1.msra.mxu0 0.0
        %591 = vmatprep.subr.mxu0 0.0
        %592 = vmatpush1.msra.mxu0 0.0
        %593 = vmatprep.subr.mxu0 0.0
        %594 = vmatpush1.msra.mxu0 0.0
        %595 = vmatprep.subr.mxu0 0.0
        %596 = vmatpush1.msra.mxu0 0.0
        %597 = vmatprep.subr.mxu0 0.0
        %598 = vmatpush1.msra.mxu0 0.0
        %599 = vmatprep.subr.mxu0 0.0
        %600 = vmatpush1.msra.mxu0 0.0
        %601 = vmatprep.subr.mxu0 0.0
        %v602 = vand.u32 %v373, 4294901760
        %v603 = vsub.f32 %v373, %v602
        %604 = vmatpush1.msra.mxu0 %v603
        %605 = vmatprep.subr.mxu0 0.0
        %v606 = vand.u32 %v372, 4294901760
        %v607 = vsub.f32 %v372, %v606
        %608 = vmatpush1.msra.mxu0 %v607
        %609 = vmatprep.subr.mxu0 0.0
        %v610 = vand.u32 %v371, 4294901760
        %v611 = vsub.f32 %v371, %v610
        %612 = vmatpush1.msra.mxu0 %v611
        %613 = vmatprep.subr.mxu0 0.0
        %v614 = vand.u32 %v370, 4294901760
        %v615 = vsub.f32 %v370, %v614
        %616 = vmatpush1.msra.mxu0 %v615
        %617 = vmatprep.subr.mxu0 0.0
        %v618 = vand.u32 %v369, 4294901760
        %v619 = vsub.f32 %v369, %v618
        %620 = vmatpush1.msra.mxu0 %v619
        %621 = vmatprep.subr.mxu0 0.0
        %v622 = vand.u32 %v368, 4294901760
        %v623 = vsub.f32 %v368, %v622
        %624 = vmatpush1.msra.mxu0 %v623
        %625 = vmatprep.subr.mxu0 0.0
        %v626 = vand.u32 %v367, 4294901760
        %v627 = vsub.f32 %v367, %v626
        %628 = vmatpush1.msra.mxu0 %v627
        %629 = vmatprep.subr.mxu0 0.0
        %v630 = vand.u32 %v366, 4294901760
        %v631 = vsub.f32 %v366, %v630
        %632 = vmatpush1.msra.mxu0 %v631
        %633 = vmatprep.subr.mxu0 0.0
        %634 = vmatpush2.msra.mxu0 0.0
        %635 = vmatprep.subr.mxu0 0.0
        %636 = vmatpush2.msra.mxu0 0.0
        %637 = vmatprep.subr.mxu0 0.0
        %638 = vmatpush2.msra.mxu0 0.0
        %639 = vmatprep.subr.mxu0 0.0
        %640 = vmatpush2.msra.mxu0 0.0
        %641 = vmatprep.subr.mxu0 0.0
        %642 = vmatpush2.msra.mxu0 0.0
        %643 = vmatprep.subr.mxu0 0.0
        %644 = vmatpush2.msra.mxu0 0.0
        %645 = vmatprep.subr.mxu0 0.0
        %646 = vmatpush2.msra.mxu0 0.0
        %647 = vmatprep.subr.mxu0 0.0
        %648 = vmatpush2.msra.mxu0 0.0
        %649 = vmatprep.subr.mxu0 0.0
        %650 = vmatpush2.msra.mxu0 0.0
        %651 = vmatprep.subr.mxu0 0.0
        %652 = vmatpush2.msra.mxu0 0.0
        %653 = vmatprep.subr.mxu0 0.0
        %654 = vmatpush2.msra.mxu0 0.0
        %655 = vmatprep.subr.mxu0 0.0
        %656 = vmatpush2.msra.mxu0 0.0
        %657 = vmatprep.subr.mxu0 0.0
        %658 = vmatpush2.msra.mxu0 0.0
        %659 = vmatprep.subr.mxu0 0.0
        %660 = vmatpush2.msra.mxu0 0.0
        %661 = vmatprep.subr.mxu0 0.0
        %662 = vmatpush2.msra.mxu0 0.0
        %663 = vmatprep.subr.mxu0 0.0
        %664 = vmatpush2.msra.mxu0 0.0
        %665 = vmatprep.mubr.f32.mxu0 0.0
        %v666 = vand.u32 %v389, 4294901760
        %v667 = vsub.f32 %v389, %v666
        %668 = vmatmul.mubr.f32.gmra.mxu0 %v667
        %v669 = vpop.f32.mrf.mxu0
        %v670 = vadd.f32 %v582, %v669
        %v671 = vpop.f32.mrf.mxu0
        %672 = vdwg.mxu0
        %673 = vmatprep.subr.mxu0 0.0
        %674 = vmatpush1.msra.mxu0 0.0
        %675 = vmatprep.subr.mxu0 0.0
        %676 = vmatpush1.msra.mxu0 0.0
        %677 = vmatprep.subr.mxu0 0.0
        %678 = vmatpush1.msra.mxu0 0.0
        %679 = vmatprep.subr.mxu0 0.0
        %680 = vmatpush1.msra.mxu0 0.0
        %681 = vmatprep.subr.mxu0 0.0
        %682 = vmatpush1.msra.mxu0 0.0
        %683 = vmatprep.subr.mxu0 0.0
        %684 = vmatpush1.msra.mxu0 0.0
        %685 = vmatprep.subr.mxu0 0.0
        %686 = vmatpush1.msra.mxu0 0.0
        %687 = vmatprep.subr.mxu0 0.0
        %688 = vmatpush1.msra.mxu0 0.0
        %689 = vmatprep.subr.mxu0 0.0
        %v690 = vand.u32 %v373, 4294901760
        %691 = vmatpush1.msra.mxu0 %v690
        %692 = vmatprep.subr.mxu0 0.0
        %v693 = vand.u32 %v372, 4294901760
        %694 = vmatpush1.msra.mxu0 %v693
        %695 = vmatprep.subr.mxu0 0.0
        %v696 = vand.u32 %v371, 4294901760
        %697 = vmatpush1.msra.mxu0 %v696
        %698 = vmatprep.subr.mxu0 0.0
        %v699 = vand.u32 %v370, 4294901760
        %700 = vmatpush1.msra.mxu0 %v699
        %701 = vmatprep.subr.mxu0 0.0
        %v702 = vand.u32 %v369, 4294901760
        %703 = vmatpush1.msra.mxu0 %v702
        %704 = vmatprep.subr.mxu0 0.0
        %v705 = vand.u32 %v368, 4294901760
        %706 = vmatpush1.msra.mxu0 %v705
        %707 = vmatprep.subr.mxu0 0.0
        %v708 = vand.u32 %v367, 4294901760
        %709 = vmatpush1.msra.mxu0 %v708
        %710 = vmatprep.subr.mxu0 0.0
        %v711 = vand.u32 %v366, 4294901760
        %712 = vmatpush1.msra.mxu0 %v711
        %713 = vmatprep.subr.mxu0 0.0
        %714 = vmatpush2.msra.mxu0 0.0
        %715 = vmatprep.subr.mxu0 0.0
        %716 = vmatpush2.msra.mxu0 0.0
        %717 = vmatprep.subr.mxu0 0.0
        %718 = vmatpush2.msra.mxu0 0.0
        %719 = vmatprep.subr.mxu0 0.0
        %720 = vmatpush2.msra.mxu0 0.0
        %721 = vmatprep.subr.mxu0 0.0
        %722 = vmatpush2.msra.mxu0 0.0
        %723 = vmatprep.subr.mxu0 0.0
        %724 = vmatpush2.msra.mxu0 0.0
        %725 = vmatprep.subr.mxu0 0.0
        %726 = vmatpush2.msra.mxu0 0.0
        %727 = vmatprep.subr.mxu0 0.0
        %728 = vmatpush2.msra.mxu0 0.0
        %729 = vmatprep.subr.mxu0 0.0
        %730 = vmatpush2.msra.mxu0 0.0
        %731 = vmatprep.subr.mxu0 0.0
        %732 = vmatpush2.msra.mxu0 0.0
        %733 = vmatprep.subr.mxu0 0.0
        %734 = vmatpush2.msra.mxu0 0.0
        %735 = vmatprep.subr.mxu0 0.0
        %736 = vmatpush2.msra.mxu0 0.0
        %737 = vmatprep.subr.mxu0 0.0
        %738 = vmatpush2.msra.mxu0 0.0
        %739 = vmatprep.subr.mxu0 0.0
        %740 = vmatpush2.msra.mxu0 0.0
        %741 = vmatprep.subr.mxu0 0.0
        %742 = vmatpush2.msra.mxu0 0.0
        %743 = vmatprep.subr.mxu0 0.0
        %744 = vmatpush2.msra.mxu0 0.0
        %745 = vmatprep.mubr.f32.mxu0 0.0
        %v746 = vand.u32 %v389, 4294901760
        %v747 = vsub.f32 %v389, %v746
        %v748 = vand.u32 %v747, 4294901760
        %749 = vmatmul.mubr.f32.gmra.mxu0 %v748
        %v750 = vpop.f32.mrf.mxu0
        %v751 = vadd.f32 %v670, %v750
        %v752 = vpop.f32.mrf.mxu0
        %753 = vdwg.mxu0
        %754 = vmatprep.subr.mxu0 0.0
        %755 = vmatpush1.msra.mxu0 0.0
        %756 = vmatprep.subr.mxu0 0.0
        %757 = vmatpush1.msra.mxu0 0.0
        %758 = vmatprep.subr.mxu0 0.0
        %759 = vmatpush1.msra.mxu0 0.0
        %760 = vmatprep.subr.mxu0 0.0
        %761 = vmatpush1.msra.mxu0 0.0
        %762 = vmatprep.subr.mxu0 0.0
        %763 = vmatpush1.msra.mxu0 0.0
        %764 = vmatprep.subr.mxu0 0.0
        %765 = vmatpush1.msra.mxu0 0.0
        %766 = vmatprep.subr.mxu0 0.0
        %767 = vmatpush1.msra.mxu0 0.0
        %768 = vmatprep.subr.mxu0 0.0
        %769 = vmatpush1.msra.mxu0 0.0
        %770 = vmatprep.subr.mxu0 0.0
        %v771 = vand.u32 %v373, 4294901760
        %v772 = vsub.f32 %v373, %v771
        %v773 = vand.u32 %v772, 4294901760
        %774 = vmatpush1.msra.mxu0 %v773
        %775 = vmatprep.subr.mxu0 0.0
        %v776 = vand.u32 %v372, 4294901760
        %v777 = vsub.f32 %v372, %v776
        %v778 = vand.u32 %v777, 4294901760
        %779 = vmatpush1.msra.mxu0 %v778
        %780 = vmatprep.subr.mxu0 0.0
        %v781 = vand.u32 %v371, 4294901760
        %v782 = vsub.f32 %v371, %v781
        %v783 = vand.u32 %v782, 4294901760
        %784 = vmatpush1.msra.mxu0 %v783
        %785 = vmatprep.subr.mxu0 0.0
        %v786 = vand.u32 %v370, 4294901760
        %v787 = vsub.f32 %v370, %v786
        %v788 = vand.u32 %v787, 4294901760
        %789 = vmatpush1.msra.mxu0 %v788
        %790 = vmatprep.subr.mxu0 0.0
        %v791 = vand.u32 %v369, 4294901760
        %v792 = vsub.f32 %v369, %v791
        %v793 = vand.u32 %v792, 4294901760
        %794 = vmatpush1.msra.mxu0 %v793
        %795 = vmatprep.subr.mxu0 0.0
        %v796 = vand.u32 %v368, 4294901760
        %v797 = vsub.f32 %v368, %v796
        %v798 = vand.u32 %v797, 4294901760
        %799 = vmatpush1.msra.mxu0 %v798
        %800 = vmatprep.subr.mxu0 0.0
        %v801 = vand.u32 %v367, 4294901760
        %v802 = vsub.f32 %v367, %v801
        %v803 = vand.u32 %v802, 4294901760
        %804 = vmatpush1.msra.mxu0 %v803
        %805 = vmatprep.subr.mxu0 0.0
        %v806 = vand.u32 %v366, 4294901760
        %v807 = vsub.f32 %v366, %v806
        %v808 = vand.u32 %v807, 4294901760
        %809 = vmatpush1.msra.mxu0 %v808
        %810 = vmatprep.subr.mxu0 0.0
        %811 = vmatpush2.msra.mxu0 0.0
        %812 = vmatprep.subr.mxu0 0.0
        %813 = vmatpush2.msra.mxu0 0.0
        %814 = vmatprep.subr.mxu0 0.0
        %815 = vmatpush2.msra.mxu0 0.0
        %816 = vmatprep.subr.mxu0 0.0
        %817 = vmatpush2.msra.mxu0 0.0
        %818 = vmatprep.subr.mxu0 0.0
        %819 = vmatpush2.msra.mxu0 0.0
        %820 = vmatprep.subr.mxu0 0.0
        %821 = vmatpush2.msra.mxu0 0.0
        %822 = vmatprep.subr.mxu0 0.0
        %823 = vmatpush2.msra.mxu0 0.0
        %824 = vmatprep.subr.mxu0 0.0
        %825 = vmatpush2.msra.mxu0 0.0
        %826 = vmatprep.subr.mxu0 0.0
        %827 = vmatpush2.msra.mxu0 0.0
        %828 = vmatprep.subr.mxu0 0.0
        %829 = vmatpush2.msra.mxu0 0.0
        %830 = vmatprep.subr.mxu0 0.0
        %831 = vmatpush2.msra.mxu0 0.0
        %832 = vmatprep.subr.mxu0 0.0
        %833 = vmatpush2.msra.mxu0 0.0
        %834 = vmatprep.subr.mxu0 0.0
        %835 = vmatpush2.msra.mxu0 0.0
        %836 = vmatprep.subr.mxu0 0.0
        %837 = vmatpush2.msra.mxu0 0.0
        %838 = vmatprep.subr.mxu0 0.0
        %839 = vmatpush2.msra.mxu0 0.0
        %840 = vmatprep.subr.mxu0 0.0
        %841 = vmatpush2.msra.mxu0 0.0
        %842 = vmatprep.mubr.f32.mxu0 0.0
        %v843 = vand.u32 %v389, 4294901760
        %844 = vmatmul.mubr.f32.gmra.mxu0 %v843
        %v845 = vpop.f32.mrf.mxu0
        %v846 = vadd.f32 %v751, %v845
        %v847 = vpop.f32.mrf.mxu0
        %848 = vdwg.mxu0
        %849 = vmatprep.subr.mxu0 0.0
        %850 = vmatpush1.msra.mxu0 0.0
        %851 = vmatprep.subr.mxu0 0.0
        %852 = vmatpush1.msra.mxu0 0.0
        %853 = vmatprep.subr.mxu0 0.0
        %854 = vmatpush1.msra.mxu0 0.0
        %855 = vmatprep.subr.mxu0 0.0
        %856 = vmatpush1.msra.mxu0 0.0
        %857 = vmatprep.subr.mxu0 0.0
        %858 = vmatpush1.msra.mxu0 0.0
        %859 = vmatprep.subr.mxu0 0.0
        %860 = vmatpush1.msra.mxu0 0.0
        %861 = vmatprep.subr.mxu0 0.0
        %862 = vmatpush1.msra.mxu0 0.0
        %863 = vmatprep.subr.mxu0 0.0
        %864 = vmatpush1.msra.mxu0 0.0
        %865 = vmatprep.subr.mxu0 0.0
        %v866 = vand.u32 %v373, 4294901760
        %867 = vmatpush1.msra.mxu0 %v866
        %868 = vmatprep.subr.mxu0 0.0
        %v869 = vand.u32 %v372, 4294901760
        %870 = vmatpush1.msra.mxu0 %v869
        %871 = vmatprep.subr.mxu0 0.0
        %v872 = vand.u32 %v371, 4294901760
        %873 = vmatpush1.msra.mxu0 %v872
        %874 = vmatprep.subr.mxu0 0.0
        %v875 = vand.u32 %v370, 4294901760
        %876 = vmatpush1.msra.mxu0 %v875
        %877 = vmatprep.subr.mxu0 0.0
        %v878 = vand.u32 %v369, 4294901760
        %879 = vmatpush1.msra.mxu0 %v878
        %880 = vmatprep.subr.mxu0 0.0
        %v881 = vand.u32 %v368, 4294901760
        %882 = vmatpush1.msra.mxu0 %v881
        %883 = vmatprep.subr.mxu0 0.0
        %v884 = vand.u32 %v367, 4294901760
        %885 = vmatpush1.msra.mxu0 %v884
        %886 = vmatprep.subr.mxu0 0.0
        %v887 = vand.u32 %v366, 4294901760
        %888 = vmatpush1.msra.mxu0 %v887
        %889 = vmatprep.subr.mxu0 0.0
        %890 = vmatpush2.msra.mxu0 0.0
        %891 = vmatprep.subr.mxu0 0.0
        %892 = vmatpush2.msra.mxu0 0.0
        %893 = vmatprep.subr.mxu0 0.0
        %894 = vmatpush2.msra.mxu0 0.0
        %895 = vmatprep.subr.mxu0 0.0
        %896 = vmatpush2.msra.mxu0 0.0
        %897 = vmatprep.subr.mxu0 0.0
        %898 = vmatpush2.msra.mxu0 0.0
        %899 = vmatprep.subr.mxu0 0.0
        %900 = vmatpush2.msra.mxu0 0.0
        %901 = vmatprep.subr.mxu0 0.0
        %902 = vmatpush2.msra.mxu0 0.0
        %903 = vmatprep.subr.mxu0 0.0
        %904 = vmatpush2.msra.mxu0 0.0
        %905 = vmatprep.subr.mxu0 0.0
        %906 = vmatpush2.msra.mxu0 0.0
        %907 = vmatprep.subr.mxu0 0.0
        %908 = vmatpush2.msra.mxu0 0.0
        %909 = vmatprep.subr.mxu0 0.0
        %910 = vmatpush2.msra.mxu0 0.0
        %911 = vmatprep.subr.mxu0 0.0
        %912 = vmatpush2.msra.mxu0 0.0
        %913 = vmatprep.subr.mxu0 0.0
        %914 = vmatpush2.msra.mxu0 0.0
        %915 = vmatprep.subr.mxu0 0.0
        %916 = vmatpush2.msra.mxu0 0.0
        %917 = vmatprep.subr.mxu0 0.0
        %918 = vmatpush2.msra.mxu0 0.0
        %919 = vmatprep.subr.mxu0 0.0
        %920 = vmatpush2.msra.mxu0 0.0
        %921 = vmatprep.mubr.f32.mxu0 0.0
        %v922 = vand.u32 %v389, 4294901760
        %923 = vmatmul.mubr.f32.gmra.mxu0 %v922
        %v924 = vpop.f32.mrf.mxu0
        %v925 = vadd.f32 %v846, %v924
        %v926 = vpop.f32.mrf.mxu0
        %927 = vdwg.mxu0
        %929 = vset.pattern.permute.xlu0 0
        %930 = vperm.xlu0 %929, %v348
        %v931 = vpop.permute.xlu0 %930
        %934 = vset.pattern.permute.xlu0 0
        %935 = vperm.xlu0 %934, %v349
        %v936 = vpop.permute.xlu0 %935
        %v939 = vsel %vm387, %v346, 0
        %v942 = vsel %vm387, %v347, 0
        %944 = vmatprep.subr.mxu0 0.0
        %945 = vmatpush1.msra.mxu0 0.0
        %946 = vmatprep.subr.mxu0 0.0
        %947 = vmatpush1.msra.mxu0 0.0
        %948 = vmatprep.subr.mxu0 0.0
        %949 = vmatpush1.msra.mxu0 0.0
        %950 = vmatprep.subr.mxu0 0.0
        %951 = vmatpush1.msra.mxu0 0.0
        %952 = vmatprep.subr.mxu0 0.0
        %953 = vmatpush1.msra.mxu0 0.0
        %954 = vmatprep.subr.mxu0 0.0
        %955 = vmatpush1.msra.mxu0 0.0
        %956 = vmatprep.subr.mxu0 0.0
        %957 = vmatpush1.msra.mxu0 0.0
        %958 = vmatprep.subr.mxu0 0.0
        %959 = vmatpush1.msra.mxu0 0.0
        %960 = vmatprep.subr.mxu0 0.0
        %v961 = vand.u32 %v381, 4294901760
        %962 = vmatpush1.msra.mxu0 %v961
        %963 = vmatprep.subr.mxu0 0.0
        %v964 = vand.u32 %v380, 4294901760
        %965 = vmatpush1.msra.mxu0 %v964
        %966 = vmatprep.subr.mxu0 0.0
        %v967 = vand.u32 %v379, 4294901760
        %968 = vmatpush1.msra.mxu0 %v967
        %969 = vmatprep.subr.mxu0 0.0
        %v970 = vand.u32 %v378, 4294901760
        %971 = vmatpush1.msra.mxu0 %v970
        %972 = vmatprep.subr.mxu0 0.0
        %v973 = vand.u32 %v377, 4294901760
        %974 = vmatpush1.msra.mxu0 %v973
        %975 = vmatprep.subr.mxu0 0.0
        %v976 = vand.u32 %v376, 4294901760
        %977 = vmatpush1.msra.mxu0 %v976
        %978 = vmatprep.subr.mxu0 0.0
        %v979 = vand.u32 %v375, 4294901760
        %980 = vmatpush1.msra.mxu0 %v979
        %981 = vmatprep.subr.mxu0 0.0
        %v982 = vand.u32 %v374, 4294901760
        %983 = vmatpush1.msra.mxu0 %v982
        %984 = vmatprep.subr.mxu0 0.0
        %985 = vmatpush2.msra.mxu0 0.0
        %986 = vmatprep.subr.mxu0 0.0
        %987 = vmatpush2.msra.mxu0 0.0
        %988 = vmatprep.subr.mxu0 0.0
        %989 = vmatpush2.msra.mxu0 0.0
        %990 = vmatprep.subr.mxu0 0.0
        %991 = vmatpush2.msra.mxu0 0.0
        %992 = vmatprep.subr.mxu0 0.0
        %993 = vmatpush2.msra.mxu0 0.0
        %994 = vmatprep.subr.mxu0 0.0
        %995 = vmatpush2.msra.mxu0 0.0
        %996 = vmatprep.subr.mxu0 0.0
        %997 = vmatpush2.msra.mxu0 0.0
        %998 = vmatprep.subr.mxu0 0.0
        %999 = vmatpush2.msra.mxu0 0.0
        %1000 = vmatprep.subr.mxu0 0.0
        %1001 = vmatpush2.msra.mxu0 0.0
        %1002 = vmatprep.subr.mxu0 0.0
        %1003 = vmatpush2.msra.mxu0 0.0
        %1004 = vmatprep.subr.mxu0 0.0
        %1005 = vmatpush2.msra.mxu0 0.0
        %1006 = vmatprep.subr.mxu0 0.0
        %1007 = vmatpush2.msra.mxu0 0.0
        %1008 = vmatprep.subr.mxu0 0.0
        %1009 = vmatpush2.msra.mxu0 0.0
        %1010 = vmatprep.subr.mxu0 0.0
        %1011 = vmatpush2.msra.mxu0 0.0
        %1012 = vmatprep.subr.mxu0 0.0
        %1013 = vmatpush2.msra.mxu0 0.0
        %1014 = vmatprep.subr.mxu0 0.0
        %1015 = vmatpush2.msra.mxu0 0.0
        %1016 = vmatprep.mubr.f32.mxu0 0.0
        %v1017 = vand.u32 %v939, 4294901760
        %v1018 = vsub.f32 %v939, %v1017
        %v1019 = vand.u32 %v1018, 4294901760
        %v1020 = vsub.f32 %v1018, %v1019
        %v1021 = vand.u32 %v1020, 4294901760
        %1022 = vmatmul.mubr.f32.gmra.mxu0 %v1021
        %v1023 = vpop.f32.mrf.mxu0
        %v1024 = vadd.f32 %v931, %v1023
        %v1025 = vpop.f32.mrf.mxu0
        %1026 = vmatprep.mubr.f32.mxu0 0.0
        %v1027 = vand.u32 %v942, 4294901760
        %v1028 = vsub.f32 %v942, %v1027
        %v1029 = vand.u32 %v1028, 4294901760
        %v1030 = vsub.f32 %v1028, %v1029
        %v1031 = vand.u32 %v1030, 4294901760
        %1032 = vmatmul.mubr.f32.gmra.mxu0 %v1031
        %v1033 = vpop.f32.mrf.mxu0
        %v1034 = vadd.f32 %v936, %v1033
        %v1035 = vpop.f32.mrf.mxu0
        %1036 = vdwg.mxu0
        %1037 = vmatprep.subr.mxu0 0.0
        %1038 = vmatpush1.msra.mxu0 0.0
        %1039 = vmatprep.subr.mxu0 0.0
        %1040 = vmatpush1.msra.mxu0 0.0
        %1041 = vmatprep.subr.mxu0 0.0
        %1042 = vmatpush1.msra.mxu0 0.0
        %1043 = vmatprep.subr.mxu0 0.0
        %1044 = vmatpush1.msra.mxu0 0.0
        %1045 = vmatprep.subr.mxu0 0.0
        %1046 = vmatpush1.msra.mxu0 0.0
        %1047 = vmatprep.subr.mxu0 0.0
        %1048 = vmatpush1.msra.mxu0 0.0
        %1049 = vmatprep.subr.mxu0 0.0
        %1050 = vmatpush1.msra.mxu0 0.0
        %1051 = vmatprep.subr.mxu0 0.0
        %1052 = vmatpush1.msra.mxu0 0.0
        %1053 = vmatprep.subr.mxu0 0.0
        %v1054 = vand.u32 %v381, 4294901760
        %v1055 = vsub.f32 %v381, %v1054
        %v1056 = vand.u32 %v1055, 4294901760
        %v1057 = vsub.f32 %v1055, %v1056
        %v1058 = vand.u32 %v1057, 4294901760
        %1059 = vmatpush1.msra.mxu0 %v1058
        %1060 = vmatprep.subr.mxu0 0.0
        %v1061 = vand.u32 %v380, 4294901760
        %v1062 = vsub.f32 %v380, %v1061
        %v1063 = vand.u32 %v1062, 4294901760
        %v1064 = vsub.f32 %v1062, %v1063
        %v1065 = vand.u32 %v1064, 4294901760
        %1066 = vmatpush1.msra.mxu0 %v1065
        %1067 = vmatprep.subr.mxu0 0.0
        %v1068 = vand.u32 %v379, 4294901760
        %v1069 = vsub.f32 %v379, %v1068
        %v1070 = vand.u32 %v1069, 4294901760
        %v1071 = vsub.f32 %v1069, %v1070
        %v1072 = vand.u32 %v1071, 4294901760
        %1073 = vmatpush1.msra.mxu0 %v1072
        %1074 = vmatprep.subr.mxu0 0.0
        %v1075 = vand.u32 %v378, 4294901760
        %v1076 = vsub.f32 %v378, %v1075
        %v1077 = vand.u32 %v1076, 4294901760
        %v1078 = vsub.f32 %v1076, %v1077
        %v1079 = vand.u32 %v1078, 4294901760
        %1080 = vmatpush1.msra.mxu0 %v1079
        %1081 = vmatprep.subr.mxu0 0.0
        %v1082 = vand.u32 %v377, 4294901760
        %v1083 = vsub.f32 %v377, %v1082
        %v1084 = vand.u32 %v1083, 4294901760
        %v1085 = vsub.f32 %v1083, %v1084
        %v1086 = vand.u32 %v1085, 4294901760
        %1087 = vmatpush1.msra.mxu0 %v1086
        %1088 = vmatprep.subr.mxu0 0.0
        %v1089 = vand.u32 %v376, 4294901760
        %v1090 = vsub.f32 %v376, %v1089
        %v1091 = vand.u32 %v1090, 4294901760
        %v1092 = vsub.f32 %v1090, %v1091
        %v1093 = vand.u32 %v1092, 4294901760
        %1094 = vmatpush1.msra.mxu0 %v1093
        %1095 = vmatprep.subr.mxu0 0.0
        %v1096 = vand.u32 %v375, 4294901760
        %v1097 = vsub.f32 %v375, %v1096
        %v1098 = vand.u32 %v1097, 4294901760
        %v1099 = vsub.f32 %v1097, %v1098
        %v1100 = vand.u32 %v1099, 4294901760
        %1101 = vmatpush1.msra.mxu0 %v1100
        %1102 = vmatprep.subr.mxu0 0.0
        %v1103 = vand.u32 %v374, 4294901760
        %v1104 = vsub.f32 %v374, %v1103
        %v1105 = vand.u32 %v1104, 4294901760
        %v1106 = vsub.f32 %v1104, %v1105
        %v1107 = vand.u32 %v1106, 4294901760
        %1108 = vmatpush1.msra.mxu0 %v1107
        %1109 = vmatprep.subr.mxu0 0.0
        %1110 = vmatpush2.msra.mxu0 0.0
        %1111 = vmatprep.subr.mxu0 0.0
        %1112 = vmatpush2.msra.mxu0 0.0
        %1113 = vmatprep.subr.mxu0 0.0
        %1114 = vmatpush2.msra.mxu0 0.0
        %1115 = vmatprep.subr.mxu0 0.0
        %1116 = vmatpush2.msra.mxu0 0.0
        %1117 = vmatprep.subr.mxu0 0.0
        %1118 = vmatpush2.msra.mxu0 0.0
        %1119 = vmatprep.subr.mxu0 0.0
        %1120 = vmatpush2.msra.mxu0 0.0
        %1121 = vmatprep.subr.mxu0 0.0
        %1122 = vmatpush2.msra.mxu0 0.0
        %1123 = vmatprep.subr.mxu0 0.0
        %1124 = vmatpush2.msra.mxu0 0.0
        %1125 = vmatprep.subr.mxu0 0.0
        %1126 = vmatpush2.msra.mxu0 0.0
        %1127 = vmatprep.subr.mxu0 0.0
        %1128 = vmatpush2.msra.mxu0 0.0
        %1129 = vmatprep.subr.mxu0 0.0
        %1130 = vmatpush2.msra.mxu0 0.0
        %1131 = vmatprep.subr.mxu0 0.0
        %1132 = vmatpush2.msra.mxu0 0.0
        %1133 = vmatprep.subr.mxu0 0.0
        %1134 = vmatpush2.msra.mxu0 0.0
        %1135 = vmatprep.subr.mxu0 0.0
        %1136 = vmatpush2.msra.mxu0 0.0
        %1137 = vmatprep.subr.mxu0 0.0
        %1138 = vmatpush2.msra.mxu0 0.0
        %1139 = vmatprep.subr.mxu0 0.0
        %1140 = vmatpush2.msra.mxu0 0.0
        %1141 = vmatprep.mubr.f32.mxu0 0.0
        %v1142 = vand.u32 %v939, 4294901760
        %1143 = vmatmul.mubr.f32.gmra.mxu0 %v1142
        %v1144 = vpop.f32.mrf.mxu0
        %v1145 = vadd.f32 %v1024, %v1144
        %v1146 = vpop.f32.mrf.mxu0
        %1147 = vmatprep.mubr.f32.mxu0 0.0
        %v1148 = vand.u32 %v942, 4294901760
        %1149 = vmatmul.mubr.f32.gmra.mxu0 %v1148
        %v1150 = vpop.f32.mrf.mxu0
        %v1151 = vadd.f32 %v1034, %v1150
        %v1152 = vpop.f32.mrf.mxu0
        %1153 = vdwg.mxu0
        %1154 = vmatprep.subr.mxu0 0.0
        %1155 = vmatpush1.msra.mxu0 0.0
        %1156 = vmatprep.subr.mxu0 0.0
        %1157 = vmatpush1.msra.mxu0 0.0
        %1158 = vmatprep.subr.mxu0 0.0
        %1159 = vmatpush1.msra.mxu0 0.0
        %1160 = vmatprep.subr.mxu0 0.0
        %1161 = vmatpush1.msra.mxu0 0.0
        %1162 = vmatprep.subr.mxu0 0.0
        %1163 = vmatpush1.msra.mxu0 0.0
        %1164 = vmatprep.subr.mxu0 0.0
        %1165 = vmatpush1.msra.mxu0 0.0
        %1166 = vmatprep.subr.mxu0 0.0
        %1167 = vmatpush1.msra.mxu0 0.0
        %1168 = vmatprep.subr.mxu0 0.0
        %1169 = vmatpush1.msra.mxu0 0.0
        %1170 = vmatprep.subr.mxu0 0.0
        %v1171 = vand.u32 %v381, 4294901760
        %v1172 = vsub.f32 %v381, %v1171
        %1173 = vmatpush1.msra.mxu0 %v1172
        %1174 = vmatprep.subr.mxu0 0.0
        %v1175 = vand.u32 %v380, 4294901760
        %v1176 = vsub.f32 %v380, %v1175
        %1177 = vmatpush1.msra.mxu0 %v1176
        %1178 = vmatprep.subr.mxu0 0.0
        %v1179 = vand.u32 %v379, 4294901760
        %v1180 = vsub.f32 %v379, %v1179
        %1181 = vmatpush1.msra.mxu0 %v1180
        %1182 = vmatprep.subr.mxu0 0.0
        %v1183 = vand.u32 %v378, 4294901760
        %v1184 = vsub.f32 %v378, %v1183
        %1185 = vmatpush1.msra.mxu0 %v1184
        %1186 = vmatprep.subr.mxu0 0.0
        %v1187 = vand.u32 %v377, 4294901760
        %v1188 = vsub.f32 %v377, %v1187
        %1189 = vmatpush1.msra.mxu0 %v1188
        %1190 = vmatprep.subr.mxu0 0.0
        %v1191 = vand.u32 %v376, 4294901760
        %v1192 = vsub.f32 %v376, %v1191
        %1193 = vmatpush1.msra.mxu0 %v1192
        %1194 = vmatprep.subr.mxu0 0.0
        %v1195 = vand.u32 %v375, 4294901760
        %v1196 = vsub.f32 %v375, %v1195
        %1197 = vmatpush1.msra.mxu0 %v1196
        %1198 = vmatprep.subr.mxu0 0.0
        %v1199 = vand.u32 %v374, 4294901760
        %v1200 = vsub.f32 %v374, %v1199
        %1201 = vmatpush1.msra.mxu0 %v1200
        %1202 = vmatprep.subr.mxu0 0.0
        %1203 = vmatpush2.msra.mxu0 0.0
        %1204 = vmatprep.subr.mxu0 0.0
        %1205 = vmatpush2.msra.mxu0 0.0
        %1206 = vmatprep.subr.mxu0 0.0
        %1207 = vmatpush2.msra.mxu0 0.0
        %1208 = vmatprep.subr.mxu0 0.0
        %1209 = vmatpush2.msra.mxu0 0.0
        %1210 = vmatprep.subr.mxu0 0.0
        %1211 = vmatpush2.msra.mxu0 0.0
        %1212 = vmatprep.subr.mxu0 0.0
        %1213 = vmatpush2.msra.mxu0 0.0
        %1214 = vmatprep.subr.mxu0 0.0
        %1215 = vmatpush2.msra.mxu0 0.0
        %1216 = vmatprep.subr.mxu0 0.0
        %1217 = vmatpush2.msra.mxu0 0.0
        %1218 = vmatprep.subr.mxu0 0.0
        %1219 = vmatpush2.msra.mxu0 0.0
        %1220 = vmatprep.subr.mxu0 0.0
        %1221 = vmatpush2.msra.mxu0 0.0
        %1222 = vmatprep.subr.mxu0 0.0
        %1223 = vmatpush2.msra.mxu0 0.0
        %1224 = vmatprep.subr.mxu0 0.0
        %1225 = vmatpush2.msra.mxu0 0.0
        %1226 = vmatprep.subr.mxu0 0.0
        %1227 = vmatpush2.msra.mxu0 0.0
        %1228 = vmatprep.subr.mxu0 0.0
        %1229 = vmatpush2.msra.mxu0 0.0
        %1230 = vmatprep.subr.mxu0 0.0
        %1231 = vmatpush2.msra.mxu0 0.0
        %1232 = vmatprep.subr.mxu0 0.0
        %1233 = vmatpush2.msra.mxu0 0.0
        %1234 = vmatprep.mubr.f32.mxu0 0.0
        %v1235 = vand.u32 %v939, 4294901760
        %v1236 = vsub.f32 %v939, %v1235
        %1237 = vmatmul.mubr.f32.gmra.mxu0 %v1236
        %v1238 = vpop.f32.mrf.mxu0
        %v1239 = vadd.f32 %v1145, %v1238
        %v1240 = vpop.f32.mrf.mxu0
        %1241 = vmatprep.mubr.f32.mxu0 0.0
        %v1242 = vand.u32 %v942, 4294901760
        %v1243 = vsub.f32 %v942, %v1242
        %1244 = vmatmul.mubr.f32.gmra.mxu0 %v1243
        %v1245 = vpop.f32.mrf.mxu0
        %v1246 = vadd.f32 %v1151, %v1245
        %v1247 = vpop.f32.mrf.mxu0
        %1248 = vdwg.mxu0
        %1249 = vmatprep.subr.mxu0 0.0
        %1250 = vmatpush1.msra.mxu0 0.0
        %1251 = vmatprep.subr.mxu0 0.0
        %1252 = vmatpush1.msra.mxu0 0.0
        %1253 = vmatprep.subr.mxu0 0.0
        %1254 = vmatpush1.msra.mxu0 0.0
        %1255 = vmatprep.subr.mxu0 0.0
        %1256 = vmatpush1.msra.mxu0 0.0
        %1257 = vmatprep.subr.mxu0 0.0
        %1258 = vmatpush1.msra.mxu0 0.0
        %1259 = vmatprep.subr.mxu0 0.0
        %1260 = vmatpush1.msra.mxu0 0.0
        %1261 = vmatprep.subr.mxu0 0.0
        %1262 = vmatpush1.msra.mxu0 0.0
        %1263 = vmatprep.subr.mxu0 0.0
        %1264 = vmatpush1.msra.mxu0 0.0
        %1265 = vmatprep.subr.mxu0 0.0
        %v1266 = vand.u32 %v381, 4294901760
        %1267 = vmatpush1.msra.mxu0 %v1266
        %1268 = vmatprep.subr.mxu0 0.0
        %v1269 = vand.u32 %v380, 4294901760
        %1270 = vmatpush1.msra.mxu0 %v1269
        %1271 = vmatprep.subr.mxu0 0.0
        %v1272 = vand.u32 %v379, 4294901760
        %1273 = vmatpush1.msra.mxu0 %v1272
        %1274 = vmatprep.subr.mxu0 0.0
        %v1275 = vand.u32 %v378, 4294901760
        %1276 = vmatpush1.msra.mxu0 %v1275
        %1277 = vmatprep.subr.mxu0 0.0
        %v1278 = vand.u32 %v377, 4294901760
        %1279 = vmatpush1.msra.mxu0 %v1278
        %1280 = vmatprep.subr.mxu0 0.0
        %v1281 = vand.u32 %v376, 4294901760
        %1282 = vmatpush1.msra.mxu0 %v1281
        %1283 = vmatprep.subr.mxu0 0.0
        %v1284 = vand.u32 %v375, 4294901760
        %1285 = vmatpush1.msra.mxu0 %v1284
        %1286 = vmatprep.subr.mxu0 0.0
        %v1287 = vand.u32 %v374, 4294901760
        %1288 = vmatpush1.msra.mxu0 %v1287
        %1289 = vmatprep.subr.mxu0 0.0
        %1290 = vmatpush2.msra.mxu0 0.0
        %1291 = vmatprep.subr.mxu0 0.0
        %1292 = vmatpush2.msra.mxu0 0.0
        %1293 = vmatprep.subr.mxu0 0.0
        %1294 = vmatpush2.msra.mxu0 0.0
        %1295 = vmatprep.subr.mxu0 0.0
        %1296 = vmatpush2.msra.mxu0 0.0
        %1297 = vmatprep.subr.mxu0 0.0
        %1298 = vmatpush2.msra.mxu0 0.0
        %1299 = vmatprep.subr.mxu0 0.0
        %1300 = vmatpush2.msra.mxu0 0.0
        %1301 = vmatprep.subr.mxu0 0.0
        %1302 = vmatpush2.msra.mxu0 0.0
        %1303 = vmatprep.subr.mxu0 0.0
        %1304 = vmatpush2.msra.mxu0 0.0
        %1305 = vmatprep.subr.mxu0 0.0
        %1306 = vmatpush2.msra.mxu0 0.0
        %1307 = vmatprep.subr.mxu0 0.0
        %1308 = vmatpush2.msra.mxu0 0.0
        %1309 = vmatprep.subr.mxu0 0.0
        %1310 = vmatpush2.msra.mxu0 0.0
        %1311 = vmatprep.subr.mxu0 0.0
        %1312 = vmatpush2.msra.mxu0 0.0
        %1313 = vmatprep.subr.mxu0 0.0
        %1314 = vmatpush2.msra.mxu0 0.0
        %1315 = vmatprep.subr.mxu0 0.0
        %1316 = vmatpush2.msra.mxu0 0.0
        %1317 = vmatprep.subr.mxu0 0.0
        %1318 = vmatpush2.msra.mxu0 0.0
        %1319 = vmatprep.subr.mxu0 0.0
        %1320 = vmatpush2.msra.mxu0 0.0
        %1321 = vmatprep.mubr.f32.mxu0 0.0
        %v1322 = vand.u32 %v939, 4294901760
        %v1323 = vsub.f32 %v939, %v1322
        %v1324 = vand.u32 %v1323, 4294901760
        %1325 = vmatmul.mubr.f32.gmra.mxu0 %v1324
        %v1326 = vpop.f32.mrf.mxu0
        %v1327 = vadd.f32 %v1239, %v1326
        %v1328 = vpop.f32.mrf.mxu0
        %1329 = vmatprep.mubr.f32.mxu0 0.0
        %v1330 = vand.u32 %v942, 4294901760
        %v1331 = vsub.f32 %v942, %v1330
        %v1332 = vand.u32 %v1331, 4294901760
        %1333 = vmatmul.mubr.f32.gmra.mxu0 %v1332
        %v1334 = vpop.f32.mrf.mxu0
        %v1335 = vadd.f32 %v1246, %v1334
        %v1336 = vpop.f32.mrf.mxu0
        %1337 = vdwg.mxu0
        %1338 = vmatprep.subr.mxu0 0.0
        %1339 = vmatpush1.msra.mxu0 0.0
        %1340 = vmatprep.subr.mxu0 0.0
        %1341 = vmatpush1.msra.mxu0 0.0
        %1342 = vmatprep.subr.mxu0 0.0
        %1343 = vmatpush1.msra.mxu0 0.0
        %1344 = vmatprep.subr.mxu0 0.0
        %1345 = vmatpush1.msra.mxu0 0.0
        %1346 = vmatprep.subr.mxu0 0.0
        %1347 = vmatpush1.msra.mxu0 0.0
        %1348 = vmatprep.subr.mxu0 0.0
        %1349 = vmatpush1.msra.mxu0 0.0
        %1350 = vmatprep.subr.mxu0 0.0
        %1351 = vmatpush1.msra.mxu0 0.0
        %1352 = vmatprep.subr.mxu0 0.0
        %1353 = vmatpush1.msra.mxu0 0.0
        %1354 = vmatprep.subr.mxu0 0.0
        %v1355 = vand.u32 %v381, 4294901760
        %v1356 = vsub.f32 %v381, %v1355
        %v1357 = vand.u32 %v1356, 4294901760
        %1358 = vmatpush1.msra.mxu0 %v1357
        %1359 = vmatprep.subr.mxu0 0.0
        %v1360 = vand.u32 %v380, 4294901760
        %v1361 = vsub.f32 %v380, %v1360
        %v1362 = vand.u32 %v1361, 4294901760
        %1363 = vmatpush1.msra.mxu0 %v1362
        %1364 = vmatprep.subr.mxu0 0.0
        %v1365 = vand.u32 %v379, 4294901760
        %v1366 = vsub.f32 %v379, %v1365
        %v1367 = vand.u32 %v1366, 4294901760
        %1368 = vmatpush1.msra.mxu0 %v1367
        %1369 = vmatprep.subr.mxu0 0.0
        %v1370 = vand.u32 %v378, 4294901760
        %v1371 = vsub.f32 %v378, %v1370
        %v1372 = vand.u32 %v1371, 4294901760
        %1373 = vmatpush1.msra.mxu0 %v1372
        %1374 = vmatprep.subr.mxu0 0.0
        %v1375 = vand.u32 %v377, 4294901760
        %v1376 = vsub.f32 %v377, %v1375
        %v1377 = vand.u32 %v1376, 4294901760
        %1378 = vmatpush1.msra.mxu0 %v1377
        %1379 = vmatprep.subr.mxu0 0.0
        %v1380 = vand.u32 %v376, 4294901760
        %v1381 = vsub.f32 %v376, %v1380
        %v1382 = vand.u32 %v1381, 4294901760
        %1383 = vmatpush1.msra.mxu0 %v1382
        %1384 = vmatprep.subr.mxu0 0.0
        %v1385 = vand.u32 %v375, 4294901760
        %v1386 = vsub.f32 %v375, %v1385
        %v1387 = vand.u32 %v1386, 4294901760
        %1388 = vmatpush1.msra.mxu0 %v1387
        %1389 = vmatprep.subr.mxu0 0.0
        %v1390 = vand.u32 %v374, 4294901760
        %v1391 = vsub.f32 %v374, %v1390
        %v1392 = vand.u32 %v1391, 4294901760
        %1393 = vmatpush1.msra.mxu0 %v1392
        %1394 = vmatprep.subr.mxu0 0.0
        %1395 = vmatpush2.msra.mxu0 0.0
        %1396 = vmatprep.subr.mxu0 0.0
        %1397 = vmatpush2.msra.mxu0 0.0
        %1398 = vmatprep.subr.mxu0 0.0
        %1399 = vmatpush2.msra.mxu0 0.0
        %1400 = vmatprep.subr.mxu0 0.0
        %1401 = vmatpush2.msra.mxu0 0.0
        %1402 = vmatprep.subr.mxu0 0.0
        %1403 = vmatpush2.msra.mxu0 0.0
        %1404 = vmatprep.subr.mxu0 0.0
        %1405 = vmatpush2.msra.mxu0 0.0
        %1406 = vmatprep.subr.mxu0 0.0
        %1407 = vmatpush2.msra.mxu0 0.0
        %1408 = vmatprep.subr.mxu0 0.0
        %1409 = vmatpush2.msra.mxu0 0.0
        %1410 = vmatprep.subr.mxu0 0.0
        %1411 = vmatpush2.msra.mxu0 0.0
        %1412 = vmatprep.subr.mxu0 0.0
        %1413 = vmatpush2.msra.mxu0 0.0
        %1414 = vmatprep.subr.mxu0 0.0
        %1415 = vmatpush2.msra.mxu0 0.0
        %1416 = vmatprep.subr.mxu0 0.0
        %1417 = vmatpush2.msra.mxu0 0.0
        %1418 = vmatprep.subr.mxu0 0.0
        %1419 = vmatpush2.msra.mxu0 0.0
        %1420 = vmatprep.subr.mxu0 0.0
        %1421 = vmatpush2.msra.mxu0 0.0
        %1422 = vmatprep.subr.mxu0 0.0
        %1423 = vmatpush2.msra.mxu0 0.0
        %1424 = vmatprep.subr.mxu0 0.0
        %1425 = vmatpush2.msra.mxu0 0.0
        %1426 = vmatprep.mubr.f32.mxu0 0.0
        %v1427 = vand.u32 %v939, 4294901760
        %1428 = vmatmul.mubr.f32.gmra.mxu0 %v1427
        %v1429 = vpop.f32.mrf.mxu0
        %v1430 = vadd.f32 %v1327, %v1429
        %v1431 = vpop.f32.mrf.mxu0
        %1432 = vmatprep.mubr.f32.mxu0 0.0
        %v1433 = vand.u32 %v942, 4294901760
        %1434 = vmatmul.mubr.f32.gmra.mxu0 %v1433
        %v1435 = vpop.f32.mrf.mxu0
        %v1436 = vadd.f32 %v1335, %v1435
        %v1437 = vpop.f32.mrf.mxu0
        %1438 = vdwg.mxu0
        %1439 = vmatprep.subr.mxu0 0.0
        %1440 = vmatpush1.msra.mxu0 0.0
        %1441 = vmatprep.subr.mxu0 0.0
        %1442 = vmatpush1.msra.mxu0 0.0
        %1443 = vmatprep.subr.mxu0 0.0
        %1444 = vmatpush1.msra.mxu0 0.0
        %1445 = vmatprep.subr.mxu0 0.0
        %1446 = vmatpush1.msra.mxu0 0.0
        %1447 = vmatprep.subr.mxu0 0.0
        %1448 = vmatpush1.msra.mxu0 0.0
        %1449 = vmatprep.subr.mxu0 0.0
        %1450 = vmatpush1.msra.mxu0 0.0
        %1451 = vmatprep.subr.mxu0 0.0
        %1452 = vmatpush1.msra.mxu0 0.0
        %1453 = vmatprep.subr.mxu0 0.0
        %1454 = vmatpush1.msra.mxu0 0.0
        %1455 = vmatprep.subr.mxu0 0.0
        %v1456 = vand.u32 %v381, 4294901760
        %1457 = vmatpush1.msra.mxu0 %v1456
        %1458 = vmatprep.subr.mxu0 0.0
        %v1459 = vand.u32 %v380, 4294901760
        %1460 = vmatpush1.msra.mxu0 %v1459
        %1461 = vmatprep.subr.mxu0 0.0
        %v1462 = vand.u32 %v379, 4294901760
        %1463 = vmatpush1.msra.mxu0 %v1462
        %1464 = vmatprep.subr.mxu0 0.0
        %v1465 = vand.u32 %v378, 4294901760
        %1466 = vmatpush1.msra.mxu0 %v1465
        %1467 = vmatprep.subr.mxu0 0.0
        %v1468 = vand.u32 %v377, 4294901760
        %1469 = vmatpush1.msra.mxu0 %v1468
        %1470 = vmatprep.subr.mxu0 0.0
        %v1471 = vand.u32 %v376, 4294901760
        %1472 = vmatpush1.msra.mxu0 %v1471
        %1473 = vmatprep.subr.mxu0 0.0
        %v1474 = vand.u32 %v375, 4294901760
        %1475 = vmatpush1.msra.mxu0 %v1474
        %1476 = vmatprep.subr.mxu0 0.0
        %v1477 = vand.u32 %v374, 4294901760
        %1478 = vmatpush1.msra.mxu0 %v1477
        %1479 = vmatprep.subr.mxu0 0.0
        %1480 = vmatpush2.msra.mxu0 0.0
        %1481 = vmatprep.subr.mxu0 0.0
        %1482 = vmatpush2.msra.mxu0 0.0
        %1483 = vmatprep.subr.mxu0 0.0
        %1484 = vmatpush2.msra.mxu0 0.0
        %1485 = vmatprep.subr.mxu0 0.0
        %1486 = vmatpush2.msra.mxu0 0.0
        %1487 = vmatprep.subr.mxu0 0.0
        %1488 = vmatpush2.msra.mxu0 0.0
        %1489 = vmatprep.subr.mxu0 0.0
        %1490 = vmatpush2.msra.mxu0 0.0
        %1491 = vmatprep.subr.mxu0 0.0
        %1492 = vmatpush2.msra.mxu0 0.0
        %1493 = vmatprep.subr.mxu0 0.0
        %1494 = vmatpush2.msra.mxu0 0.0
        %1495 = vmatprep.subr.mxu0 0.0
        %1496 = vmatpush2.msra.mxu0 0.0
        %1497 = vmatprep.subr.mxu0 0.0
        %1498 = vmatpush2.msra.mxu0 0.0
        %1499 = vmatprep.subr.mxu0 0.0
        %1500 = vmatpush2.msra.mxu0 0.0
        %1501 = vmatprep.subr.mxu0 0.0
        %1502 = vmatpush2.msra.mxu0 0.0
        %1503 = vmatprep.subr.mxu0 0.0
        %1504 = vmatpush2.msra.mxu0 0.0
        %1505 = vmatprep.subr.mxu0 0.0
        %1506 = vmatpush2.msra.mxu0 0.0
        %1507 = vmatprep.subr.mxu0 0.0
        %1508 = vmatpush2.msra.mxu0 0.0
        %1509 = vmatprep.subr.mxu0 0.0
        %1510 = vmatpush2.msra.mxu0 0.0
        %1511 = vmatprep.mubr.f32.mxu0 0.0
        %v1512 = vand.u32 %v939, 4294901760
        %1513 = vmatmul.mubr.f32.gmra.mxu0 %v1512
        %v1514 = vpop.f32.mrf.mxu0
        %v1515 = vadd.f32 %v1430, %v1514
        %v1516 = vpop.f32.mrf.mxu0
        %1517 = vmatprep.mubr.f32.mxu0 0.0
        %v1518 = vand.u32 %v942, 4294901760
        %1519 = vmatmul.mubr.f32.gmra.mxu0 %v1518
        %v1520 = vpop.f32.mrf.mxu0
        %v1521 = vadd.f32 %v1436, %v1520
        %v1522 = vpop.f32.mrf.mxu0
        %1523 = vdwg.mxu0
        %1524 = vmatprep.subr.mxu0 0.0
        %1525 = vmatpush1.xpose.msra.mxu0 0.0
        %1526 = vmatprep.subr.mxu0 0.0
        %1527 = vmatpush1.xpose.msra.mxu0 0.0
        %1528 = vmatprep.subr.mxu0 0.0
        %1529 = vmatpush1.xpose.msra.mxu0 0.0
        %1530 = vmatprep.subr.mxu0 0.0
        %1531 = vmatpush1.xpose.msra.mxu0 0.0
        %1532 = vmatprep.subr.mxu0 0.0
        %1533 = vmatpush1.xpose.msra.mxu0 0.0
        %1534 = vmatprep.subr.mxu0 0.0
        %1535 = vmatpush1.xpose.msra.mxu0 0.0
        %1536 = vmatprep.subr.mxu0 0.0
        %1537 = vmatpush1.xpose.msra.mxu0 0.0
        %1538 = vmatprep.subr.mxu0 0.0
        %1539 = vmatpush1.xpose.msra.mxu0 0.0
        %1540 = vmatprep.subr.mxu0 0.0
        %1541 = vmatpush1.xpose.msra.mxu0 0.0
        %1542 = vmatprep.subr.mxu0 0.0
        %1543 = vmatpush1.xpose.msra.mxu0 0.0
        %1544 = vmatprep.subr.mxu0 0.0
        %1545 = vmatpush1.xpose.msra.mxu0 0.0
        %1546 = vmatprep.subr.mxu0 0.0
        %1547 = vmatpush1.xpose.msra.mxu0 0.0
        %1548 = vmatprep.subr.mxu0 0.0
        %1549 = vmatpush1.xpose.msra.mxu0 0.0
        %1550 = vmatprep.subr.mxu0 0.0
        %1551 = vmatpush1.xpose.msra.mxu0 0.0
        %1552 = vmatprep.subr.mxu0 0.0
        %1553 = vmatpush1.xpose.msra.mxu0 0.0
        %1554 = vmatprep.subr.mxu0 0.0
        %v1555 = vand.u32 %v1515, 4294901760
        %1556 = vmatpush1.xpose.msra.mxu0 %v1555
        %1557 = vmatprep.subr.mxu0 0.0
        %1558 = vmatpush2.xpose.msra.mxu0 0.0
        %1559 = vmatprep.subr.mxu0 0.0
        %1560 = vmatpush2.xpose.msra.mxu0 0.0
        %1561 = vmatprep.subr.mxu0 0.0
        %1562 = vmatpush2.xpose.msra.mxu0 0.0
        %1563 = vmatprep.subr.mxu0 0.0
        %1564 = vmatpush2.xpose.msra.mxu0 0.0
        %1565 = vmatprep.subr.mxu0 0.0
        %1566 = vmatpush2.xpose.msra.mxu0 0.0
        %1567 = vmatprep.subr.mxu0 0.0
        %1568 = vmatpush2.xpose.msra.mxu0 0.0
        %1569 = vmatprep.subr.mxu0 0.0
        %1570 = vmatpush2.xpose.msra.mxu0 0.0
        %1571 = vmatprep.subr.mxu0 0.0
        %1572 = vmatpush2.xpose.msra.mxu0 0.0
        %1573 = vmatprep.subr.mxu0 0.0
        %1574 = vmatpush2.xpose.msra.mxu0 0.0
        %1575 = vmatprep.subr.mxu0 0.0
        %1576 = vmatpush2.xpose.msra.mxu0 0.0
        %1577 = vmatprep.subr.mxu0 0.0
        %1578 = vmatpush2.xpose.msra.mxu0 0.0
        %1579 = vmatprep.subr.mxu0 0.0
        %1580 = vmatpush2.xpose.msra.mxu0 0.0
        %1581 = vmatprep.subr.mxu0 0.0
        %1582 = vmatpush2.xpose.msra.mxu0 0.0
        %1583 = vmatprep.subr.mxu0 0.0
        %1584 = vmatpush2.xpose.msra.mxu0 0.0
        %1585 = vmatprep.subr.mxu0 0.0
        %1586 = vmatpush2.xpose.msra.mxu0 0.0
        %1587 = vmatprep.subr.mxu0 0.0
        %1588 = vmatpush2.xpose.msra.mxu0 0.0
        %1589 = vmatprep.mubr.f32.mxu0 0.0
        %v1590 = vand.u32 %v925, 4294901760
        %v1591 = vsub.f32 %v925, %v1590
        %v1592 = vand.u32 %v1591, 4294901760
        %v1593 = vsub.f32 %v1591, %v1592
        %v1594 = vand.u32 %v1593, 4294901760
        %1595 = vmatmul.mubr.f32.gmra.mxu0 %v1594
        %v1596 = vpop.f32.mrf.mxu0
        %v1597 = vadd.f32 0.0, %v1596
        %v1598 = vpop.f32.mrf.mxu0
        %1599 = vdwg.mxu0
        %1600 = vmatprep.subr.mxu0 0.0
        %1601 = vmatpush1.xpose.msra.mxu0 0.0
        %1602 = vmatprep.subr.mxu0 0.0
        %1603 = vmatpush1.xpose.msra.mxu0 0.0
        %1604 = vmatprep.subr.mxu0 0.0
        %1605 = vmatpush1.xpose.msra.mxu0 0.0
        %1606 = vmatprep.subr.mxu0 0.0
        %1607 = vmatpush1.xpose.msra.mxu0 0.0
        %1608 = vmatprep.subr.mxu0 0.0
        %1609 = vmatpush1.xpose.msra.mxu0 0.0
        %1610 = vmatprep.subr.mxu0 0.0
        %1611 = vmatpush1.xpose.msra.mxu0 0.0
        %1612 = vmatprep.subr.mxu0 0.0
        %1613 = vmatpush1.xpose.msra.mxu0 0.0
        %1614 = vmatprep.subr.mxu0 0.0
        %1615 = vmatpush1.xpose.msra.mxu0 0.0
        %1616 = vmatprep.subr.mxu0 0.0
        %1617 = vmatpush1.xpose.msra.mxu0 0.0
        %1618 = vmatprep.subr.mxu0 0.0
        %1619 = vmatpush1.xpose.msra.mxu0 0.0
        %1620 = vmatprep.subr.mxu0 0.0
        %1621 = vmatpush1.xpose.msra.mxu0 0.0
        %1622 = vmatprep.subr.mxu0 0.0
        %1623 = vmatpush1.xpose.msra.mxu0 0.0
        %1624 = vmatprep.subr.mxu0 0.0
        %1625 = vmatpush1.xpose.msra.mxu0 0.0
        %1626 = vmatprep.subr.mxu0 0.0
        %1627 = vmatpush1.xpose.msra.mxu0 0.0
        %1628 = vmatprep.subr.mxu0 0.0
        %1629 = vmatpush1.xpose.msra.mxu0 0.0
        %1630 = vmatprep.subr.mxu0 0.0
        %v1631 = vand.u32 %v1515, 4294901760
        %v1632 = vsub.f32 %v1515, %v1631
        %v1633 = vand.u32 %v1632, 4294901760
        %v1634 = vsub.f32 %v1632, %v1633
        %v1635 = vand.u32 %v1634, 4294901760
        %1636 = vmatpush1.xpose.msra.mxu0 %v1635
        %1637 = vmatprep.subr.mxu0 0.0
        %1638 = vmatpush2.xpose.msra.mxu0 0.0
        %1639 = vmatprep.subr.mxu0 0.0
        %1640 = vmatpush2.xpose.msra.mxu0 0.0
        %1641 = vmatprep.subr.mxu0 0.0
        %1642 = vmatpush2.xpose.msra.mxu0 0.0
        %1643 = vmatprep.subr.mxu0 0.0
        %1644 = vmatpush2.xpose.msra.mxu0 0.0
        %1645 = vmatprep.subr.mxu0 0.0
        %1646 = vmatpush2.xpose.msra.mxu0 0.0
        %1647 = vmatprep.subr.mxu0 0.0
        %1648 = vmatpush2.xpose.msra.mxu0 0.0
        %1649 = vmatprep.subr.mxu0 0.0
        %1650 = vmatpush2.xpose.msra.mxu0 0.0
        %1651 = vmatprep.subr.mxu0 0.0
        %1652 = vmatpush2.xpose.msra.mxu0 0.0
        %1653 = vmatprep.subr.mxu0 0.0
        %1654 = vmatpush2.xpose.msra.mxu0 0.0
        %1655 = vmatprep.subr.mxu0 0.0
        %1656 = vmatpush2.xpose.msra.mxu0 0.0
        %1657 = vmatprep.subr.mxu0 0.0
        %1658 = vmatpush2.xpose.msra.mxu0 0.0
        %1659 = vmatprep.subr.mxu0 0.0
        %1660 = vmatpush2.xpose.msra.mxu0 0.0
        %1661 = vmatprep.subr.mxu0 0.0
        %1662 = vmatpush2.xpose.msra.mxu0 0.0
        %1663 = vmatprep.subr.mxu0 0.0
        %1664 = vmatpush2.xpose.msra.mxu0 0.0
        %1665 = vmatprep.subr.mxu0 0.0
        %1666 = vmatpush2.xpose.msra.mxu0 0.0
        %1667 = vmatprep.subr.mxu0 0.0
        %1668 = vmatpush2.xpose.msra.mxu0 0.0
        %1669 = vmatprep.mubr.f32.mxu0 0.0
        %v1670 = vand.u32 %v925, 4294901760
        %1671 = vmatmul.mubr.f32.gmra.mxu0 %v1670
        %v1672 = vpop.f32.mrf.mxu0
        %v1673 = vadd.f32 %v1597, %v1672
        %v1674 = vpop.f32.mrf.mxu0
        %1675 = vdwg.mxu0
        %1676 = vmatprep.subr.mxu0 0.0
        %1677 = vmatpush1.xpose.msra.mxu0 0.0
        %1678 = vmatprep.subr.mxu0 0.0
        %1679 = vmatpush1.xpose.msra.mxu0 0.0
        %1680 = vmatprep.subr.mxu0 0.0
        %1681 = vmatpush1.xpose.msra.mxu0 0.0
        %1682 = vmatprep.subr.mxu0 0.0
        %1683 = vmatpush1.xpose.msra.mxu0 0.0
        %1684 = vmatprep.subr.mxu0 0.0
        %1685 = vmatpush1.xpose.msra.mxu0 0.0
        %1686 = vmatprep.subr.mxu0 0.0
        %1687 = vmatpush1.xpose.msra.mxu0 0.0
        %1688 = vmatprep.subr.mxu0 0.0
        %1689 = vmatpush1.xpose.msra.mxu0 0.0
        %1690 = vmatprep.subr.mxu0 0.0
        %1691 = vmatpush1.xpose.msra.mxu0 0.0
        %1692 = vmatprep.subr.mxu0 0.0
        %1693 = vmatpush1.xpose.msra.mxu0 0.0
        %1694 = vmatprep.subr.mxu0 0.0
        %1695 = vmatpush1.xpose.msra.mxu0 0.0
        %1696 = vmatprep.subr.mxu0 0.0
        %1697 = vmatpush1.xpose.msra.mxu0 0.0
        %1698 = vmatprep.subr.mxu0 0.0
        %1699 = vmatpush1.xpose.msra.mxu0 0.0
        %1700 = vmatprep.subr.mxu0 0.0
        %1701 = vmatpush1.xpose.msra.mxu0 0.0
        %1702 = vmatprep.subr.mxu0 0.0
        %1703 = vmatpush1.xpose.msra.mxu0 0.0
        %1704 = vmatprep.subr.mxu0 0.0
        %1705 = vmatpush1.xpose.msra.mxu0 0.0
        %1706 = vmatprep.subr.mxu0 0.0
        %v1707 = vand.u32 %v1515, 4294901760
        %v1708 = vsub.f32 %v1515, %v1707
        %1709 = vmatpush1.xpose.msra.mxu0 %v1708
        %1710 = vmatprep.subr.mxu0 0.0
        %1711 = vmatpush2.xpose.msra.mxu0 0.0
        %1712 = vmatprep.subr.mxu0 0.0
        %1713 = vmatpush2.xpose.msra.mxu0 0.0
        %1714 = vmatprep.subr.mxu0 0.0
        %1715 = vmatpush2.xpose.msra.mxu0 0.0
        %1716 = vmatprep.subr.mxu0 0.0
        %1717 = vmatpush2.xpose.msra.mxu0 0.0
        %1718 = vmatprep.subr.mxu0 0.0
        %1719 = vmatpush2.xpose.msra.mxu0 0.0
        %1720 = vmatprep.subr.mxu0 0.0
        %1721 = vmatpush2.xpose.msra.mxu0 0.0
        %1722 = vmatprep.subr.mxu0 0.0
        %1723 = vmatpush2.xpose.msra.mxu0 0.0
        %1724 = vmatprep.subr.mxu0 0.0
        %1725 = vmatpush2.xpose.msra.mxu0 0.0
        %1726 = vmatprep.subr.mxu0 0.0
        %1727 = vmatpush2.xpose.msra.mxu0 0.0
        %1728 = vmatprep.subr.mxu0 0.0
        %1729 = vmatpush2.xpose.msra.mxu0 0.0
        %1730 = vmatprep.subr.mxu0 0.0
        %1731 = vmatpush2.xpose.msra.mxu0 0.0
        %1732 = vmatprep.subr.mxu0 0.0
        %1733 = vmatpush2.xpose.msra.mxu0 0.0
        %1734 = vmatprep.subr.mxu0 0.0
        %1735 = vmatpush2.xpose.msra.mxu0 0.0
        %1736 = vmatprep.subr.mxu0 0.0
        %1737 = vmatpush2.xpose.msra.mxu0 0.0
        %1738 = vmatprep.subr.mxu0 0.0
        %1739 = vmatpush2.xpose.msra.mxu0 0.0
        %1740 = vmatprep.subr.mxu0 0.0
        %1741 = vmatpush2.xpose.msra.mxu0 0.0
        %1742 = vmatprep.mubr.f32.mxu0 0.0
        %v1743 = vand.u32 %v925, 4294901760
        %v1744 = vsub.f32 %v925, %v1743
        %1745 = vmatmul.mubr.f32.gmra.mxu0 %v1744
        %v1746 = vpop.f32.mrf.mxu0
        %v1747 = vadd.f32 %v1673, %v1746
        %v1748 = vpop.f32.mrf.mxu0
        %1749 = vdwg.mxu0
        %1750 = vmatprep.subr.mxu0 0.0
        %1751 = vmatpush1.xpose.msra.mxu0 0.0
        %1752 = vmatprep.subr.mxu0 0.0
        %1753 = vmatpush1.xpose.msra.mxu0 0.0
        %1754 = vmatprep.subr.mxu0 0.0
        %1755 = vmatpush1.xpose.msra.mxu0 0.0
        %1756 = vmatprep.subr.mxu0 0.0
        %1757 = vmatpush1.xpose.msra.mxu0 0.0
        %1758 = vmatprep.subr.mxu0 0.0
        %1759 = vmatpush1.xpose.msra.mxu0 0.0
        %1760 = vmatprep.subr.mxu0 0.0
        %1761 = vmatpush1.xpose.msra.mxu0 0.0
        %1762 = vmatprep.subr.mxu0 0.0
        %1763 = vmatpush1.xpose.msra.mxu0 0.0
        %1764 = vmatprep.subr.mxu0 0.0
        %1765 = vmatpush1.xpose.msra.mxu0 0.0
        %1766 = vmatprep.subr.mxu0 0.0
        %1767 = vmatpush1.xpose.msra.mxu0 0.0
        %1768 = vmatprep.subr.mxu0 0.0
        %1769 = vmatpush1.xpose.msra.mxu0 0.0
        %1770 = vmatprep.subr.mxu0 0.0
        %1771 = vmatpush1.xpose.msra.mxu0 0.0
        %1772 = vmatprep.subr.mxu0 0.0
        %1773 = vmatpush1.xpose.msra.mxu0 0.0
        %1774 = vmatprep.subr.mxu0 0.0
        %1775 = vmatpush1.xpose.msra.mxu0 0.0
        %1776 = vmatprep.subr.mxu0 0.0
        %1777 = vmatpush1.xpose.msra.mxu0 0.0
        %1778 = vmatprep.subr.mxu0 0.0
        %1779 = vmatpush1.xpose.msra.mxu0 0.0
        %1780 = vmatprep.subr.mxu0 0.0
        %v1781 = vand.u32 %v1515, 4294901760
        %1782 = vmatpush1.xpose.msra.mxu0 %v1781
        %1783 = vmatprep.subr.mxu0 0.0
        %1784 = vmatpush2.xpose.msra.mxu0 0.0
        %1785 = vmatprep.subr.mxu0 0.0
        %1786 = vmatpush2.xpose.msra.mxu0 0.0
        %1787 = vmatprep.subr.mxu0 0.0
        %1788 = vmatpush2.xpose.msra.mxu0 0.0
        %1789 = vmatprep.subr.mxu0 0.0
        %1790 = vmatpush2.xpose.msra.mxu0 0.0
        %1791 = vmatprep.subr.mxu0 0.0
        %1792 = vmatpush2.xpose.msra.mxu0 0.0
        %1793 = vmatprep.subr.mxu0 0.0
        %1794 = vmatpush2.xpose.msra.mxu0 0.0
        %1795 = vmatprep.subr.mxu0 0.0
        %1796 = vmatpush2.xpose.msra.mxu0 0.0
        %1797 = vmatprep.subr.mxu0 0.0
        %1798 = vmatpush2.xpose.msra.mxu0 0.0
        %1799 = vmatprep.subr.mxu0 0.0
        %1800 = vmatpush2.xpose.msra.mxu0 0.0
        %1801 = vmatprep.subr.mxu0 0.0
        %1802 = vmatpush2.xpose.msra.mxu0 0.0
        %1803 = vmatprep.subr.mxu0 0.0
        %1804 = vmatpush2.xpose.msra.mxu0 0.0
        %1805 = vmatprep.subr.mxu0 0.0
        %1806 = vmatpush2.xpose.msra.mxu0 0.0
        %1807 = vmatprep.subr.mxu0 0.0
        %1808 = vmatpush2.xpose.msra.mxu0 0.0
        %1809 = vmatprep.subr.mxu0 0.0
        %1810 = vmatpush2.xpose.msra.mxu0 0.0
        %1811 = vmatprep.subr.mxu0 0.0
        %1812 = vmatpush2.xpose.msra.mxu0 0.0
        %1813 = vmatprep.subr.mxu0 0.0
        %1814 = vmatpush2.xpose.msra.mxu0 0.0
        %1815 = vmatprep.mubr.f32.mxu0 0.0
        %v1816 = vand.u32 %v925, 4294901760
        %v1817 = vsub.f32 %v925, %v1816
        %v1818 = vand.u32 %v1817, 4294901760
        %1819 = vmatmul.mubr.f32.gmra.mxu0 %v1818
        %v1820 = vpop.f32.mrf.mxu0
        %v1821 = vadd.f32 %v1747, %v1820
        %v1822 = vpop.f32.mrf.mxu0
        %1823 = vdwg.mxu0
        %1824 = vmatprep.subr.mxu0 0.0
        %1825 = vmatpush1.xpose.msra.mxu0 0.0
        %1826 = vmatprep.subr.mxu0 0.0
        %1827 = vmatpush1.xpose.msra.mxu0 0.0
        %1828 = vmatprep.subr.mxu0 0.0
        %1829 = vmatpush1.xpose.msra.mxu0 0.0
        %1830 = vmatprep.subr.mxu0 0.0
        %1831 = vmatpush1.xpose.msra.mxu0 0.0
        %1832 = vmatprep.subr.mxu0 0.0
        %1833 = vmatpush1.xpose.msra.mxu0 0.0
        %1834 = vmatprep.subr.mxu0 0.0
        %1835 = vmatpush1.xpose.msra.mxu0 0.0
        %1836 = vmatprep.subr.mxu0 0.0
        %1837 = vmatpush1.xpose.msra.mxu0 0.0
        %1838 = vmatprep.subr.mxu0 0.0
        %1839 = vmatpush1.xpose.msra.mxu0 0.0
        %1840 = vmatprep.subr.mxu0 0.0
        %1841 = vmatpush1.xpose.msra.mxu0 0.0
        %1842 = vmatprep.subr.mxu0 0.0
        %1843 = vmatpush1.xpose.msra.mxu0 0.0
        %1844 = vmatprep.subr.mxu0 0.0
        %1845 = vmatpush1.xpose.msra.mxu0 0.0
        %1846 = vmatprep.subr.mxu0 0.0
        %1847 = vmatpush1.xpose.msra.mxu0 0.0
        %1848 = vmatprep.subr.mxu0 0.0
        %1849 = vmatpush1.xpose.msra.mxu0 0.0
        %1850 = vmatprep.subr.mxu0 0.0
        %1851 = vmatpush1.xpose.msra.mxu0 0.0
        %1852 = vmatprep.subr.mxu0 0.0
        %1853 = vmatpush1.xpose.msra.mxu0 0.0
        %1854 = vmatprep.subr.mxu0 0.0
        %v1855 = vand.u32 %v1515, 4294901760
        %v1856 = vsub.f32 %v1515, %v1855
        %v1857 = vand.u32 %v1856, 4294901760
        %1858 = vmatpush1.xpose.msra.mxu0 %v1857
        %1859 = vmatprep.subr.mxu0 0.0
        %1860 = vmatpush2.xpose.msra.mxu0 0.0
        %1861 = vmatprep.subr.mxu0 0.0
        %1862 = vmatpush2.xpose.msra.mxu0 0.0
        %1863 = vmatprep.subr.mxu0 0.0
        %1864 = vmatpush2.xpose.msra.mxu0 0.0
        %1865 = vmatprep.subr.mxu0 0.0
        %1866 = vmatpush2.xpose.msra.mxu0 0.0
        %1867 = vmatprep.subr.mxu0 0.0
        %1868 = vmatpush2.xpose.msra.mxu0 0.0
        %1869 = vmatprep.subr.mxu0 0.0
        %1870 = vmatpush2.xpose.msra.mxu0 0.0
        %1871 = vmatprep.subr.mxu0 0.0
        %1872 = vmatpush2.xpose.msra.mxu0 0.0
        %1873 = vmatprep.subr.mxu0 0.0
        %1874 = vmatpush2.xpose.msra.mxu0 0.0
        %1875 = vmatprep.subr.mxu0 0.0
        %1876 = vmatpush2.xpose.msra.mxu0 0.0
        %1877 = vmatprep.subr.mxu0 0.0
        %1878 = vmatpush2.xpose.msra.mxu0 0.0
        %1879 = vmatprep.subr.mxu0 0.0
        %1880 = vmatpush2.xpose.msra.mxu0 0.0
        %1881 = vmatprep.subr.mxu0 0.0
        %1882 = vmatpush2.xpose.msra.mxu0 0.0
        %1883 = vmatprep.subr.mxu0 0.0
        %1884 = vmatpush2.xpose.msra.mxu0 0.0
        %1885 = vmatprep.subr.mxu0 0.0
        %1886 = vmatpush2.xpose.msra.mxu0 0.0
        %1887 = vmatprep.subr.mxu0 0.0
        %1888 = vmatpush2.xpose.msra.mxu0 0.0
        %1889 = vmatprep.subr.mxu0 0.0
        %1890 = vmatpush2.xpose.msra.mxu0 0.0
        %1891 = vmatprep.mubr.f32.mxu0 0.0
        %v1892 = vand.u32 %v925, 4294901760
        %1893 = vmatmul.mubr.f32.gmra.mxu0 %v1892
        %v1894 = vpop.f32.mrf.mxu0
        %v1895 = vadd.f32 %v1821, %v1894
        %v1896 = vpop.f32.mrf.mxu0
        %1897 = vdwg.mxu0
        %1898 = vmatprep.subr.mxu0 0.0
        %1899 = vmatpush1.xpose.msra.mxu0 0.0
        %1900 = vmatprep.subr.mxu0 0.0
        %1901 = vmatpush1.xpose.msra.mxu0 0.0
        %1902 = vmatprep.subr.mxu0 0.0
        %1903 = vmatpush1.xpose.msra.mxu0 0.0
        %1904 = vmatprep.subr.mxu0 0.0
        %1905 = vmatpush1.xpose.msra.mxu0 0.0
        %1906 = vmatprep.subr.mxu0 0.0
        %1907 = vmatpush1.xpose.msra.mxu0 0.0
        %1908 = vmatprep.subr.mxu0 0.0
        %1909 = vmatpush1.xpose.msra.mxu0 0.0
        %1910 = vmatprep.subr.mxu0 0.0
        %1911 = vmatpush1.xpose.msra.mxu0 0.0
        %1912 = vmatprep.subr.mxu0 0.0
        %1913 = vmatpush1.xpose.msra.mxu0 0.0
        %1914 = vmatprep.subr.mxu0 0.0
        %1915 = vmatpush1.xpose.msra.mxu0 0.0
        %1916 = vmatprep.subr.mxu0 0.0
        %1917 = vmatpush1.xpose.msra.mxu0 0.0
        %1918 = vmatprep.subr.mxu0 0.0
        %1919 = vmatpush1.xpose.msra.mxu0 0.0
        %1920 = vmatprep.subr.mxu0 0.0
        %1921 = vmatpush1.xpose.msra.mxu0 0.0
        %1922 = vmatprep.subr.mxu0 0.0
        %1923 = vmatpush1.xpose.msra.mxu0 0.0
        %1924 = vmatprep.subr.mxu0 0.0
        %1925 = vmatpush1.xpose.msra.mxu0 0.0
        %1926 = vmatprep.subr.mxu0 0.0
        %1927 = vmatpush1.xpose.msra.mxu0 0.0
        %1928 = vmatprep.subr.mxu0 0.0
        %v1929 = vand.u32 %v1515, 4294901760
        %1930 = vmatpush1.xpose.msra.mxu0 %v1929
        %1931 = vmatprep.subr.mxu0 0.0
        %1932 = vmatpush2.xpose.msra.mxu0 0.0
        %1933 = vmatprep.subr.mxu0 0.0
        %1934 = vmatpush2.xpose.msra.mxu0 0.0
        %1935 = vmatprep.subr.mxu0 0.0
        %1936 = vmatpush2.xpose.msra.mxu0 0.0
        %1937 = vmatprep.subr.mxu0 0.0
        %1938 = vmatpush2.xpose.msra.mxu0 0.0
        %1939 = vmatprep.subr.mxu0 0.0
        %1940 = vmatpush2.xpose.msra.mxu0 0.0
        %1941 = vmatprep.subr.mxu0 0.0
        %1942 = vmatpush2.xpose.msra.mxu0 0.0
        %1943 = vmatprep.subr.mxu0 0.0
        %1944 = vmatpush2.xpose.msra.mxu0 0.0
        %1945 = vmatprep.subr.mxu0 0.0
        %1946 = vmatpush2.xpose.msra.mxu0 0.0
        %1947 = vmatprep.subr.mxu0 0.0
        %1948 = vmatpush2.xpose.msra.mxu0 0.0
        %1949 = vmatprep.subr.mxu0 0.0
        %1950 = vmatpush2.xpose.msra.mxu0 0.0
        %1951 = vmatprep.subr.mxu0 0.0
        %1952 = vmatpush2.xpose.msra.mxu0 0.0
        %1953 = vmatprep.subr.mxu0 0.0
        %1954 = vmatpush2.xpose.msra.mxu0 0.0
        %1955 = vmatprep.subr.mxu0 0.0
        %1956 = vmatpush2.xpose.msra.mxu0 0.0
        %1957 = vmatprep.subr.mxu0 0.0
        %1958 = vmatpush2.xpose.msra.mxu0 0.0
        %1959 = vmatprep.subr.mxu0 0.0
        %1960 = vmatpush2.xpose.msra.mxu0 0.0
        %1961 = vmatprep.subr.mxu0 0.0
        %1962 = vmatpush2.xpose.msra.mxu0 0.0
        %1963 = vmatprep.mubr.f32.mxu0 0.0
        %v1964 = vand.u32 %v925, 4294901760
        %1965 = vmatmul.mubr.f32.gmra.mxu0 %v1964
        %v1966 = vpop.f32.mrf.mxu0
        %v1967 = vadd.f32 %v1895, %v1966
        %v1968 = vpop.f32.mrf.mxu0
        %1969 = vdwg.mxu0
        %vm1970 = vcmask 64512
        %v1971 = vsel %vm1970, %v1967, -inf
        %1972 = vmax.xlane.f32.xlu0 %v1971
        %v1973 = vpop.xlane.xlu0 %1972
        %v1974 = vsub.f32 %v1967, %v1973
        %v1975 = vmul.f32 %v1974, 1.442695
        %v1976 = vpow.pop %v1975
        %v1977 = vsel %vm1970, %v1976, 0.0
        %1978 = vadd.xlane.f32.xlu0 %v1977
        %v1979 = vpop.xlane.xlu0 %1978
        %v1980 = vrcp.pop %v1979
        %v1981 = vmul.f32 %v1976, %v1980
        %1982 = vxpose.xlu0.b32.start [1/16] %v1981, 128
        %1983 = vxpose.xlu0.b32.cont [2/16] 0.0, 128
        %1984 = vxpose.xlu0.b32.cont [3/16] 0.0, 128
        %1985 = vxpose.xlu0.b32.cont [4/16] 0.0, 128
        %1986 = vxpose.xlu0.b32.cont [5/16] 0.0, 128
        %1987 = vxpose.xlu0.b32.cont [6/16] 0.0, 128
        %1988 = vxpose.xlu0.b32.cont [7/16] 0.0, 128
        %1989 = vxpose.xlu0.b32.cont [8/16] 0.0, 128
        %1990 = vxpose.xlu0.b32.cont [9/16] 0.0, 128
        %1991 = vxpose.xlu0.b32.cont [10/16] 0.0, 128
        %1992 = vxpose.xlu0.b32.cont [11/16] 0.0, 128
        %1993 = vxpose.xlu0.b32.cont [12/16] 0.0, 128
        %1994 = vxpose.xlu0.b32.cont [13/16] 0.0, 128
        %1995 = vxpose.xlu0.b32.cont [14/16] 0.0, 128
        %1996 = vxpose.xlu0.b32.cont [15/16] 0.0, 128
        %1997 = vxpose.xlu0.b32.end [16/16] 0.0, 128
        %v1998 = vpop.trf.xlu0
        %v1999 = vpop.trf.xlu0
        %v2000 = vpop.trf.xlu0
        %v2001 = vpop.trf.xlu0
        %v2002 = vpop.trf.xlu0
        %v2003 = vpop.trf.xlu0
        %v2004 = vpop.trf.xlu0
        %v2005 = vpop.trf.xlu0
        %v2006 = vpop.trf.xlu0
        %v2007 = vpop.trf.xlu0
        %v2008 = vpop.trf.xlu0
        %v2009 = vpop.trf.xlu0
        %v2010 = vpop.trf.xlu0
        %v2011 = vpop.trf.xlu0
        %v2012 = vpop.trf.xlu0
        %v2013 = vpop.trf.xlu0
        %v2015 = vsel %vm1970, %v1998, 0
        %2017 = vmatprep.subr.mxu0 0.0
        %2018 = vmatpush1.msra.mxu0 0.0
        %2019 = vmatprep.subr.mxu0 0.0
        %2020 = vmatpush1.msra.mxu0 0.0
        %2021 = vmatprep.subr.mxu0 0.0
        %2022 = vmatpush1.msra.mxu0 0.0
        %2023 = vmatprep.subr.mxu0 0.0
        %2024 = vmatpush1.msra.mxu0 0.0
        %2025 = vmatprep.subr.mxu0 0.0
        %2026 = vmatpush1.msra.mxu0 0.0
        %2027 = vmatprep.subr.mxu0 0.0
        %2028 = vmatpush1.msra.mxu0 0.0
        %2029 = vmatprep.subr.mxu0 0.0
        %2030 = vmatpush1.msra.mxu0 0.0
        %2031 = vmatprep.subr.mxu0 0.0
        %2032 = vmatpush1.msra.mxu0 0.0
        %2033 = vmatprep.subr.mxu0 0.0
        %2034 = vmatpush1.msra.mxu0 0.0
        %2035 = vmatprep.subr.mxu0 0.0
        %2036 = vmatpush1.msra.mxu0 0.0
        %2037 = vmatprep.subr.mxu0 0.0
        %2038 = vmatpush1.msra.mxu0 0.0
        %2039 = vmatprep.subr.mxu0 0.0
        %2040 = vmatpush1.msra.mxu0 0.0
        %2041 = vmatprep.subr.mxu0 0.0
        %2042 = vmatpush1.msra.mxu0 0.0
        %2043 = vmatprep.subr.mxu0 0.0
        %2044 = vmatpush1.msra.mxu0 0.0
        %2045 = vmatprep.subr.mxu0 0.0
        %2046 = vmatpush1.msra.mxu0 0.0
        %2047 = vmatprep.subr.mxu0 0.0
        %v2048 = vand.u32 %v1521, 4294901760
        %2049 = vmatpush1.msra.mxu0 %v2048
        %2050 = vmatprep.subr.mxu0 0.0
        %2051 = vmatpush2.msra.mxu0 0.0
        %2052 = vmatprep.subr.mxu0 0.0
        %2053 = vmatpush2.msra.mxu0 0.0
        %2054 = vmatprep.subr.mxu0 0.0
        %2055 = vmatpush2.msra.mxu0 0.0
        %2056 = vmatprep.subr.mxu0 0.0
        %2057 = vmatpush2.msra.mxu0 0.0
        %2058 = vmatprep.subr.mxu0 0.0
        %2059 = vmatpush2.msra.mxu0 0.0
        %2060 = vmatprep.subr.mxu0 0.0
        %2061 = vmatpush2.msra.mxu0 0.0
        %2062 = vmatprep.subr.mxu0 0.0
        %2063 = vmatpush2.msra.mxu0 0.0
        %2064 = vmatprep.subr.mxu0 0.0
        %2065 = vmatpush2.msra.mxu0 0.0
        %2066 = vmatprep.subr.mxu0 0.0
        %2067 = vmatpush2.msra.mxu0 0.0
        %2068 = vmatprep.subr.mxu0 0.0
        %2069 = vmatpush2.msra.mxu0 0.0
        %2070 = vmatprep.subr.mxu0 0.0
        %2071 = vmatpush2.msra.mxu0 0.0
        %2072 = vmatprep.subr.mxu0 0.0
        %2073 = vmatpush2.msra.mxu0 0.0
        %2074 = vmatprep.subr.mxu0 0.0
        %2075 = vmatpush2.msra.mxu0 0.0
        %2076 = vmatprep.subr.mxu0 0.0
        %2077 = vmatpush2.msra.mxu0 0.0
        %2078 = vmatprep.subr.mxu0 0.0
        %2079 = vmatpush2.msra.mxu0 0.0
        %2080 = vmatprep.subr.mxu0 0.0
        %2081 = vmatpush2.msra.mxu0 0.0
        %2082 = vmatprep.mubr.f32.mxu0 0.0
        %v2083 = vand.u32 %v2015, 4294901760
        %v2084 = vsub.f32 %v2015, %v2083
        %v2085 = vand.u32 %v2084, 4294901760
        %v2086 = vsub.f32 %v2084, %v2085
        %v2087 = vand.u32 %v2086, 4294901760
        %2088 = vmatmul.mubr.f32.gmra.mxu0 %v2087
        %v2089 = vpop.f32.mrf.mxu0
        %v2090 = vadd.f32 0.0, %v2089
        %v2091 = vpop.f32.mrf.mxu0
        %2092 = vdwg.mxu0
        %2093 = vmatprep.subr.mxu0 0.0
        %2094 = vmatpush1.msra.mxu0 0.0
        %2095 = vmatprep.subr.mxu0 0.0
        %2096 = vmatpush1.msra.mxu0 0.0
        %2097 = vmatprep.subr.mxu0 0.0
        %2098 = vmatpush1.msra.mxu0 0.0
        %2099 = vmatprep.subr.mxu0 0.0
        %2100 = vmatpush1.msra.mxu0 0.0
        %2101 = vmatprep.subr.mxu0 0.0
        %2102 = vmatpush1.msra.mxu0 0.0
        %2103 = vmatprep.subr.mxu0 0.0
        %2104 = vmatpush1.msra.mxu0 0.0
        %2105 = vmatprep.subr.mxu0 0.0
        %2106 = vmatpush1.msra.mxu0 0.0
        %2107 = vmatprep.subr.mxu0 0.0
        %2108 = vmatpush1.msra.mxu0 0.0
        %2109 = vmatprep.subr.mxu0 0.0
        %2110 = vmatpush1.msra.mxu0 0.0
        %2111 = vmatprep.subr.mxu0 0.0
        %2112 = vmatpush1.msra.mxu0 0.0
        %2113 = vmatprep.subr.mxu0 0.0
        %2114 = vmatpush1.msra.mxu0 0.0
        %2115 = vmatprep.subr.mxu0 0.0
        %2116 = vmatpush1.msra.mxu0 0.0
        %2117 = vmatprep.subr.mxu0 0.0
        %2118 = vmatpush1.msra.mxu0 0.0
        %2119 = vmatprep.subr.mxu0 0.0
        %2120 = vmatpush1.msra.mxu0 0.0
        %2121 = vmatprep.subr.mxu0 0.0
        %2122 = vmatpush1.msra.mxu0 0.0
        %2123 = vmatprep.subr.mxu0 0.0
        %v2124 = vand.u32 %v1521, 4294901760
        %v2125 = vsub.f32 %v1521, %v2124
        %v2126 = vand.u32 %v2125, 4294901760
        %v2127 = vsub.f32 %v2125, %v2126
        %v2128 = vand.u32 %v2127, 4294901760
        %2129 = vmatpush1.msra.mxu0 %v2128
        %2130 = vmatprep.subr.mxu0 0.0
        %2131 = vmatpush2.msra.mxu0 0.0
        %2132 = vmatprep.subr.mxu0 0.0
        %2133 = vmatpush2.msra.mxu0 0.0
        %2134 = vmatprep.subr.mxu0 0.0
        %2135 = vmatpush2.msra.mxu0 0.0
        %2136 = vmatprep.subr.mxu0 0.0
        %2137 = vmatpush2.msra.mxu0 0.0
        %2138 = vmatprep.subr.mxu0 0.0
        %2139 = vmatpush2.msra.mxu0 0.0
        %2140 = vmatprep.subr.mxu0 0.0
        %2141 = vmatpush2.msra.mxu0 0.0
        %2142 = vmatprep.subr.mxu0 0.0
        %2143 = vmatpush2.msra.mxu0 0.0
        %2144 = vmatprep.subr.mxu0 0.0
        %2145 = vmatpush2.msra.mxu0 0.0
        %2146 = vmatprep.subr.mxu0 0.0
        %2147 = vmatpush2.msra.mxu0 0.0
        %2148 = vmatprep.subr.mxu0 0.0
        %2149 = vmatpush2.msra.mxu0 0.0
        %2150 = vmatprep.subr.mxu0 0.0
        %2151 = vmatpush2.msra.mxu0 0.0
        %2152 = vmatprep.subr.mxu0 0.0
        %2153 = vmatpush2.msra.mxu0 0.0
        %2154 = vmatprep.subr.mxu0 0.0
        %2155 = vmatpush2.msra.mxu0 0.0
        %2156 = vmatprep.subr.mxu0 0.0
        %2157 = vmatpush2.msra.mxu0 0.0
        %2158 = vmatprep.subr.mxu0 0.0
        %2159 = vmatpush2.msra.mxu0 0.0
        %2160 = vmatprep.subr.mxu0 0.0
        %2161 = vmatpush2.msra.mxu0 0.0
        %2162 = vmatprep.mubr.f32.mxu0 0.0
        %v2163 = vand.u32 %v2015, 4294901760
        %2164 = vmatmul.mubr.f32.gmra.mxu0 %v2163
        %v2165 = vpop.f32.mrf.mxu0
        %v2166 = vadd.f32 %v2090, %v2165
        %v2167 = vpop.f32.mrf.mxu0
        %2168 = vdwg.mxu0
        %2169 = vmatprep.subr.mxu0 0.0
        %2170 = vmatpush1.msra.mxu0 0.0
        %2171 = vmatprep.subr.mxu0 0.0
        %2172 = vmatpush1.msra.mxu0 0.0
        %2173 = vmatprep.subr.mxu0 0.0
        %2174 = vmatpush1.msra.mxu0 0.0
        %2175 = vmatprep.subr.mxu0 0.0
        %2176 = vmatpush1.msra.mxu0 0.0
        %2177 = vmatprep.subr.mxu0 0.0
        %2178 = vmatpush1.msra.mxu0 0.0
        %2179 = vmatprep.subr.mxu0 0.0
        %2180 = vmatpush1.msra.mxu0 0.0
        %2181 = vmatprep.subr.mxu0 0.0
        %2182 = vmatpush1.msra.mxu0 0.0
        %2183 = vmatprep.subr.mxu0 0.0
        %2184 = vmatpush1.msra.mxu0 0.0
        %2185 = vmatprep.subr.mxu0 0.0
        %2186 = vmatpush1.msra.mxu0 0.0
        %2187 = vmatprep.subr.mxu0 0.0
        %2188 = vmatpush1.msra.mxu0 0.0
        %2189 = vmatprep.subr.mxu0 0.0
        %2190 = vmatpush1.msra.mxu0 0.0
        %2191 = vmatprep.subr.mxu0 0.0
        %2192 = vmatpush1.msra.mxu0 0.0
        %2193 = vmatprep.subr.mxu0 0.0
        %2194 = vmatpush1.msra.mxu0 0.0
        %2195 = vmatprep.subr.mxu0 0.0
        %2196 = vmatpush1.msra.mxu0 0.0
        %2197 = vmatprep.subr.mxu0 0.0
        %2198 = vmatpush1.msra.mxu0 0.0
        %2199 = vmatprep.subr.mxu0 0.0
        %v2200 = vand.u32 %v1521, 4294901760
        %v2201 = vsub.f32 %v1521, %v2200
        %2202 = vmatpush1.msra.mxu0 %v2201
        %2203 = vmatprep.subr.mxu0 0.0
        %2204 = vmatpush2.msra.mxu0 0.0
        %2205 = vmatprep.subr.mxu0 0.0
        %2206 = vmatpush2.msra.mxu0 0.0
        %2207 = vmatprep.subr.mxu0 0.0
        %2208 = vmatpush2.msra.mxu0 0.0
        %2209 = vmatprep.subr.mxu0 0.0
        %2210 = vmatpush2.msra.mxu0 0.0
        %2211 = vmatprep.subr.mxu0 0.0
        %2212 = vmatpush2.msra.mxu0 0.0
        %2213 = vmatprep.subr.mxu0 0.0
        %2214 = vmatpush2.msra.mxu0 0.0
        %2215 = vmatprep.subr.mxu0 0.0
        %2216 = vmatpush2.msra.mxu0 0.0
        %2217 = vmatprep.subr.mxu0 0.0
        %2218 = vmatpush2.msra.mxu0 0.0
        %2219 = vmatprep.subr.mxu0 0.0
        %2220 = vmatpush2.msra.mxu0 0.0
        %2221 = vmatprep.subr.mxu0 0.0
        %2222 = vmatpush2.msra.mxu0 0.0
        %2223 = vmatprep.subr.mxu0 0.0
        %2224 = vmatpush2.msra.mxu0 0.0
        %2225 = vmatprep.subr.mxu0 0.0
        %2226 = vmatpush2.msra.mxu0 0.0
        %2227 = vmatprep.subr.mxu0 0.0
        %2228 = vmatpush2.msra.mxu0 0.0
        %2229 = vmatprep.subr.mxu0 0.0
        %2230 = vmatpush2.msra.mxu0 0.0
        %2231 = vmatprep.subr.mxu0 0.0
        %2232 = vmatpush2.msra.mxu0 0.0
        %2233 = vmatprep.subr.mxu0 0.0
        %2234 = vmatpush2.msra.mxu0 0.0
        %2235 = vmatprep.mubr.f32.mxu0 0.0
        %v2236 = vand.u32 %v2015, 4294901760
        %v2237 = vsub.f32 %v2015, %v2236
        %2238 = vmatmul.mubr.f32.gmra.mxu0 %v2237
        %v2239 = vpop.f32.mrf.mxu0
        %v2240 = vadd.f32 %v2166, %v2239
        %v2241 = vpop.f32.mrf.mxu0
        %2242 = vdwg.mxu0
        %2243 = vmatprep.subr.mxu0 0.0
        %2244 = vmatpush1.msra.mxu0 0.0
        %2245 = vmatprep.subr.mxu0 0.0
        %2246 = vmatpush1.msra.mxu0 0.0
        %2247 = vmatprep.subr.mxu0 0.0
        %2248 = vmatpush1.msra.mxu0 0.0
        %2249 = vmatprep.subr.mxu0 0.0
        %2250 = vmatpush1.msra.mxu0 0.0
        %2251 = vmatprep.subr.mxu0 0.0
        %2252 = vmatpush1.msra.mxu0 0.0
        %2253 = vmatprep.subr.mxu0 0.0
        %2254 = vmatpush1.msra.mxu0 0.0
        %2255 = vmatprep.subr.mxu0 0.0
        %2256 = vmatpush1.msra.mxu0 0.0
        %2257 = vmatprep.subr.mxu0 0.0
        %2258 = vmatpush1.msra.mxu0 0.0
        %2259 = vmatprep.subr.mxu0 0.0
        %2260 = vmatpush1.msra.mxu0 0.0
        %2261 = vmatprep.subr.mxu0 0.0
        %2262 = vmatpush1.msra.mxu0 0.0
        %2263 = vmatprep.subr.mxu0 0.0
        %2264 = vmatpush1.msra.mxu0 0.0
        %2265 = vmatprep.subr.mxu0 0.0
        %2266 = vmatpush1.msra.mxu0 0.0
        %2267 = vmatprep.subr.mxu0 0.0
        %2268 = vmatpush1.msra.mxu0 0.0
        %2269 = vmatprep.subr.mxu0 0.0
        %2270 = vmatpush1.msra.mxu0 0.0
        %2271 = vmatprep.subr.mxu0 0.0
        %2272 = vmatpush1.msra.mxu0 0.0
        %2273 = vmatprep.subr.mxu0 0.0
        %v2274 = vand.u32 %v1521, 4294901760
        %2275 = vmatpush1.msra.mxu0 %v2274
        %2276 = vmatprep.subr.mxu0 0.0
        %2277 = vmatpush2.msra.mxu0 0.0
        %2278 = vmatprep.subr.mxu0 0.0
        %2279 = vmatpush2.msra.mxu0 0.0
        %2280 = vmatprep.subr.mxu0 0.0
        %2281 = vmatpush2.msra.mxu0 0.0
        %2282 = vmatprep.subr.mxu0 0.0
        %2283 = vmatpush2.msra.mxu0 0.0
        %2284 = vmatprep.subr.mxu0 0.0
        %2285 = vmatpush2.msra.mxu0 0.0
        %2286 = vmatprep.subr.mxu0 0.0
        %2287 = vmatpush2.msra.mxu0 0.0
        %2288 = vmatprep.subr.mxu0 0.0
        %2289 = vmatpush2.msra.mxu0 0.0
        %2290 = vmatprep.subr.mxu0 0.0
        %2291 = vmatpush2.msra.mxu0 0.0
        %2292 = vmatprep.subr.mxu0 0.0
        %2293 = vmatpush2.msra.mxu0 0.0
        %2294 = vmatprep.subr.mxu0 0.0
        %2295 = vmatpush2.msra.mxu0 0.0
        %2296 = vmatprep.subr.mxu0 0.0
        %2297 = vmatpush2.msra.mxu0 0.0
        %2298 = vmatprep.subr.mxu0 0.0
        %2299 = vmatpush2.msra.mxu0 0.0
        %2300 = vmatprep.subr.mxu0 0.0
        %2301 = vmatpush2.msra.mxu0 0.0
        %2302 = vmatprep.subr.mxu0 0.0
        %2303 = vmatpush2.msra.mxu0 0.0
        %2304 = vmatprep.subr.mxu0 0.0
        %2305 = vmatpush2.msra.mxu0 0.0
        %2306 = vmatprep.subr.mxu0 0.0
        %2307 = vmatpush2.msra.mxu0 0.0
        %2308 = vmatprep.mubr.f32.mxu0 0.0
        %v2309 = vand.u32 %v2015, 4294901760
        %v2310 = vsub.f32 %v2015, %v2309
        %v2311 = vand.u32 %v2310, 4294901760
        %2312 = vmatmul.mubr.f32.gmra.mxu0 %v2311
        %v2313 = vpop.f32.mrf.mxu0
        %v2314 = vadd.f32 %v2240, %v2313
        %v2315 = vpop.f32.mrf.mxu0
        %2316 = vdwg.mxu0
        %2317 = vmatprep.subr.mxu0 0.0
        %2318 = vmatpush1.msra.mxu0 0.0
        %2319 = vmatprep.subr.mxu0 0.0
        %2320 = vmatpush1.msra.mxu0 0.0
        %2321 = vmatprep.subr.mxu0 0.0
        %2322 = vmatpush1.msra.mxu0 0.0
        %2323 = vmatprep.subr.mxu0 0.0
        %2324 = vmatpush1.msra.mxu0 0.0
        %2325 = vmatprep.subr.mxu0 0.0
        %2326 = vmatpush1.msra.mxu0 0.0
        %2327 = vmatprep.subr.mxu0 0.0
        %2328 = vmatpush1.msra.mxu0 0.0
        %2329 = vmatprep.subr.mxu0 0.0
        %2330 = vmatpush1.msra.mxu0 0.0
        %2331 = vmatprep.subr.mxu0 0.0
        %2332 = vmatpush1.msra.mxu0 0.0
        %2333 = vmatprep.subr.mxu0 0.0
        %2334 = vmatpush1.msra.mxu0 0.0
        %2335 = vmatprep.subr.mxu0 0.0
        %2336 = vmatpush1.msra.mxu0 0.0
        %2337 = vmatprep.subr.mxu0 0.0
        %2338 = vmatpush1.msra.mxu0 0.0
        %2339 = vmatprep.subr.mxu0 0.0
        %2340 = vmatpush1.msra.mxu0 0.0
        %2341 = vmatprep.subr.mxu0 0.0
        %2342 = vmatpush1.msra.mxu0 0.0
        %2343 = vmatprep.subr.mxu0 0.0
        %2344 = vmatpush1.msra.mxu0 0.0
        %2345 = vmatprep.subr.mxu0 0.0
        %2346 = vmatpush1.msra.mxu0 0.0
        %2347 = vmatprep.subr.mxu0 0.0
        %v2348 = vand.u32 %v1521, 4294901760
        %v2349 = vsub.f32 %v1521, %v2348
        %v2350 = vand.u32 %v2349, 4294901760
        %2351 = vmatpush1.msra.mxu0 %v2350
        %2352 = vmatprep.subr.mxu0 0.0
        %2353 = vmatpush2.msra.mxu0 0.0
        %2354 = vmatprep.subr.mxu0 0.0
        %2355 = vmatpush2.msra.mxu0 0.0
        %2356 = vmatprep.subr.mxu0 0.0
        %2357 = vmatpush2.msra.mxu0 0.0
        %2358 = vmatprep.subr.mxu0 0.0
        %2359 = vmatpush2.msra.mxu0 0.0
        %2360 = vmatprep.subr.mxu0 0.0
        %2361 = vmatpush2.msra.mxu0 0.0
        %2362 = vmatprep.subr.mxu0 0.0
        %2363 = vmatpush2.msra.mxu0 0.0
        %2364 = vmatprep.subr.mxu0 0.0
        %2365 = vmatpush2.msra.mxu0 0.0
        %2366 = vmatprep.subr.mxu0 0.0
        %2367 = vmatpush2.msra.mxu0 0.0
        %2368 = vmatprep.subr.mxu0 0.0
        %2369 = vmatpush2.msra.mxu0 0.0
        %2370 = vmatprep.subr.mxu0 0.0
        %2371 = vmatpush2.msra.mxu0 0.0
        %2372 = vmatprep.subr.mxu0 0.0
        %2373 = vmatpush2.msra.mxu0 0.0
        %2374 = vmatprep.subr.mxu0 0.0
        %2375 = vmatpush2.msra.mxu0 0.0
        %2376 = vmatprep.subr.mxu0 0.0
        %2377 = vmatpush2.msra.mxu0 0.0
        %2378 = vmatprep.subr.mxu0 0.0
        %2379 = vmatpush2.msra.mxu0 0.0
        %2380 = vmatprep.subr.mxu0 0.0
        %2381 = vmatpush2.msra.mxu0 0.0
        %2382 = vmatprep.subr.mxu0 0.0
        %2383 = vmatpush2.msra.mxu0 0.0
        %2384 = vmatprep.mubr.f32.mxu0 0.0
        %v2385 = vand.u32 %v2015, 4294901760
        %2386 = vmatmul.mubr.f32.gmra.mxu0 %v2385
        %v2387 = vpop.f32.mrf.mxu0
        %v2388 = vadd.f32 %v2314, %v2387
        %v2389 = vpop.f32.mrf.mxu0
        %2390 = vdwg.mxu0
        %2391 = vmatprep.subr.mxu0 0.0
        %2392 = vmatpush1.msra.mxu0 0.0
        %2393 = vmatprep.subr.mxu0 0.0
        %2394 = vmatpush1.msra.mxu0 0.0
        %2395 = vmatprep.subr.mxu0 0.0
        %2396 = vmatpush1.msra.mxu0 0.0
        %2397 = vmatprep.subr.mxu0 0.0
        %2398 = vmatpush1.msra.mxu0 0.0
        %2399 = vmatprep.subr.mxu0 0.0
        %2400 = vmatpush1.msra.mxu0 0.0
        %2401 = vmatprep.subr.mxu0 0.0
        %2402 = vmatpush1.msra.mxu0 0.0
        %2403 = vmatprep.subr.mxu0 0.0
        %2404 = vmatpush1.msra.mxu0 0.0
        %2405 = vmatprep.subr.mxu0 0.0
        %2406 = vmatpush1.msra.mxu0 0.0
        %2407 = vmatprep.subr.mxu0 0.0
        %2408 = vmatpush1.msra.mxu0 0.0
        %2409 = vmatprep.subr.mxu0 0.0
        %2410 = vmatpush1.msra.mxu0 0.0
        %2411 = vmatprep.subr.mxu0 0.0
        %2412 = vmatpush1.msra.mxu0 0.0
        %2413 = vmatprep.subr.mxu0 0.0
        %2414 = vmatpush1.msra.mxu0 0.0
        %2415 = vmatprep.subr.mxu0 0.0
        %2416 = vmatpush1.msra.mxu0 0.0
        %2417 = vmatprep.subr.mxu0 0.0
        %2418 = vmatpush1.msra.mxu0 0.0
        %2419 = vmatprep.subr.mxu0 0.0
        %2420 = vmatpush1.msra.mxu0 0.0
        %2421 = vmatprep.subr.mxu0 0.0
        %v2422 = vand.u32 %v1521, 4294901760
        %2423 = vmatpush1.msra.mxu0 %v2422
        %2424 = vmatprep.subr.mxu0 0.0
        %2425 = vmatpush2.msra.mxu0 0.0
        %2426 = vmatprep.subr.mxu0 0.0
        %2427 = vmatpush2.msra.mxu0 0.0
        %2428 = vmatprep.subr.mxu0 0.0
        %2429 = vmatpush2.msra.mxu0 0.0
        %2430 = vmatprep.subr.mxu0 0.0
        %2431 = vmatpush2.msra.mxu0 0.0
        %2432 = vmatprep.subr.mxu0 0.0
        %2433 = vmatpush2.msra.mxu0 0.0
        %2434 = vmatprep.subr.mxu0 0.0
        %2435 = vmatpush2.msra.mxu0 0.0
        %2436 = vmatprep.subr.mxu0 0.0
        %2437 = vmatpush2.msra.mxu0 0.0
        %2438 = vmatprep.subr.mxu0 0.0
        %2439 = vmatpush2.msra.mxu0 0.0
        %2440 = vmatprep.subr.mxu0 0.0
        %2441 = vmatpush2.msra.mxu0 0.0
        %2442 = vmatprep.subr.mxu0 0.0
        %2443 = vmatpush2.msra.mxu0 0.0
        %2444 = vmatprep.subr.mxu0 0.0
        %2445 = vmatpush2.msra.mxu0 0.0
        %2446 = vmatprep.subr.mxu0 0.0
        %2447 = vmatpush2.msra.mxu0 0.0
        %2448 = vmatprep.subr.mxu0 0.0
        %2449 = vmatpush2.msra.mxu0 0.0
        %2450 = vmatprep.subr.mxu0 0.0
        %2451 = vmatpush2.msra.mxu0 0.0
        %2452 = vmatprep.subr.mxu0 0.0
        %2453 = vmatpush2.msra.mxu0 0.0
        %2454 = vmatprep.subr.mxu0 0.0
        %2455 = vmatpush2.msra.mxu0 0.0
        %2456 = vmatprep.mubr.f32.mxu0 0.0
        %v2457 = vand.u32 %v2015, 4294901760
        %2458 = vmatmul.mubr.f32.gmra.mxu0 %v2457
        %v2459 = vpop.f32.mrf.mxu0
        %v2460 = vadd.f32 %v2388, %v2459
        %v2461 = vpop.f32.mrf.mxu0
        %2462 = vdwg.mxu0
        %v2464 = vsel %vm1970, %v350, 0
        %v2467 = vsel %vm1970, %v351, 0
        %v2470 = vsel %vm1970, %v352, 0
        %v2473 = vsel %vm1970, %v353, 0
        %v2476 = vsel %vm1970, %v354, 0
        %v2479 = vsel %vm1970, %v355, 0
        %v2482 = vsel %vm1970, %v356, 0
        %v2485 = vsel %vm1970, %v357, 0
        %2487 = vmatprep.subr.mxu0 0.0
        %2488 = vmatpush1.msra.mxu0 0.0
        %2489 = vmatprep.subr.mxu0 0.0
        %2490 = vmatpush1.msra.mxu0 0.0
        %2491 = vmatprep.subr.mxu0 0.0
        %2492 = vmatpush1.msra.mxu0 0.0
        %2493 = vmatprep.subr.mxu0 0.0
        %2494 = vmatpush1.msra.mxu0 0.0
        %2495 = vmatprep.subr.mxu0 0.0
        %2496 = vmatpush1.msra.mxu0 0.0
        %2497 = vmatprep.subr.mxu0 0.0
        %2498 = vmatpush1.msra.mxu0 0.0
        %2499 = vmatprep.subr.mxu0 0.0
        %2500 = vmatpush1.msra.mxu0 0.0
        %2501 = vmatprep.subr.mxu0 0.0
        %2502 = vmatpush1.msra.mxu0 0.0
        %2503 = vmatprep.subr.mxu0 0.0
        %2504 = vmatpush1.msra.mxu0 0.0
        %2505 = vmatprep.subr.mxu0 0.0
        %2506 = vmatpush1.msra.mxu0 0.0
        %2507 = vmatprep.subr.mxu0 0.0
        %2508 = vmatpush1.msra.mxu0 0.0
        %2509 = vmatprep.subr.mxu0 0.0
        %2510 = vmatpush1.msra.mxu0 0.0
        %2511 = vmatprep.subr.mxu0 0.0
        %2512 = vmatpush1.msra.mxu0 0.0
        %2513 = vmatprep.subr.mxu0 0.0
        %2514 = vmatpush1.msra.mxu0 0.0
        %2515 = vmatprep.subr.mxu0 0.0
        %2516 = vmatpush1.msra.mxu0 0.0
        %2517 = vmatprep.subr.mxu0 0.0
        %v2518 = vand.u32 %v2460, 4294901760
        %2519 = vmatpush1.msra.mxu0 %v2518
        %2520 = vmatprep.subr.mxu0 0.0
        %2521 = vmatpush2.msra.mxu0 0.0
        %2522 = vmatprep.subr.mxu0 0.0
        %2523 = vmatpush2.msra.mxu0 0.0
        %2524 = vmatprep.subr.mxu0 0.0
        %2525 = vmatpush2.msra.mxu0 0.0
        %2526 = vmatprep.subr.mxu0 0.0
        %2527 = vmatpush2.msra.mxu0 0.0
        %2528 = vmatprep.subr.mxu0 0.0
        %2529 = vmatpush2.msra.mxu0 0.0
        %2530 = vmatprep.subr.mxu0 0.0
        %2531 = vmatpush2.msra.mxu0 0.0
        %2532 = vmatprep.subr.mxu0 0.0
        %2533 = vmatpush2.msra.mxu0 0.0
        %2534 = vmatprep.subr.mxu0 0.0
        %2535 = vmatpush2.msra.mxu0 0.0
        %2536 = vmatprep.subr.mxu0 0.0
        %2537 = vmatpush2.msra.mxu0 0.0
        %2538 = vmatprep.subr.mxu0 0.0
        %2539 = vmatpush2.msra.mxu0 0.0
        %2540 = vmatprep.subr.mxu0 0.0
        %2541 = vmatpush2.msra.mxu0 0.0
        %2542 = vmatprep.subr.mxu0 0.0
        %2543 = vmatpush2.msra.mxu0 0.0
        %2544 = vmatprep.subr.mxu0 0.0
        %2545 = vmatpush2.msra.mxu0 0.0
        %2546 = vmatprep.subr.mxu0 0.0
        %2547 = vmatpush2.msra.mxu0 0.0
        %2548 = vmatprep.subr.mxu0 0.0
        %2549 = vmatpush2.msra.mxu0 0.0
        %2550 = vmatprep.subr.mxu0 0.0
        %2551 = vmatpush2.msra.mxu0 0.0
        %2552 = vmatprep.mubr.f32.mxu0 0.0
        %v2553 = vand.u32 %v2464, 4294901760
        %v2554 = vsub.f32 %v2464, %v2553
        %v2555 = vand.u32 %v2554, 4294901760
        %v2556 = vsub.f32 %v2554, %v2555
        %v2557 = vand.u32 %v2556, 4294901760
        %2558 = vmatmul.mubr.f32.gmra.mxu0 %v2557
        %v2559 = vpop.f32.mrf.mxu0
        %v2560 = vadd.f32 0.0, %v2559
        %v2561 = vpop.f32.mrf.mxu0
        %2562 = vmatprep.mubr.f32.mxu0 0.0
        %v2563 = vand.u32 %v2467, 4294901760
        %v2564 = vsub.f32 %v2467, %v2563
        %v2565 = vand.u32 %v2564, 4294901760
        %v2566 = vsub.f32 %v2564, %v2565
        %v2567 = vand.u32 %v2566, 4294901760
        %2568 = vmatmul.mubr.f32.gmra.mxu0 %v2567
        %v2569 = vpop.f32.mrf.mxu0
        %v2570 = vadd.f32 0.0, %v2569
        %v2571 = vpop.f32.mrf.mxu0
        %2572 = vmatprep.mubr.f32.mxu0 0.0
        %v2573 = vand.u32 %v2470, 4294901760
        %v2574 = vsub.f32 %v2470, %v2573
        %v2575 = vand.u32 %v2574, 4294901760
        %v2576 = vsub.f32 %v2574, %v2575
        %v2577 = vand.u32 %v2576, 4294901760
        %2578 = vmatmul.mubr.f32.gmra.mxu0 %v2577
        %v2579 = vpop.f32.mrf.mxu0
        %v2580 = vadd.f32 0.0, %v2579
        %v2581 = vpop.f32.mrf.mxu0
        %2582 = vmatprep.mubr.f32.mxu0 0.0
        %v2583 = vand.u32 %v2473, 4294901760
        %v2584 = vsub.f32 %v2473, %v2583
        %v2585 = vand.u32 %v2584, 4294901760
        %v2586 = vsub.f32 %v2584, %v2585
        %v2587 = vand.u32 %v2586, 4294901760
        %2588 = vmatmul.mubr.f32.gmra.mxu0 %v2587
        %v2589 = vpop.f32.mrf.mxu0
        %v2590 = vadd.f32 0.0, %v2589
        %v2591 = vpop.f32.mrf.mxu0
        %2592 = vmatprep.mubr.f32.mxu0 0.0
        %v2593 = vand.u32 %v2476, 4294901760
        %v2594 = vsub.f32 %v2476, %v2593
        %v2595 = vand.u32 %v2594, 4294901760
        %v2596 = vsub.f32 %v2594, %v2595
        %v2597 = vand.u32 %v2596, 4294901760
        %2598 = vmatmul.mubr.f32.gmra.mxu0 %v2597
        %v2599 = vpop.f32.mrf.mxu0
        %v2600 = vadd.f32 0.0, %v2599
        %v2601 = vpop.f32.mrf.mxu0
        %2602 = vmatprep.mubr.f32.mxu0 0.0
        %v2603 = vand.u32 %v2479, 4294901760
        %v2604 = vsub.f32 %v2479, %v2603
        %v2605 = vand.u32 %v2604, 4294901760
        %v2606 = vsub.f32 %v2604, %v2605
        %v2607 = vand.u32 %v2606, 4294901760
        %2608 = vmatmul.mubr.f32.gmra.mxu0 %v2607
        %v2609 = vpop.f32.mrf.mxu0
        %v2610 = vadd.f32 0.0, %v2609
        %v2611 = vpop.f32.mrf.mxu0
        %2612 = vmatprep.mubr.f32.mxu0 0.0
        %v2613 = vand.u32 %v2482, 4294901760
        %v2614 = vsub.f32 %v2482, %v2613
        %v2615 = vand.u32 %v2614, 4294901760
        %v2616 = vsub.f32 %v2614, %v2615
        %v2617 = vand.u32 %v2616, 4294901760
        %2618 = vmatmul.mubr.f32.gmra.mxu0 %v2617
        %v2619 = vpop.f32.mrf.mxu0
        %v2620 = vadd.f32 0.0, %v2619
        %v2621 = vpop.f32.mrf.mxu0
        %2622 = vmatprep.mubr.f32.mxu0 0.0
        %v2623 = vand.u32 %v2485, 4294901760
        %v2624 = vsub.f32 %v2485, %v2623
        %v2625 = vand.u32 %v2624, 4294901760
        %v2626 = vsub.f32 %v2624, %v2625
        %v2627 = vand.u32 %v2626, 4294901760
        %2628 = vmatmul.mubr.f32.gmra.mxu0 %v2627
        %v2629 = vpop.f32.mrf.mxu0
        %v2630 = vadd.f32 0.0, %v2629
        %v2631 = vpop.f32.mrf.mxu0
        %2632 = vdwg.mxu0
        %2633 = vmatprep.subr.mxu0 0.0
        %2634 = vmatpush1.msra.mxu0 0.0
        %2635 = vmatprep.subr.mxu0 0.0
        %2636 = vmatpush1.msra.mxu0 0.0
        %2637 = vmatprep.subr.mxu0 0.0
        %2638 = vmatpush1.msra.mxu0 0.0
        %2639 = vmatprep.subr.mxu0 0.0
        %2640 = vmatpush1.msra.mxu0 0.0
        %2641 = vmatprep.subr.mxu0 0.0
        %2642 = vmatpush1.msra.mxu0 0.0
        %2643 = vmatprep.subr.mxu0 0.0
        %2644 = vmatpush1.msra.mxu0 0.0
        %2645 = vmatprep.subr.mxu0 0.0
        %2646 = vmatpush1.msra.mxu0 0.0
        %2647 = vmatprep.subr.mxu0 0.0
        %2648 = vmatpush1.msra.mxu0 0.0
        %2649 = vmatprep.subr.mxu0 0.0
        %2650 = vmatpush1.msra.mxu0 0.0
        %2651 = vmatprep.subr.mxu0 0.0
        %2652 = vmatpush1.msra.mxu0 0.0
        %2653 = vmatprep.subr.mxu0 0.0
        %2654 = vmatpush1.msra.mxu0 0.0
        %2655 = vmatprep.subr.mxu0 0.0
        %2656 = vmatpush1.msra.mxu0 0.0
        %2657 = vmatprep.subr.mxu0 0.0
        %2658 = vmatpush1.msra.mxu0 0.0
        %2659 = vmatprep.subr.mxu0 0.0
        %2660 = vmatpush1.msra.mxu0 0.0
        %2661 = vmatprep.subr.mxu0 0.0
        %2662 = vmatpush1.msra.mxu0 0.0
        %2663 = vmatprep.subr.mxu0 0.0
        %v2664 = vand.u32 %v2460, 4294901760
        %v2665 = vsub.f32 %v2460, %v2664
        %v2666 = vand.u32 %v2665, 4294901760
        %v2667 = vsub.f32 %v2665, %v2666
        %v2668 = vand.u32 %v2667, 4294901760
        %2669 = vmatpush1.msra.mxu0 %v2668
        %2670 = vmatprep.subr.mxu0 0.0
        %2671 = vmatpush2.msra.mxu0 0.0
        %2672 = vmatprep.subr.mxu0 0.0
        %2673 = vmatpush2.msra.mxu0 0.0
        %2674 = vmatprep.subr.mxu0 0.0
        %2675 = vmatpush2.msra.mxu0 0.0
        %2676 = vmatprep.subr.mxu0 0.0
        %2677 = vmatpush2.msra.mxu0 0.0
        %2678 = vmatprep.subr.mxu0 0.0
        %2679 = vmatpush2.msra.mxu0 0.0
        %2680 = vmatprep.subr.mxu0 0.0
        %2681 = vmatpush2.msra.mxu0 0.0
        %2682 = vmatprep.subr.mxu0 0.0
        %2683 = vmatpush2.msra.mxu0 0.0
        %2684 = vmatprep.subr.mxu0 0.0
        %2685 = vmatpush2.msra.mxu0 0.0
        %2686 = vmatprep.subr.mxu0 0.0
        %2687 = vmatpush2.msra.mxu0 0.0
        %2688 = vmatprep.subr.mxu0 0.0
        %2689 = vmatpush2.msra.mxu0 0.0
        %2690 = vmatprep.subr.mxu0 0.0
        %2691 = vmatpush2.msra.mxu0 0.0
        %2692 = vmatprep.subr.mxu0 0.0
        %2693 = vmatpush2.msra.mxu0 0.0
        %2694 = vmatprep.subr.mxu0 0.0
        %2695 = vmatpush2.msra.mxu0 0.0
        %2696 = vmatprep.subr.mxu0 0.0
        %2697 = vmatpush2.msra.mxu0 0.0
        %2698 = vmatprep.subr.mxu0 0.0
        %2699 = vmatpush2.msra.mxu0 0.0
        %2700 = vmatprep.subr.mxu0 0.0
        %2701 = vmatpush2.msra.mxu0 0.0
        %2702 = vmatprep.mubr.f32.mxu0 0.0
        %v2703 = vand.u32 %v2464, 4294901760
        %2704 = vmatmul.mubr.f32.gmra.mxu0 %v2703
        %v2705 = vpop.f32.mrf.mxu0
        %v2706 = vadd.f32 %v2560, %v2705
        %v2707 = vpop.f32.mrf.mxu0
        %2708 = vmatprep.mubr.f32.mxu0 0.0
        %v2709 = vand.u32 %v2467, 4294901760
        %2710 = vmatmul.mubr.f32.gmra.mxu0 %v2709
        %v2711 = vpop.f32.mrf.mxu0
        %v2712 = vadd.f32 %v2570, %v2711
        %v2713 = vpop.f32.mrf.mxu0
        %2714 = vmatprep.mubr.f32.mxu0 0.0
        %v2715 = vand.u32 %v2470, 4294901760
        %2716 = vmatmul.mubr.f32.gmra.mxu0 %v2715
        %v2717 = vpop.f32.mrf.mxu0
        %v2718 = vadd.f32 %v2580, %v2717
        %v2719 = vpop.f32.mrf.mxu0
        %2720 = vmatprep.mubr.f32.mxu0 0.0
        %v2721 = vand.u32 %v2473, 4294901760
        %2722 = vmatmul.mubr.f32.gmra.mxu0 %v2721
        %v2723 = vpop.f32.mrf.mxu0
        %v2724 = vadd.f32 %v2590, %v2723
        %v2725 = vpop.f32.mrf.mxu0
        %2726 = vmatprep.mubr.f32.mxu0 0.0
        %v2727 = vand.u32 %v2476, 4294901760
        %2728 = vmatmul.mubr.f32.gmra.mxu0 %v2727
        %v2729 = vpop.f32.mrf.mxu0
        %v2730 = vadd.f32 %v2600, %v2729
        %v2731 = vpop.f32.mrf.mxu0
        %2732 = vmatprep.mubr.f32.mxu0 0.0
        %v2733 = vand.u32 %v2479, 4294901760
        %2734 = vmatmul.mubr.f32.gmra.mxu0 %v2733
        %v2735 = vpop.f32.mrf.mxu0
        %v2736 = vadd.f32 %v2610, %v2735
        %v2737 = vpop.f32.mrf.mxu0
        %2738 = vmatprep.mubr.f32.mxu0 0.0
        %v2739 = vand.u32 %v2482, 4294901760
        %2740 = vmatmul.mubr.f32.gmra.mxu0 %v2739
        %v2741 = vpop.f32.mrf.mxu0
        %v2742 = vadd.f32 %v2620, %v2741
        %v2743 = vpop.f32.mrf.mxu0
        %2744 = vmatprep.mubr.f32.mxu0 0.0
        %v2745 = vand.u32 %v2485, 4294901760
        %2746 = vmatmul.mubr.f32.gmra.mxu0 %v2745
        %v2747 = vpop.f32.mrf.mxu0
        %v2748 = vadd.f32 %v2630, %v2747
        %v2749 = vpop.f32.mrf.mxu0
        %2750 = vdwg.mxu0
        %2751 = vmatprep.subr.mxu0 0.0
        %2752 = vmatpush1.msra.mxu0 0.0
        %2753 = vmatprep.subr.mxu0 0.0
        %2754 = vmatpush1.msra.mxu0 0.0
        %2755 = vmatprep.subr.mxu0 0.0
        %2756 = vmatpush1.msra.mxu0 0.0
        %2757 = vmatprep.subr.mxu0 0.0
        %2758 = vmatpush1.msra.mxu0 0.0
        %2759 = vmatprep.subr.mxu0 0.0
        %2760 = vmatpush1.msra.mxu0 0.0
        %2761 = vmatprep.subr.mxu0 0.0
        %2762 = vmatpush1.msra.mxu0 0.0
        %2763 = vmatprep.subr.mxu0 0.0
        %2764 = vmatpush1.msra.mxu0 0.0
        %2765 = vmatprep.subr.mxu0 0.0
        %2766 = vmatpush1.msra.mxu0 0.0
        %2767 = vmatprep.subr.mxu0 0.0
        %2768 = vmatpush1.msra.mxu0 0.0
        %2769 = vmatprep.subr.mxu0 0.0
        %2770 = vmatpush1.msra.mxu0 0.0
        %2771 = vmatprep.subr.mxu0 0.0
        %2772 = vmatpush1.msra.mxu0 0.0
        %2773 = vmatprep.subr.mxu0 0.0
        %2774 = vmatpush1.msra.mxu0 0.0
        %2775 = vmatprep.subr.mxu0 0.0
        %2776 = vmatpush1.msra.mxu0 0.0
        %2777 = vmatprep.subr.mxu0 0.0
        %2778 = vmatpush1.msra.mxu0 0.0
        %2779 = vmatprep.subr.mxu0 0.0
        %2780 = vmatpush1.msra.mxu0 0.0
        %2781 = vmatprep.subr.mxu0 0.0
        %v2782 = vand.u32 %v2460, 4294901760
        %v2783 = vsub.f32 %v2460, %v2782
        %2784 = vmatpush1.msra.mxu0 %v2783
        %2785 = vmatprep.subr.mxu0 0.0
        %2786 = vmatpush2.msra.mxu0 0.0
        %2787 = vmatprep.subr.mxu0 0.0
        %2788 = vmatpush2.msra.mxu0 0.0
        %2789 = vmatprep.subr.mxu0 0.0
        %2790 = vmatpush2.msra.mxu0 0.0
        %2791 = vmatprep.subr.mxu0 0.0
        %2792 = vmatpush2.msra.mxu0 0.0
        %2793 = vmatprep.subr.mxu0 0.0
        %2794 = vmatpush2.msra.mxu0 0.0
        %2795 = vmatprep.subr.mxu0 0.0
        %2796 = vmatpush2.msra.mxu0 0.0
        %2797 = vmatprep.subr.mxu0 0.0
        %2798 = vmatpush2.msra.mxu0 0.0
        %2799 = vmatprep.subr.mxu0 0.0
        %2800 = vmatpush2.msra.mxu0 0.0
        %2801 = vmatprep.subr.mxu0 0.0
        %2802 = vmatpush2.msra.mxu0 0.0
        %2803 = vmatprep.subr.mxu0 0.0
        %2804 = vmatpush2.msra.mxu0 0.0
        %2805 = vmatprep.subr.mxu0 0.0
        %2806 = vmatpush2.msra.mxu0 0.0
        %2807 = vmatprep.subr.mxu0 0.0
        %2808 = vmatpush2.msra.mxu0 0.0
        %2809 = vmatprep.subr.mxu0 0.0
        %2810 = vmatpush2.msra.mxu0 0.0
        %2811 = vmatprep.subr.mxu0 0.0
        %2812 = vmatpush2.msra.mxu0 0.0
        %2813 = vmatprep.subr.mxu0 0.0
        %2814 = vmatpush2.msra.mxu0 0.0
        %2815 = vmatprep.subr.mxu0 0.0
        %2816 = vmatpush2.msra.mxu0 0.0
        %2817 = vmatprep.mubr.f32.mxu0 0.0
        %v2818 = vand.u32 %v2464, 4294901760
        %v2819 = vsub.f32 %v2464, %v2818
        %2820 = vmatmul.mubr.f32.gmra.mxu0 %v2819
        %v2821 = vpop.f32.mrf.mxu0
        %v2822 = vadd.f32 %v2706, %v2821
        %v2823 = vpop.f32.mrf.mxu0
        %2824 = vmatprep.mubr.f32.mxu0 0.0
        %v2825 = vand.u32 %v2467, 4294901760
        %v2826 = vsub.f32 %v2467, %v2825
        %2827 = vmatmul.mubr.f32.gmra.mxu0 %v2826
        %v2828 = vpop.f32.mrf.mxu0
        %v2829 = vadd.f32 %v2712, %v2828
        %v2830 = vpop.f32.mrf.mxu0
        %2831 = vmatprep.mubr.f32.mxu0 0.0
        %v2832 = vand.u32 %v2470, 4294901760
        %v2833 = vsub.f32 %v2470, %v2832
        %2834 = vmatmul.mubr.f32.gmra.mxu0 %v2833
        %v2835 = vpop.f32.mrf.mxu0
        %v2836 = vadd.f32 %v2718, %v2835
        %v2837 = vpop.f32.mrf.mxu0
        %2838 = vmatprep.mubr.f32.mxu0 0.0
        %v2839 = vand.u32 %v2473, 4294901760
        %v2840 = vsub.f32 %v2473, %v2839
        %2841 = vmatmul.mubr.f32.gmra.mxu0 %v2840
        %v2842 = vpop.f32.mrf.mxu0
        %v2843 = vadd.f32 %v2724, %v2842
        %v2844 = vpop.f32.mrf.mxu0
        %2845 = vmatprep.mubr.f32.mxu0 0.0
        %v2846 = vand.u32 %v2476, 4294901760
        %v2847 = vsub.f32 %v2476, %v2846
        %2848 = vmatmul.mubr.f32.gmra.mxu0 %v2847
        %v2849 = vpop.f32.mrf.mxu0
        %v2850 = vadd.f32 %v2730, %v2849
        %v2851 = vpop.f32.mrf.mxu0
        %2852 = vmatprep.mubr.f32.mxu0 0.0
        %v2853 = vand.u32 %v2479, 4294901760
        %v2854 = vsub.f32 %v2479, %v2853
        %2855 = vmatmul.mubr.f32.gmra.mxu0 %v2854
        %v2856 = vpop.f32.mrf.mxu0
        %v2857 = vadd.f32 %v2736, %v2856
        %v2858 = vpop.f32.mrf.mxu0
        %2859 = vmatprep.mubr.f32.mxu0 0.0
        %v2860 = vand.u32 %v2482, 4294901760
        %v2861 = vsub.f32 %v2482, %v2860
        %2862 = vmatmul.mubr.f32.gmra.mxu0 %v2861
        %v2863 = vpop.f32.mrf.mxu0
        %v2864 = vadd.f32 %v2742, %v2863
        %v2865 = vpop.f32.mrf.mxu0
        %2866 = vmatprep.mubr.f32.mxu0 0.0
        %v2867 = vand.u32 %v2485, 4294901760
        %v2868 = vsub.f32 %v2485, %v2867
        %2869 = vmatmul.mubr.f32.gmra.mxu0 %v2868
        %v2870 = vpop.f32.mrf.mxu0
        %v2871 = vadd.f32 %v2748, %v2870
        %v2872 = vpop.f32.mrf.mxu0
        %2873 = vdwg.mxu0
        %2874 = vmatprep.subr.mxu0 0.0
        %2875 = vmatpush1.msra.mxu0 0.0
        %2876 = vmatprep.subr.mxu0 0.0
        %2877 = vmatpush1.msra.mxu0 0.0
        %2878 = vmatprep.subr.mxu0 0.0
        %2879 = vmatpush1.msra.mxu0 0.0
        %2880 = vmatprep.subr.mxu0 0.0
        %2881 = vmatpush1.msra.mxu0 0.0
        %2882 = vmatprep.subr.mxu0 0.0
        %2883 = vmatpush1.msra.mxu0 0.0
        %2884 = vmatprep.subr.mxu0 0.0
        %2885 = vmatpush1.msra.mxu0 0.0
        %2886 = vmatprep.subr.mxu0 0.0
        %2887 = vmatpush1.msra.mxu0 0.0
        %2888 = vmatprep.subr.mxu0 0.0
        %2889 = vmatpush1.msra.mxu0 0.0
        %2890 = vmatprep.subr.mxu0 0.0
        %2891 = vmatpush1.msra.mxu0 0.0
        %2892 = vmatprep.subr.mxu0 0.0
        %2893 = vmatpush1.msra.mxu0 0.0
        %2894 = vmatprep.subr.mxu0 0.0
        %2895 = vmatpush1.msra.mxu0 0.0
        %2896 = vmatprep.subr.mxu0 0.0
        %2897 = vmatpush1.msra.mxu0 0.0
        %2898 = vmatprep.subr.mxu0 0.0
        %2899 = vmatpush1.msra.mxu0 0.0
        %2900 = vmatprep.subr.mxu0 0.0
        %2901 = vmatpush1.msra.mxu0 0.0
        %2902 = vmatprep.subr.mxu0 0.0
        %2903 = vmatpush1.msra.mxu0 0.0
        %2904 = vmatprep.subr.mxu0 0.0
        %v2905 = vand.u32 %v2460, 4294901760
        %2906 = vmatpush1.msra.mxu0 %v2905
        %2907 = vmatprep.subr.mxu0 0.0
        %2908 = vmatpush2.msra.mxu0 0.0
        %2909 = vmatprep.subr.mxu0 0.0
        %2910 = vmatpush2.msra.mxu0 0.0
        %2911 = vmatprep.subr.mxu0 0.0
        %2912 = vmatpush2.msra.mxu0 0.0
        %2913 = vmatprep.subr.mxu0 0.0
        %2914 = vmatpush2.msra.mxu0 0.0
        %2915 = vmatprep.subr.mxu0 0.0
        %2916 = vmatpush2.msra.mxu0 0.0
        %2917 = vmatprep.subr.mxu0 0.0
        %2918 = vmatpush2.msra.mxu0 0.0
        %2919 = vmatprep.subr.mxu0 0.0
        %2920 = vmatpush2.msra.mxu0 0.0
        %2921 = vmatprep.subr.mxu0 0.0
        %2922 = vmatpush2.msra.mxu0 0.0
        %2923 = vmatprep.subr.mxu0 0.0
        %2924 = vmatpush2.msra.mxu0 0.0
        %2925 = vmatprep.subr.mxu0 0.0
        %2926 = vmatpush2.msra.mxu0 0.0
        %2927 = vmatprep.subr.mxu0 0.0
        %2928 = vmatpush2.msra.mxu0 0.0
        %2929 = vmatprep.subr.mxu0 0.0
        %2930 = vmatpush2.msra.mxu0 0.0
        %2931 = vmatprep.subr.mxu0 0.0
        %2932 = vmatpush2.msra.mxu0 0.0
        %2933 = vmatprep.subr.mxu0 0.0
        %2934 = vmatpush2.msra.mxu0 0.0
        %2935 = vmatprep.subr.mxu0 0.0
        %2936 = vmatpush2.msra.mxu0 0.0
        %2937 = vmatprep.subr.mxu0 0.0
        %2938 = vmatpush2.msra.mxu0 0.0
        %2939 = vmatprep.mubr.f32.mxu0 0.0
        %v2940 = vand.u32 %v2464, 4294901760
        %v2941 = vsub.f32 %v2464, %v2940
        %v2942 = vand.u32 %v2941, 4294901760
        %2943 = vmatmul.mubr.f32.gmra.mxu0 %v2942
        %v2944 = vpop.f32.mrf.mxu0
        %v2945 = vadd.f32 %v2822, %v2944
        %v2946 = vpop.f32.mrf.mxu0
        %2947 = vmatprep.mubr.f32.mxu0 0.0
        %v2948 = vand.u32 %v2467, 4294901760
        %v2949 = vsub.f32 %v2467, %v2948
        %v2950 = vand.u32 %v2949, 4294901760
        %2951 = vmatmul.mubr.f32.gmra.mxu0 %v2950
        %v2952 = vpop.f32.mrf.mxu0
        %v2953 = vadd.f32 %v2829, %v2952
        %v2954 = vpop.f32.mrf.mxu0
        %2955 = vmatprep.mubr.f32.mxu0 0.0
        %v2956 = vand.u32 %v2470, 4294901760
        %v2957 = vsub.f32 %v2470, %v2956
        %v2958 = vand.u32 %v2957, 4294901760
        %2959 = vmatmul.mubr.f32.gmra.mxu0 %v2958
        %v2960 = vpop.f32.mrf.mxu0
        %v2961 = vadd.f32 %v2836, %v2960
        %v2962 = vpop.f32.mrf.mxu0
        %2963 = vmatprep.mubr.f32.mxu0 0.0
        %v2964 = vand.u32 %v2473, 4294901760
        %v2965 = vsub.f32 %v2473, %v2964
        %v2966 = vand.u32 %v2965, 4294901760
        %2967 = vmatmul.mubr.f32.gmra.mxu0 %v2966
        %v2968 = vpop.f32.mrf.mxu0
        %v2969 = vadd.f32 %v2843, %v2968
        %v2970 = vpop.f32.mrf.mxu0
        %2971 = vmatprep.mubr.f32.mxu0 0.0
        %v2972 = vand.u32 %v2476, 4294901760
        %v2973 = vsub.f32 %v2476, %v2972
        %v2974 = vand.u32 %v2973, 4294901760
        %2975 = vmatmul.mubr.f32.gmra.mxu0 %v2974
        %v2976 = vpop.f32.mrf.mxu0
        %v2977 = vadd.f32 %v2850, %v2976
        %v2978 = vpop.f32.mrf.mxu0
        %2979 = vmatprep.mubr.f32.mxu0 0.0
        %v2980 = vand.u32 %v2479, 4294901760
        %v2981 = vsub.f32 %v2479, %v2980
        %v2982 = vand.u32 %v2981, 4294901760
        %2983 = vmatmul.mubr.f32.gmra.mxu0 %v2982
        %v2984 = vpop.f32.mrf.mxu0
        %v2985 = vadd.f32 %v2857, %v2984
        %v2986 = vpop.f32.mrf.mxu0
        %2987 = vmatprep.mubr.f32.mxu0 0.0
        %v2988 = vand.u32 %v2482, 4294901760
        %v2989 = vsub.f32 %v2482, %v2988
        %v2990 = vand.u32 %v2989, 4294901760
        %2991 = vmatmul.mubr.f32.gmra.mxu0 %v2990
        %v2992 = vpop.f32.mrf.mxu0
        %v2993 = vadd.f32 %v2864, %v2992
        %v2994 = vpop.f32.mrf.mxu0
        %2995 = vmatprep.mubr.f32.mxu0 0.0
        %v2996 = vand.u32 %v2485, 4294901760
        %v2997 = vsub.f32 %v2485, %v2996
        %v2998 = vand.u32 %v2997, 4294901760
        %2999 = vmatmul.mubr.f32.gmra.mxu0 %v2998
        %v3000 = vpop.f32.mrf.mxu0
        %v3001 = vadd.f32 %v2871, %v3000
        %v3002 = vpop.f32.mrf.mxu0
        %3003 = vdwg.mxu0
        %3004 = vmatprep.subr.mxu0 0.0
        %3005 = vmatpush1.msra.mxu0 0.0
        %3006 = vmatprep.subr.mxu0 0.0
        %3007 = vmatpush1.msra.mxu0 0.0
        %3008 = vmatprep.subr.mxu0 0.0
        %3009 = vmatpush1.msra.mxu0 0.0
        %3010 = vmatprep.subr.mxu0 0.0
        %3011 = vmatpush1.msra.mxu0 0.0
        %3012 = vmatprep.subr.mxu0 0.0
        %3013 = vmatpush1.msra.mxu0 0.0
        %3014 = vmatprep.subr.mxu0 0.0
        %3015 = vmatpush1.msra.mxu0 0.0
        %3016 = vmatprep.subr.mxu0 0.0
        %3017 = vmatpush1.msra.mxu0 0.0
        %3018 = vmatprep.subr.mxu0 0.0
        %3019 = vmatpush1.msra.mxu0 0.0
        %3020 = vmatprep.subr.mxu0 0.0
        %3021 = vmatpush1.msra.mxu0 0.0
        %3022 = vmatprep.subr.mxu0 0.0
        %3023 = vmatpush1.msra.mxu0 0.0
        %3024 = vmatprep.subr.mxu0 0.0
        %3025 = vmatpush1.msra.mxu0 0.0
        %3026 = vmatprep.subr.mxu0 0.0
        %3027 = vmatpush1.msra.mxu0 0.0
        %3028 = vmatprep.subr.mxu0 0.0
        %3029 = vmatpush1.msra.mxu0 0.0
        %3030 = vmatprep.subr.mxu0 0.0
        %3031 = vmatpush1.msra.mxu0 0.0
        %3032 = vmatprep.subr.mxu0 0.0
        %3033 = vmatpush1.msra.mxu0 0.0
        %3034 = vmatprep.subr.mxu0 0.0
        %v3035 = vand.u32 %v2460, 4294901760
        %v3036 = vsub.f32 %v2460, %v3035
        %v3037 = vand.u32 %v3036, 4294901760
        %3038 = vmatpush1.msra.mxu0 %v3037
        %3039 = vmatprep.subr.mxu0 0.0
        %3040 = vmatpush2.msra.mxu0 0.0
        %3041 = vmatprep.subr.mxu0 0.0
        %3042 = vmatpush2.msra.mxu0 0.0
        %3043 = vmatprep.subr.mxu0 0.0
        %3044 = vmatpush2.msra.mxu0 0.0
        %3045 = vmatprep.subr.mxu0 0.0
        %3046 = vmatpush2.msra.mxu0 0.0
        %3047 = vmatprep.subr.mxu0 0.0
        %3048 = vmatpush2.msra.mxu0 0.0
        %3049 = vmatprep.subr.mxu0 0.0
        %3050 = vmatpush2.msra.mxu0 0.0
        %3051 = vmatprep.subr.mxu0 0.0
        %3052 = vmatpush2.msra.mxu0 0.0
        %3053 = vmatprep.subr.mxu0 0.0
        %3054 = vmatpush2.msra.mxu0 0.0
        %3055 = vmatprep.subr.mxu0 0.0
        %3056 = vmatpush2.msra.mxu0 0.0
        %3057 = vmatprep.subr.mxu0 0.0
        %3058 = vmatpush2.msra.mxu0 0.0
        %3059 = vmatprep.subr.mxu0 0.0
        %3060 = vmatpush2.msra.mxu0 0.0
        %3061 = vmatprep.subr.mxu0 0.0
        %3062 = vmatpush2.msra.mxu0 0.0
        %3063 = vmatprep.subr.mxu0 0.0
        %3064 = vmatpush2.msra.mxu0 0.0
        %3065 = vmatprep.subr.mxu0 0.0
        %3066 = vmatpush2.msra.mxu0 0.0
        %3067 = vmatprep.subr.mxu0 0.0
        %3068 = vmatpush2.msra.mxu0 0.0
        %3069 = vmatprep.subr.mxu0 0.0
        %3070 = vmatpush2.msra.mxu0 0.0
        %3071 = vmatprep.mubr.f32.mxu0 0.0
        %v3072 = vand.u32 %v2464, 4294901760
        %3073 = vmatmul.mubr.f32.gmra.mxu0 %v3072
        %v3074 = vpop.f32.mrf.mxu0
        %v3075 = vadd.f32 %v2945, %v3074
        %v3076 = vpop.f32.mrf.mxu0
        %3077 = vmatprep.mubr.f32.mxu0 0.0
        %v3078 = vand.u32 %v2467, 4294901760
        %3079 = vmatmul.mubr.f32.gmra.mxu0 %v3078
        %v3080 = vpop.f32.mrf.mxu0
        %v3081 = vadd.f32 %v2953, %v3080
        %v3082 = vpop.f32.mrf.mxu0
        %3083 = vmatprep.mubr.f32.mxu0 0.0
        %v3084 = vand.u32 %v2470, 4294901760
        %3085 = vmatmul.mubr.f32.gmra.mxu0 %v3084
        %v3086 = vpop.f32.mrf.mxu0
        %v3087 = vadd.f32 %v2961, %v3086
        %v3088 = vpop.f32.mrf.mxu0
        %3089 = vmatprep.mubr.f32.mxu0 0.0
        %v3090 = vand.u32 %v2473, 4294901760
        %3091 = vmatmul.mubr.f32.gmra.mxu0 %v3090
        %v3092 = vpop.f32.mrf.mxu0
        %v3093 = vadd.f32 %v2969, %v3092
        %v3094 = vpop.f32.mrf.mxu0
        %3095 = vmatprep.mubr.f32.mxu0 0.0
        %v3096 = vand.u32 %v2476, 4294901760
        %3097 = vmatmul.mubr.f32.gmra.mxu0 %v3096
        %v3098 = vpop.f32.mrf.mxu0
        %v3099 = vadd.f32 %v2977, %v3098
        %v3100 = vpop.f32.mrf.mxu0
        %3101 = vmatprep.mubr.f32.mxu0 0.0
        %v3102 = vand.u32 %v2479, 4294901760
        %3103 = vmatmul.mubr.f32.gmra.mxu0 %v3102
        %v3104 = vpop.f32.mrf.mxu0
        %v3105 = vadd.f32 %v2985, %v3104
        %v3106 = vpop.f32.mrf.mxu0
        %3107 = vmatprep.mubr.f32.mxu0 0.0
        %v3108 = vand.u32 %v2482, 4294901760
        %3109 = vmatmul.mubr.f32.gmra.mxu0 %v3108
        %v3110 = vpop.f32.mrf.mxu0
        %v3111 = vadd.f32 %v2993, %v3110
        %v3112 = vpop.f32.mrf.mxu0
        %3113 = vmatprep.mubr.f32.mxu0 0.0
        %v3114 = vand.u32 %v2485, 4294901760
        %3115 = vmatmul.mubr.f32.gmra.mxu0 %v3114
        %v3116 = vpop.f32.mrf.mxu0
        %v3117 = vadd.f32 %v3001, %v3116
        %v3118 = vpop.f32.mrf.mxu0
        %3119 = vdwg.mxu0
        %3120 = vmatprep.subr.mxu0 0.0
        %3121 = vmatpush1.msra.mxu0 0.0
        %3122 = vmatprep.subr.mxu0 0.0
        %3123 = vmatpush1.msra.mxu0 0.0
        %3124 = vmatprep.subr.mxu0 0.0
        %3125 = vmatpush1.msra.mxu0 0.0
        %3126 = vmatprep.subr.mxu0 0.0
        %3127 = vmatpush1.msra.mxu0 0.0
        %3128 = vmatprep.subr.mxu0 0.0
        %3129 = vmatpush1.msra.mxu0 0.0
        %3130 = vmatprep.subr.mxu0 0.0
        %3131 = vmatpush1.msra.mxu0 0.0
        %3132 = vmatprep.subr.mxu0 0.0
        %3133 = vmatpush1.msra.mxu0 0.0
        %3134 = vmatprep.subr.mxu0 0.0
        %3135 = vmatpush1.msra.mxu0 0.0
        %3136 = vmatprep.subr.mxu0 0.0
        %3137 = vmatpush1.msra.mxu0 0.0
        %3138 = vmatprep.subr.mxu0 0.0
        %3139 = vmatpush1.msra.mxu0 0.0
        %3140 = vmatprep.subr.mxu0 0.0
        %3141 = vmatpush1.msra.mxu0 0.0
        %3142 = vmatprep.subr.mxu0 0.0
        %3143 = vmatpush1.msra.mxu0 0.0
        %3144 = vmatprep.subr.mxu0 0.0
        %3145 = vmatpush1.msra.mxu0 0.0
        %3146 = vmatprep.subr.mxu0 0.0
        %3147 = vmatpush1.msra.mxu0 0.0
        %3148 = vmatprep.subr.mxu0 0.0
        %3149 = vmatpush1.msra.mxu0 0.0
        %3150 = vmatprep.subr.mxu0 0.0
        %v3151 = vand.u32 %v2460, 4294901760
        %3152 = vmatpush1.msra.mxu0 %v3151
        %3153 = vmatprep.subr.mxu0 0.0
        %3154 = vmatpush2.msra.mxu0 0.0
        %3155 = vmatprep.subr.mxu0 0.0
        %3156 = vmatpush2.msra.mxu0 0.0
        %3157 = vmatprep.subr.mxu0 0.0
        %3158 = vmatpush2.msra.mxu0 0.0
        %3159 = vmatprep.subr.mxu0 0.0
        %3160 = vmatpush2.msra.mxu0 0.0
        %3161 = vmatprep.subr.mxu0 0.0
        %3162 = vmatpush2.msra.mxu0 0.0
        %3163 = vmatprep.subr.mxu0 0.0
        %3164 = vmatpush2.msra.mxu0 0.0
        %3165 = vmatprep.subr.mxu0 0.0
        %3166 = vmatpush2.msra.mxu0 0.0
        %3167 = vmatprep.subr.mxu0 0.0
        %3168 = vmatpush2.msra.mxu0 0.0
        %3169 = vmatprep.subr.mxu0 0.0
        %3170 = vmatpush2.msra.mxu0 0.0
        %3171 = vmatprep.subr.mxu0 0.0
        %3172 = vmatpush2.msra.mxu0 0.0
        %3173 = vmatprep.subr.mxu0 0.0
        %3174 = vmatpush2.msra.mxu0 0.0
        %3175 = vmatprep.subr.mxu0 0.0
        %3176 = vmatpush2.msra.mxu0 0.0
        %3177 = vmatprep.subr.mxu0 0.0
        %3178 = vmatpush2.msra.mxu0 0.0
        %3179 = vmatprep.subr.mxu0 0.0
        %3180 = vmatpush2.msra.mxu0 0.0
        %3181 = vmatprep.subr.mxu0 0.0
        %3182 = vmatpush2.msra.mxu0 0.0
        %3183 = vmatprep.subr.mxu0 0.0
        %3184 = vmatpush2.msra.mxu0 0.0
        %3185 = vmatprep.mubr.f32.mxu0 0.0
        %v3186 = vand.u32 %v2464, 4294901760
        %3187 = vmatmul.mubr.f32.gmra.mxu0 %v3186
        %v3188 = vpop.f32.mrf.mxu0
        %v3189 = vadd.f32 %v3075, %v3188
        %v3190 = vpop.f32.mrf.mxu0
        %3191 = vmatprep.mubr.f32.mxu0 0.0
        %v3192 = vand.u32 %v2467, 4294901760
        %3193 = vmatmul.mubr.f32.gmra.mxu0 %v3192
        %v3194 = vpop.f32.mrf.mxu0
        %v3195 = vadd.f32 %v3081, %v3194
        %v3196 = vpop.f32.mrf.mxu0
        %3197 = vmatprep.mubr.f32.mxu0 0.0
        %v3198 = vand.u32 %v2470, 4294901760
        %3199 = vmatmul.mubr.f32.gmra.mxu0 %v3198
        %v3200 = vpop.f32.mrf.mxu0
        %v3201 = vadd.f32 %v3087, %v3200
        %v3202 = vpop.f32.mrf.mxu0
        %3203 = vmatprep.mubr.f32.mxu0 0.0
        %v3204 = vand.u32 %v2473, 4294901760
        %3205 = vmatmul.mubr.f32.gmra.mxu0 %v3204
        %v3206 = vpop.f32.mrf.mxu0
        %v3207 = vadd.f32 %v3093, %v3206
        %v3208 = vpop.f32.mrf.mxu0
        %3209 = vmatprep.mubr.f32.mxu0 0.0
        %v3210 = vand.u32 %v2476, 4294901760
        %3211 = vmatmul.mubr.f32.gmra.mxu0 %v3210
        %v3212 = vpop.f32.mrf.mxu0
        %v3213 = vadd.f32 %v3099, %v3212
        %v3214 = vpop.f32.mrf.mxu0
        %3215 = vmatprep.mubr.f32.mxu0 0.0
        %v3216 = vand.u32 %v2479, 4294901760
        %3217 = vmatmul.mubr.f32.gmra.mxu0 %v3216
        %v3218 = vpop.f32.mrf.mxu0
        %v3219 = vadd.f32 %v3105, %v3218
        %v3220 = vpop.f32.mrf.mxu0
        %3221 = vmatprep.mubr.f32.mxu0 0.0
        %v3222 = vand.u32 %v2482, 4294901760
        %3223 = vmatmul.mubr.f32.gmra.mxu0 %v3222
        %v3224 = vpop.f32.mrf.mxu0
        %v3225 = vadd.f32 %v3111, %v3224
        %v3226 = vpop.f32.mrf.mxu0
        %3227 = vmatprep.mubr.f32.mxu0 0.0
        %v3228 = vand.u32 %v2485, 4294901760
        %3229 = vmatmul.mubr.f32.gmra.mxu0 %v3228
        %v3230 = vpop.f32.mrf.mxu0
        %v3231 = vadd.f32 %v3117, %v3230
        %v3232 = vpop.f32.mrf.mxu0
        %3233 = vdwg.mxu0
        %v3234 = vadd.f32 %v366, %v3189
        %v3235 = vadd.f32 %v367, %v3195
        %v3236 = vadd.f32 %v368, %v3201
        %v3237 = vadd.f32 %v369, %v3207
        %v3238 = vadd.f32 %v370, %v3213
        %v3239 = vadd.f32 %v371, %v3219
        %v3240 = vadd.f32 %v372, %v3225
        %v3241 = vadd.f32 %v373, %v3231
        %3243 = vset.pattern.permute.xlu0 0
        %3244 = vperm.xlu0 %3243, %v358
        %v3245 = vpop.permute.xlu0 %3244
        %3248 = vset.pattern.permute.xlu0 0
        %3249 = vperm.xlu0 %3248, %v359
        %v3250 = vpop.permute.xlu0 %3249
        %3253 = vset.pattern.permute.xlu0 0
        %3254 = vperm.xlu0 %3253, %v360
        %v3255 = vpop.permute.xlu0 %3254
        %3258 = vset.pattern.permute.xlu0 0
        %3259 = vperm.xlu0 %3258, %v361
        %v3260 = vpop.permute.xlu0 %3259
        %3263 = vset.pattern.permute.xlu0 0
        %3264 = vperm.xlu0 %3263, %v362
        %v3265 = vpop.permute.xlu0 %3264
        %3268 = vset.pattern.permute.xlu0 0
        %3269 = vperm.xlu0 %3268, %v363
        %v3270 = vpop.permute.xlu0 %3269
        %3273 = vset.pattern.permute.xlu0 0
        %3274 = vperm.xlu0 %3273, %v364
        %v3275 = vpop.permute.xlu0 %3274
        %3278 = vset.pattern.permute.xlu0 0
        %3279 = vperm.xlu0 %3278, %v365
        %v3280 = vpop.permute.xlu0 %3279
        %v3282 = vadd.f32 %v3234, %v3245
        %v3283 = vadd.f32 %v3235, %v3250
        %v3284 = vadd.f32 %v3236, %v3255
        %v3285 = vadd.f32 %v3237, %v3260
        %v3286 = vadd.f32 %v3238, %v3265
        %v3287 = vadd.f32 %v3239, %v3270
        %v3288 = vadd.f32 %v3240, %v3275
        %v3289 = vadd.f32 %v3241, %v3280
        %3290 = vst [vmem:[%s338] sm:$0xff] %v3282
        %3291 = vst [vmem:[%s338 + $0x8] sm:$0xff] %v3283
        %3292 = vst [vmem:[%s338 + $0x10] sm:$0xff] %v3284
        %3293 = vst [vmem:[%s338 + $0x18] sm:$0xff] %v3285
        %3294 = vst [vmem:[%s338 + $0x20] sm:$0xff] %v3286
        %3295 = vst [vmem:[%s338 + $0x28] sm:$0xff] %v3287
        %3296 = vst [vmem:[%s338 + $0x30] sm:$0xff] %v3288
        %3297 = vst [vmem:[%s338 + $0x38] sm:$0xff] %v3289
        %s3298 = sand.u32 %s211, 1
        %s3299 = scalar_lea.sflag [#allocation4], %s3298
        %s3300 = sand.u32 %s211, 1
        %s3301 = smul.addr %s3300, 64
        %s3302 = scalar_lea.vmem [#allocation5], %s3301
        // Predicated region
        $region57: #{tpu_custom_call.1} parent=51 // pred_check
          %p3303 = pneg %p221
        $region58: #{tpu_custom_call.1} parent=51 // pred_check_branch
          %3305 = sbr.rel (%p3303) target = $region60
        $region59: #{tpu_custom_call.1} parent=51 // pred_region
          %s3307 = ssub.s32 1024, 1024
          %3308 = vsyncadd %s3299, %s3307
          %s3309 = smul.addr %s25, 8
          %s3310 = smul.addr %s3309, 128
          %s3311 = scalar_lea.hbm %s8, %s3310
          %s3312 = sshll.u32 %s3302, 4
          %s3313 = int_to_ptr.vmem [resolvable:$true] %s3312
          %3318 = dma.vmem_to_hbm [thread:$0]  %s3313, 1024, %s3311, %s3299, 128, 128, 8
        $region60: #{tpu_custom_call.1} parent=51 // pred_fallthru
          _
      $region52: #{tpu_custom_call.1} parent=5 // pred_fallthru
        _
      %p3319 = scmp.le.s32.totalorder 2, %s20
      // Predicated region
      $region61: #{tpu_custom_call.1} parent=5 // pred_check
        %p3320 = pneg %p3319
      $region62: #{tpu_custom_call.1} parent=5 // pred_check_branch
        %3322 = sbr.rel (%p3320) target = $region64
      $region63: #{tpu_custom_call.1} parent=5 // pred_region
        %s3323 = ssub.s32 %s20, 2
        // Predicated region
        $region65: #{tpu_custom_call.1} parent=63 // pred_check
          %p3324 = pneg %p227
        $region66: #{tpu_custom_call.1} parent=63 // pred_check_branch
          %3326 = sbr.rel (%p3324) target = $region68
        $region67: #{tpu_custom_call.1} parent=63 // pred_region
          %s3327 = sand.u32 %s212, 1
          %s3328 = scalar_lea.sflag [#allocation4], %s3327
          %s3329 = sand.u32 %s212, 1
          %s3330 = smul.addr %s3329, 64
          %s3331 = scalar_lea.vmem [#allocation5], %s3330
          %3332 = dma.done %s3328, 1024
        $region68: #{tpu_custom_call.1} parent=63 // pred_fallthru
          _
      $region64: #{tpu_custom_call.1} parent=5 // pred_fallthru
        _
    $region6: #{tpu_custom_call.1} parent=1 // loop_footer
      %s24 = sadd.s32 1, %s20
    $region7: #{tpu_custom_call.1} parent=1 // loop_footer_branch
      %19 = sbr.rel target = $region3
    $region8: #{tpu_custom_call.1} parent=1 // loop_exit
      _
    %3333 = vsyncpa [#allocation3], 1
    %s3334 = scalar_lea.sflag [#allocation3], 1
    %3335 = vsyncpa %s3334, 1
    %3336 = vsyncpa [#allocation4], 1
    %s3337 = scalar_lea.sflag [#allocation4], 1
    %3338 = vsyncpa %s3337, 1

</llo_original>
